<compile_context>
chip_gen: v7x
topology: tpu7x:2x2x1
jax: 0.10.0
libtpu: 0.0.40
codegen_flags: <defaults>
</compile_context>

<pallas_src>
import functools

import jax
import jax.numpy as jnp
from jax.experimental import pallas as pl
from jax.experimental.pallas import tpu as pltpu

# ---------------- small, Llama-shaped synthetic config ----------------
B = 2          # batch
S = 8          # sequence length
D = 128        # hidden size           (4096 in Llama-3-8B)
H = 4          # attention heads       (32)
KVH = 2        # key/value heads       (8)
HD = D // H    # head dim = 32         (128)
I = 256        # MLP intermediate      (14336)
VOCAB = 64     # vocab size            (128256)
NH = 8         # number of output heads (num_heads in SpeechUnitModel)
O = 64         # output_dim            (2048)
N_LAYERS = 3
EPS = 1e-5
THETA = 500000.0   # Llama-3 rope theta

N_REP = H // KVH             # query heads per KV head
QKV_N = (H + 2 * KVH) * HD   # fused q|k|v projection width = 256
K_OFF = H * HD
V_OFF = (H + KVH) * HD


# ============================ fused Pallas kernel ============================

def fused_forward_kernel(h_ref, mask_ref, cos2_ref, sin2_ref,
                         in_ln_ref, post_ln_ref, qkv_w_ref, o_w_ref,
                         gate_up_w_ref, down_w_ref,
                         final_ln_ref, head_w_ref, head_b_ref,
                         out_ref, attn_ref):
    """Whole forward for ONE sequence (grid program = one batch element).

    h:            (1, S, D)            f32   embedded tokens
    mask:         (1, 1, S)            f32   additive padding mask
    cos2/sin2:    (2S, HD)             f32   rotary tables tiled for the row-stacked q
    in_ln/post_ln:(N_LAYERS, 1, D)     f32
    qkv_w:        (N_LAYERS, D, QKV_N) bf16  (q | k | v on the lane axis)
    o_w:          (N_LAYERS, H*HD, D)  bf16
    gate_up_w:    (N_LAYERS, D, 2I)    bf16  (gate | up on the lane axis)
    down_w:       (N_LAYERS, I, D)     bf16
    final_ln:     (1, D)               f32
    head_w:       (D, NH*O)            bf16  (all 8 heads fused, lane-dense)
    head_b:       (1, NH*O)            f32
    out:          (1, S, NH*O)         f32
    attn_ref:     (S, H*HD)            f32   VMEM scratch (attention output slab)
    """
    half = HD // 2
    scale = HD ** -0.5

    h = h_ref[0]                       # (S, D) f32 residual stream
    mask_b = mask_ref[0]               # (1, S) f32, broadcasts over the key axis
    cos_q = cos2_ref[...]              # (2S, HD) — for the row-stacked q of a group
    sin_q = sin2_ref[...]
    cos_k = cos_q[:S]                  # (S, HD)  — same positions, single copy of rows
    sin_k = sin_q[:S]

    def rope(t, c, s_):
        # HF rotate_half on a head-dim-wide block (applied per KV group, not per head).
        rot = jnp.concatenate([-t[:, half:], t[:, :half]], axis=-1)
        return t * c + rot * s_

    def rms(x, w):
        var = jnp.mean(x * x, axis=-1, keepdims=True)
        return (x * jax.lax.rsqrt(var + EPS) * w).astype(jnp.bfloat16)

    # ---- 3 decoder layers, statically unrolled over the stacked weight axis ----
    for l in range(N_LAYERS):
        # attention block: RMSNorm -> fused QKV -> RoPE -> grouped SDPA -> o-proj
        x = rms(h, in_ln_ref[l])
        qkv = jnp.dot(x, qkv_w_ref[l],
                      preferred_element_type=jnp.float32)        # (S, QKV_N) f32

        for j in range(KVH):                 # static: one pass per KV group
            h0 = j * N_REP
            # row-stack the group's N_REP query heads -> one (2S, HD) LHS
            q_grp = jnp.concatenate(
                [qkv[:, h0 * HD:(h0 + 1) * HD],
                 qkv[:, (h0 + 1) * HD:(h0 + 2) * HD]], axis=0)    # (2S, HD)
            q_grp = rope(q_grp, cos_q, sin_q).astype(jnp.bfloat16)
            k_j = rope(qkv[:, K_OFF + j * HD: K_OFF + (j + 1) * HD],
                       cos_k, sin_k).astype(jnp.bfloat16)         # (S, HD)
            v_j = qkv[:, V_OFF + j * HD: V_OFF + (j + 1) * HD
                      ].astype(jnp.bfloat16)                      # (S, HD)

            # q @ k^T without materializing a transpose
            s = jax.lax.dot_general(
                q_grp, k_j, (((1,), (1,)), ((), ())),
                preferred_element_type=jnp.float32) * scale + mask_b   # (2S, S)
            m = jnp.max(s, axis=-1, keepdims=True)
            e = jnp.exp(s - m)
            p = e / jnp.sum(e, axis=-1, keepdims=True)            # exact (parity)
            o_grp = jnp.dot(p.astype(jnp.bfloat16), v_j,
                            preferred_element_type=jnp.float32)   # (2S, HD)

            # split the stacked rows back per head: direct lane-range scratch stores
            attn_ref[:, h0 * HD:(h0 + 1) * HD] = o_grp[:S]
            attn_ref[:, (h0 + 1) * HD:(h0 + 2) * HD] = o_grp[S:]

        attn = attn_ref[...].astype(jnp.bfloat16)                 # (S, H*HD)
        h = h + jnp.dot(attn, o_w_ref[l], preferred_element_type=jnp.float32)

        # MLP block: RMSNorm -> fused gate|up -> SiLU*up -> down + residual
        x2 = rms(h, post_ln_ref[l])
        gu = jnp.dot(x2, gate_up_w_ref[l],
                     preferred_element_type=jnp.float32)          # (S, 2I) f32
        g = gu[:, :I]
        u = gu[:, I:]
        # TODO(synk): on v6e/v7x this elementwise region could run in bf16; kept
        # f32 so the same code is correct/fast on v5e (no bf16 VALU/EUP there).
        act = (g * pl.reciprocal(1.0 + jnp.exp(-g), approx=True) * u
               ).astype(jnp.bfloat16)
        h = h + jnp.dot(act, down_w_ref[l], preferred_element_type=jnp.float32)

    # ---- epilogue: final RMSNorm + all NH heads as one lane-dense matmul ----
    xf = rms(h, final_ln_ref[...])
    out_ref[0] = (jnp.dot(xf, head_w_ref[...],
                          preferred_element_type=jnp.float32) + head_b_ref[...])


# ============================ wrapper ============================

def _full(shape):
    # whole-array block, identical for every grid step (fetched once)
    return pl.BlockSpec(shape, lambda b, _s=shape: (0,) * len(_s))


def speech_unit_forward(params, input_ids, attention_mask=None):
    # TODO(synk): embedding gather stays a plain-JAX jnp.take (data-dependent row
    # gather; not worth an in-kernel DMA gather at these sizes).
    h0 = jnp.take(params['embed'], input_ids, axis=0)             # (B, S, D) f32

    # rotary tables (default rope type, position_ids = arange(S)), batch-invariant.
    # cos2/sin2 are (2S, HD): rows [0:S] and [S:2S] are the same positions, matching
    # the row-stacked (two query heads) q block used inside the kernel.
    inv_freq = 1.0 / (THETA ** (jnp.arange(0, HD, 2, dtype=jnp.float32) / HD))
    pos = jnp.arange(S, dtype=jnp.float32)
    freqs = pos[:, None] * inv_freq[None, :]                      # (S, HD/2)
    emb = jnp.concatenate([freqs, freqs], axis=-1)                # (S, HD)
    cos1, sin1 = jnp.cos(emb), jnp.sin(emb)
    cos2 = jnp.concatenate([cos1, cos1], axis=0)                  # (2S, HD)
    sin2 = jnp.concatenate([sin1, sin1], axis=0)

    if attention_mask is None:
        mask_add = jnp.zeros((B, 1, S), jnp.float32)
    else:
        mask_add = ((1.0 - attention_mask.astype(jnp.float32)) * -10000.0)[:, None, :]

    out = pl.pallas_call(
        fused_forward_kernel,
        out_shape=jax.ShapeDtypeStruct((B, S, NH * O), jnp.float32),
        grid=(B,),
        in_specs=[
            pl.BlockSpec((1, S, D), lambda b: (b, 0, 0)),         # h (embedded)
            pl.BlockSpec((1, 1, S), lambda b: (b, 0, 0)),         # additive mask
            _full((2 * S, HD)), _full((2 * S, HD)),               # cos2, sin2
            _full((N_LAYERS, 1, D)), _full((N_LAYERS, 1, D)),     # in_ln, post_ln
            _full((N_LAYERS, D, QKV_N)),                          # qkv_w (stacked)
            _full((N_LAYERS, H * HD, D)),                         # o_w
            _full((N_LAYERS, D, 2 * I)),                          # gate_up_w
            _full((N_LAYERS, I, D)),                              # down_w
            _full((1, D)),                                        # final_ln
            _full((D, NH * O)),                                   # head_w (fused)
            _full((1, NH * O)),                                   # head_b
        ],
        out_specs=pl.BlockSpec((1, S, NH * O), lambda b: (b, 0, 0)),
        scratch_shapes=[pltpu.VMEM((S, H * HD), jnp.float32)],    # attn output slab
        compiler_params=pltpu.CompilerParams(
            dimension_semantics=("parallel",)),                   # 2 TCs on v7x
    )(h0, mask_add, cos2, sin2,
      params['in_ln'], params['post_ln'], params['qkv_w'], params['o_w'],
      params['gate_up_w'], params['down_w'],
      params['final_ln'], params['head_w'], params['head_b'])

    # (B, S, NH*O) -> (B, NH, S, O): output-side layout plumbing only
    logits = out.reshape(B, S, NH, O).transpose(0, 2, 1, 3)
    return logits


# ============================ params ============================

def make_params(key):
    keys = iter(jax.random.split(key, 16))

    def nrm(shape, dtype=jnp.float32, scale=0.02):
        w = scale * jax.random.normal(next(keys), shape, dtype=jnp.float32)
        return w.astype(dtype)

    return {
        'embed': nrm((VOCAB, D)),
        # per-layer weights stacked on a leading N_LAYERS axis (single fused call)
        'in_ln': jnp.ones((N_LAYERS, 1, D), jnp.float32),
        'post_ln': jnp.ones((N_LAYERS, 1, D), jnp.float32),
        'qkv_w': nrm((N_LAYERS, D, QKV_N), jnp.bfloat16),    # fused [q | k | v]
        'o_w': nrm((N_LAYERS, H * HD, D), jnp.bfloat16),
        'gate_up_w': nrm((N_LAYERS, D, 2 * I), jnp.bfloat16),  # fused [gate | up]
        'down_w': nrm((N_LAYERS, I, D), jnp.bfloat16),
        'final_ln': jnp.ones((1, D), jnp.float32),
        # NH x nn.Linear(D, O) fused into one lane-dense (D, NH*O) slab + (1, NH*O) bias
        'head_w': nrm((D, NH * O), jnp.bfloat16),
        'head_b': nrm((1, NH * O)),
    }


if __name__ == "__main__":
    key = jax.random.PRNGKey(0)
    pkey, ikey = jax.random.split(key)
    params = make_params(pkey)

    input_ids = jax.random.randint(ikey, (B, S), 0, VOCAB, dtype=jnp.int32)
    attention_mask = jnp.ones((B, S), dtype=jnp.float32)

    fwd = jax.jit(functools.partial(speech_unit_forward, params))
    logits = fwd(input_ids, attention_mask)
    jax.block_until_ready(logits)

    assert logits.shape == (B, NH, S, O), logits.shape
    assert bool(jnp.all(jnp.isfinite(logits)))
    print("KERNEL_OK")
</pallas_src>

<mosaic_0001>
module attributes {stable_mosaic.version = 11 : i64} {
  func.func @fused_forward_kernel(%arg0: i32, %arg1: memref<1x8x128xf32, #tpu.memory_space<vmem>>, %arg2: memref<1x1x8xf32, #tpu.memory_space<vmem>>, %arg3: memref<16x32xf32, #tpu.memory_space<vmem>>, %arg4: memref<16x32xf32, #tpu.memory_space<vmem>>, %arg5: memref<3x1x128xf32, #tpu.memory_space<vmem>>, %arg6: memref<3x1x128xf32, #tpu.memory_space<vmem>>, %arg7: memref<3x128x256xbf16, #tpu.memory_space<vmem>>, %arg8: memref<3x128x128xbf16, #tpu.memory_space<vmem>>, %arg9: memref<3x128x512xbf16, #tpu.memory_space<vmem>>, %arg10: memref<3x256x128xbf16, #tpu.memory_space<vmem>>, %arg11: memref<1x128xf32, #tpu.memory_space<vmem>>, %arg12: memref<128x512xbf16, #tpu.memory_space<vmem>>, %arg13: memref<1x512xf32, #tpu.memory_space<vmem>>, %arg14: memref<1x8x512xf32, #tpu.memory_space<vmem>>, %arg15: memref<8x128xf32, #tpu.memory_space<vmem>>) attributes {dimension_semantics = [#tpu.dimension_semantics<parallel>], iteration_bounds = array<i64: 2>, scalar_prefetch = 0 : i64, scratch_operands = 1 : i64, tpu.core_type = #tpu.core_type<tc>, window_params = [{transform_indices = @transform_0, window_bounds = array<i64: 1, 8, 128>}, {transform_indices = @transform_1, window_bounds = array<i64: 1, 1, 8>}, {pipeline_mode = #tpu.pipeline_mode<synchronous>, transform_indices = @transform_2, window_bounds = array<i64: 16, 32>}, {pipeline_mode = #tpu.pipeline_mode<synchronous>, transform_indices = @transform_3, window_bounds = array<i64: 16, 32>}, {pipeline_mode = #tpu.pipeline_mode<synchronous>, transform_indices = @transform_4, window_bounds = array<i64: 3, 1, 128>}, {pipeline_mode = #tpu.pipeline_mode<synchronous>, transform_indices = @transform_5, window_bounds = array<i64: 3, 1, 128>}, {pipeline_mode = #tpu.pipeline_mode<synchronous>, transform_indices = @transform_6, window_bounds = array<i64: 3, 128, 256>}, {pipeline_mode = #tpu.pipeline_mode<synchronous>, transform_indices = @transform_7, window_bounds = array<i64: 3, 128, 128>}, {pipeline_mode = #tpu.pipeline_mode<synchronous>, transform_indices = @transform_8, window_bounds = array<i64: 3, 128, 512>}, {pipeline_mode = #tpu.pipeline_mode<synchronous>, transform_indices = @transform_9, window_bounds = array<i64: 3, 256, 128>}, {pipeline_mode = #tpu.pipeline_mode<synchronous>, transform_indices = @transform_10, window_bounds = array<i64: 1, 128>}, {pipeline_mode = #tpu.pipeline_mode<synchronous>, transform_indices = @transform_11, window_bounds = array<i64: 128, 512>}, {pipeline_mode = #tpu.pipeline_mode<synchronous>, transform_indices = @transform_12, window_bounds = array<i64: 1, 512>}, {transform_indices = @transform_13, window_bounds = array<i64: 1, 8, 512>}]} {
    %c0 = arith.constant 0 : index
    %c0_0 = arith.constant 0 : index
    %c0_1 = arith.constant 0 : index
    %0 = vector.load %arg1[%c0, %c0_0, %c0_1] : memref<1x8x128xf32, #tpu.memory_space<vmem>>, vector<1x8x128xf32>
    %1 = vector.shape_cast %0 : vector<1x8x128xf32> to vector<8x128xf32>
    %c0_2 = arith.constant 0 : index
    %c0_3 = arith.constant 0 : index
    %c0_4 = arith.constant 0 : index
    %2 = vector.load %arg2[%c0_2, %c0_3, %c0_4] : memref<1x1x8xf32, #tpu.memory_space<vmem>>, vector<1x1x8xf32>
    %3 = vector.shape_cast %2 : vector<1x1x8xf32> to vector<1x8xf32>
    %c0_5 = arith.constant 0 : index
    %c0_6 = arith.constant 0 : index
    %4 = vector.load %arg3[%c0_5, %c0_6] : memref<16x32xf32, #tpu.memory_space<vmem>>, vector<16x32xf32>
    %c0_7 = arith.constant 0 : index
    %c0_8 = arith.constant 0 : index
    %5 = vector.load %arg4[%c0_7, %c0_8] : memref<16x32xf32, #tpu.memory_space<vmem>>, vector<16x32xf32>
    %6 = vector.extract_strided_slice %4 {offsets = [0, 0], sizes = [8, 32], strides = [1, 1]} : vector<16x32xf32> to vector<8x32xf32>
    %7 = vector.extract_strided_slice %5 {offsets = [0, 0], sizes = [8, 32], strides = [1, 1]} : vector<16x32xf32> to vector<8x32xf32>
    %c0_9 = arith.constant 0 : index
    %c0_10 = arith.constant 0 : index
    %c0_11 = arith.constant 0 : index
    %8 = vector.load %arg5[%c0_9, %c0_10, %c0_11] : memref<3x1x128xf32, #tpu.memory_space<vmem>>, vector<1x1x128xf32>
    %9 = vector.shape_cast %8 : vector<1x1x128xf32> to vector<1x128xf32>
    %10 = arith.mulf %1, %1 : vector<8x128xf32>
    %cst = arith.constant dense<0.000000e+00> : vector<8xf32>
    %11 = vector.multi_reduction <add>, %10, %cst [1] : vector<8x128xf32> to vector<8xf32>
    %12 = vector.shape_cast %11 : vector<8xf32> to vector<8x1xf32>
    %cst_12 = arith.constant 1.280000e+02 : f32
    %13 = vector.broadcast %cst_12 : f32 to vector<8x1xf32>
    %14 = arith.divf %12, %13 : vector<8x1xf32>
    %cst_13 = arith.constant 9.99999974E-6 : f32
    %15 = vector.broadcast %cst_13 : f32 to vector<8x1xf32>
    %16 = arith.addf %14, %15 : vector<8x1xf32>
    %17 = math.rsqrt %16 : vector<8x1xf32>
    %18 = vector.broadcast %17 : vector<8x1xf32> to vector<8x128xf32>
    %19 = arith.mulf %1, %18 : vector<8x128xf32>
    %20 = vector.broadcast %9 : vector<1x128xf32> to vector<8x128xf32>
    %21 = arith.mulf %19, %20 : vector<8x128xf32>
    %22 = arith.truncf %21 : vector<8x128xf32> to vector<8x128xbf16>
    %c0_14 = arith.constant 0 : index
    %c0_15 = arith.constant 0 : index
    %c0_16 = arith.constant 0 : index
    %23 = vector.load %arg7[%c0_14, %c0_15, %c0_16] : memref<3x128x256xbf16, #tpu.memory_space<vmem>>, vector<1x128x256xbf16>
    %24 = vector.shape_cast %23 : vector<1x128x256xbf16> to vector<128x256xbf16>
    %cst_17 = arith.constant dense<0.000000e+00> : vector<8x256xf32>
    %25 = tpu.matmul %22, %24, %cst_17 {dimension_numbers = #tpu.dot_dimension_numbers<[1], [0], [0], [1], [0, 0, 1, 1], [], []>} : vector<8x128xbf16>, vector<128x256xbf16>, vector<8x256xf32> -> vector<8x256xf32>
    %26 = vector.extract_strided_slice %25 {offsets = [0, 0], sizes = [8, 32], strides = [1, 1]} : vector<8x256xf32> to vector<8x32xf32>
    %27 = vector.extract_strided_slice %25 {offsets = [0, 32], sizes = [8, 32], strides = [1, 1]} : vector<8x256xf32> to vector<8x32xf32>
    %28 = tpu.concatenate %26, %27 in 0 : vector<8x32xf32>, vector<8x32xf32> -> vector<16x32xf32>
    %29 = vector.extract_strided_slice %28 {offsets = [0, 16], sizes = [16, 16], strides = [1, 1]} : vector<16x32xf32> to vector<16x16xf32>
    %cst_18 = arith.constant 0.000000e+00 : f32
    %30 = vector.broadcast %cst_18 : f32 to vector<16x16xf32>
    %31 = arith.subf %30, %29 : vector<16x16xf32>
    %32 = vector.extract_strided_slice %28 {offsets = [0, 0], sizes = [16, 16], strides = [1, 1]} : vector<16x32xf32> to vector<16x16xf32>
    %33 = tpu.concatenate %31, %32 in 1 : vector<16x16xf32>, vector<16x16xf32> -> vector<16x32xf32>
    %34 = arith.mulf %28, %4 : vector<16x32xf32>
    %35 = arith.mulf %33, %5 : vector<16x32xf32>
    %36 = arith.addf %34, %35 : vector<16x32xf32>
    %37 = arith.truncf %36 : vector<16x32xf32> to vector<16x32xbf16>
    %38 = vector.extract_strided_slice %25 {offsets = [0, 128], sizes = [8, 32], strides = [1, 1]} : vector<8x256xf32> to vector<8x32xf32>
    %39 = vector.extract_strided_slice %38 {offsets = [0, 16], sizes = [8, 16], strides = [1, 1]} : vector<8x32xf32> to vector<8x16xf32>
    %cst_19 = arith.constant 0.000000e+00 : f32
    %40 = vector.broadcast %cst_19 : f32 to vector<8x16xf32>
    %41 = arith.subf %40, %39 : vector<8x16xf32>
    %42 = vector.extract_strided_slice %38 {offsets = [0, 0], sizes = [8, 16], strides = [1, 1]} : vector<8x32xf32> to vector<8x16xf32>
    %43 = tpu.concatenate %41, %42 in 1 : vector<8x16xf32>, vector<8x16xf32> -> vector<8x32xf32>
    %44 = arith.mulf %38, %6 : vector<8x32xf32>
    %45 = arith.mulf %43, %7 : vector<8x32xf32>
    %46 = arith.addf %44, %45 : vector<8x32xf32>
    %47 = arith.truncf %46 : vector<8x32xf32> to vector<8x32xbf16>
    %48 = vector.extract_strided_slice %25 {offsets = [0, 192], sizes = [8, 32], strides = [1, 1]} : vector<8x256xf32> to vector<8x32xf32>
    %49 = arith.truncf %48 : vector<8x32xf32> to vector<8x32xbf16>
    %cst_20 = arith.constant dense<0.000000e+00> : vector<16x8xf32>
    %50 = tpu.matmul %37, %47, %cst_20 {dimension_numbers = #tpu.dot_dimension_numbers<[1], [1], [0], [0], [0, 0, 1, 0], [], []>} : vector<16x32xbf16>, vector<8x32xbf16>, vector<16x8xf32> -> vector<16x8xf32>
    %cst_21 = arith.constant 0.176776692 : f32
    %51 = vector.broadcast %cst_21 : f32 to vector<16x8xf32>
    %52 = arith.mulf %50, %51 : vector<16x8xf32>
    %53 = vector.broadcast %3 : vector<1x8xf32> to vector<16x8xf32>
    %54 = arith.addf %52, %53 : vector<16x8xf32>
    %cst_22 = arith.constant dense<0xFF800000> : vector<16xf32>
    %55 = vector.multi_reduction <maximumf>, %54, %cst_22 [1] : vector<16x8xf32> to vector<16xf32>
    %56 = vector.shape_cast %55 : vector<16xf32> to vector<16x1xf32>
    %57 = vector.broadcast %56 : vector<16x1xf32> to vector<16x8xf32>
    %58 = arith.subf %54, %57 : vector<16x8xf32>
    %59 = math.exp %58 : vector<16x8xf32>
    %cst_23 = arith.constant dense<0.000000e+00> : vector<16xf32>
    %60 = vector.multi_reduction <add>, %59, %cst_23 [1] : vector<16x8xf32> to vector<16xf32>
    %61 = vector.shape_cast %60 : vector<16xf32> to vector<16x1xf32>
    %62 = vector.broadcast %61 : vector<16x1xf32> to vector<16x8xf32>
    %63 = arith.divf %59, %62 : vector<16x8xf32>
    %64 = arith.truncf %63 : vector<16x8xf32> to vector<16x8xbf16>
    %cst_24 = arith.constant dense<0.000000e+00> : vector<16x32xf32>
    %65 = tpu.matmul %64, %49, %cst_24 {dimension_numbers = #tpu.dot_dimension_numbers<[1], [0], [0], [1], [0, 0, 1, 1], [], []>} : vector<16x8xbf16>, vector<8x32xbf16>, vector<16x32xf32> -> vector<16x32xf32>
    %66 = vector.extract_strided_slice %65 {offsets = [0, 0], sizes = [8, 32], strides = [1, 1]} : vector<16x32xf32> to vector<8x32xf32>
    %c0_25 = arith.constant 0 : index
    %c0_26 = arith.constant 0 : index
    %67 = vector.load %arg15[%c0_25, %c0_26] : memref<8x128xf32, #tpu.memory_space<vmem>>, vector<8x32xf32>
    tpu.vector_store %arg15[%c0_25, %c0_26], %66 {strides = array<i32>} : memref<8x128xf32, #tpu.memory_space<vmem>>, vector<8x32xf32>,
    %68 = vector.extract_strided_slice %65 {offsets = [8, 0], sizes = [8, 32], strides = [1, 1]} : vector<16x32xf32> to vector<8x32xf32>
    %c0_27 = arith.constant 0 : index
    %c32 = arith.constant 32 : index
    %69 = vector.load %arg15[%c0_27, %c32] : memref<8x128xf32, #tpu.memory_space<vmem>>, vector<8x32xf32>
    tpu.vector_store %arg15[%c0_27, %c32], %68 {strides = array<i32>} : memref<8x128xf32, #tpu.memory_space<vmem>>, vector<8x32xf32>,
    %70 = vector.extract_strided_slice %25 {offsets = [0, 64], sizes = [8, 32], strides = [1, 1]} : vector<8x256xf32> to vector<8x32xf32>
    %71 = vector.extract_strided_slice %25 {offsets = [0, 96], sizes = [8, 32], strides = [1, 1]} : vector<8x256xf32> to vector<8x32xf32>
    %72 = tpu.concatenate %70, %71 in 0 : vector<8x32xf32>, vector<8x32xf32> -> vector<16x32xf32>
    %73 = vector.extract_strided_slice %72 {offsets = [0, 16], sizes = [16, 16], strides = [1, 1]} : vector<16x32xf32> to vector<16x16xf32>
    %cst_28 = arith.constant 0.000000e+00 : f32
    %74 = vector.broadcast %cst_28 : f32 to vector<16x16xf32>
    %75 = arith.subf %74, %73 : vector<16x16xf32>
    %76 = vector.extract_strided_slice %72 {offsets = [0, 0], sizes = [16, 16], strides = [1, 1]} : vector<16x32xf32> to vector<16x16xf32>
    %77 = tpu.concatenate %75, %76 in 1 : vector<16x16xf32>, vector<16x16xf32> -> vector<16x32xf32>
    %78 = arith.mulf %72, %4 : vector<16x32xf32>
    %79 = arith.mulf %77, %5 : vector<16x32xf32>
    %80 = arith.addf %78, %79 : vector<16x32xf32>
    %81 = arith.truncf %80 : vector<16x32xf32> to vector<16x32xbf16>
    %82 = vector.extract_strided_slice %25 {offsets = [0, 160], sizes = [8, 32], strides = [1, 1]} : vector<8x256xf32> to vector<8x32xf32>
    %83 = vector.extract_strided_slice %82 {offsets = [0, 16], sizes = [8, 16], strides = [1, 1]} : vector<8x32xf32> to vector<8x16xf32>
    %cst_29 = arith.constant 0.000000e+00 : f32
    %84 = vector.broadcast %cst_29 : f32 to vector<8x16xf32>
    %85 = arith.subf %84, %83 : vector<8x16xf32>
    %86 = vector.extract_strided_slice %82 {offsets = [0, 0], sizes = [8, 16], strides = [1, 1]} : vector<8x32xf32> to vector<8x16xf32>
    %87 = tpu.concatenate %85, %86 in 1 : vector<8x16xf32>, vector<8x16xf32> -> vector<8x32xf32>
    %88 = arith.mulf %82, %6 : vector<8x32xf32>
    %89 = arith.mulf %87, %7 : vector<8x32xf32>
    %90 = arith.addf %88, %89 : vector<8x32xf32>
    %91 = arith.truncf %90 : vector<8x32xf32> to vector<8x32xbf16>
    %92 = vector.extract_strided_slice %25 {offsets = [0, 224], sizes = [8, 32], strides = [1, 1]} : vector<8x256xf32> to vector<8x32xf32>
    %93 = arith.truncf %92 : vector<8x32xf32> to vector<8x32xbf16>
    %cst_30 = arith.constant dense<0.000000e+00> : vector<16x8xf32>
    %94 = tpu.matmul %81, %91, %cst_30 {dimension_numbers = #tpu.dot_dimension_numbers<[1], [1], [0], [0], [0, 0, 1, 0], [], []>} : vector<16x32xbf16>, vector<8x32xbf16>, vector<16x8xf32> -> vector<16x8xf32>
    %cst_31 = arith.constant 0.176776692 : f32
    %95 = vector.broadcast %cst_31 : f32 to vector<16x8xf32>
    %96 = arith.mulf %94, %95 : vector<16x8xf32>
    %97 = vector.broadcast %3 : vector<1x8xf32> to vector<16x8xf32>
    %98 = arith.addf %96, %97 : vector<16x8xf32>
    %cst_32 = arith.constant dense<0xFF800000> : vector<16xf32>
    %99 = vector.multi_reduction <maximumf>, %98, %cst_32 [1] : vector<16x8xf32> to vector<16xf32>
    %100 = vector.shape_cast %99 : vector<16xf32> to vector<16x1xf32>
    %101 = vector.broadcast %100 : vector<16x1xf32> to vector<16x8xf32>
    %102 = arith.subf %98, %101 : vector<16x8xf32>
    %103 = math.exp %102 : vector<16x8xf32>
    %cst_33 = arith.constant dense<0.000000e+00> : vector<16xf32>
    %104 = vector.multi_reduction <add>, %103, %cst_33 [1] : vector<16x8xf32> to vector<16xf32>
    %105 = vector.shape_cast %104 : vector<16xf32> to vector<16x1xf32>
    %106 = vector.broadcast %105 : vector<16x1xf32> to vector<16x8xf32>
    %107 = arith.divf %103, %106 : vector<16x8xf32>
    %108 = arith.truncf %107 : vector<16x8xf32> to vector<16x8xbf16>
    %cst_34 = arith.constant dense<0.000000e+00> : vector<16x32xf32>
    %109 = tpu.matmul %108, %93, %cst_34 {dimension_numbers = #tpu.dot_dimension_numbers<[1], [0], [0], [1], [0, 0, 1, 1], [], []>} : vector<16x8xbf16>, vector<8x32xbf16>, vector<16x32xf32> -> vector<16x32xf32>
    %110 = vector.extract_strided_slice %109 {offsets = [0, 0], sizes = [8, 32], strides = [1, 1]} : vector<16x32xf32> to vector<8x32xf32>
    %c0_35 = arith.constant 0 : index
    %c64 = arith.constant 64 : index
    %111 = vector.load %arg15[%c0_35, %c64] : memref<8x128xf32, #tpu.memory_space<vmem>>, vector<8x32xf32>
    tpu.vector_store %arg15[%c0_35, %c64], %110 {strides = array<i32>} : memref<8x128xf32, #tpu.memory_space<vmem>>, vector<8x32xf32>,
    %112 = vector.extract_strided_slice %109 {offsets = [8, 0], sizes = [8, 32], strides = [1, 1]} : vector<16x32xf32> to vector<8x32xf32>
    %c0_36 = arith.constant 0 : index
    %c96 = arith.constant 96 : index
    %113 = vector.load %arg15[%c0_36, %c96] : memref<8x128xf32, #tpu.memory_space<vmem>>, vector<8x32xf32>
    tpu.vector_store %arg15[%c0_36, %c96], %112 {strides = array<i32>} : memref<8x128xf32, #tpu.memory_space<vmem>>, vector<8x32xf32>,
    %c0_37 = arith.constant 0 : index
    %c0_38 = arith.constant 0 : index
    %114 = vector.load %arg15[%c0_37, %c0_38] : memref<8x128xf32, #tpu.memory_space<vmem>>, vector<8x128xf32>
    %115 = arith.truncf %114 : vector<8x128xf32> to vector<8x128xbf16>
    %c0_39 = arith.constant 0 : index
    %c0_40 = arith.constant 0 : index
    %c0_41 = arith.constant 0 : index
    %116 = vector.load %arg8[%c0_39, %c0_40, %c0_41] : memref<3x128x128xbf16, #tpu.memory_space<vmem>>, vector<1x128x128xbf16>
    %117 = vector.shape_cast %116 : vector<1x128x128xbf16> to vector<128x128xbf16>
    %cst_42 = arith.constant dense<0.000000e+00> : vector<8x128xf32>
    %118 = tpu.matmul %115, %117, %cst_42 {dimension_numbers = #tpu.dot_dimension_numbers<[1], [0], [0], [1], [0, 0, 1, 1], [], []>} : vector<8x128xbf16>, vector<128x128xbf16>, vector<8x128xf32> -> vector<8x128xf32>
    %119 = arith.addf %1, %118 : vector<8x128xf32>
    %c0_43 = arith.constant 0 : index
    %c0_44 = arith.constant 0 : index
    %c0_45 = arith.constant 0 : index
    %120 = vector.load %arg6[%c0_43, %c0_44, %c0_45] : memref<3x1x128xf32, #tpu.memory_space<vmem>>, vector<1x1x128xf32>
    %121 = vector.shape_cast %120 : vector<1x1x128xf32> to vector<1x128xf32>
    %122 = arith.mulf %119, %119 : vector<8x128xf32>
    %cst_46 = arith.constant dense<0.000000e+00> : vector<8xf32>
    %123 = vector.multi_reduction <add>, %122, %cst_46 [1] : vector<8x128xf32> to vector<8xf32>
    %124 = vector.shape_cast %123 : vector<8xf32> to vector<8x1xf32>
    %cst_47 = arith.constant 1.280000e+02 : f32
    %125 = vector.broadcast %cst_47 : f32 to vector<8x1xf32>
    %126 = arith.divf %124, %125 : vector<8x1xf32>
    %cst_48 = arith.constant 9.99999974E-6 : f32
    %127 = vector.broadcast %cst_48 : f32 to vector<8x1xf32>
    %128 = arith.addf %126, %127 : vector<8x1xf32>
    %129 = math.rsqrt %128 : vector<8x1xf32>
    %130 = vector.broadcast %129 : vector<8x1xf32> to vector<8x128xf32>
    %131 = arith.mulf %119, %130 : vector<8x128xf32>
    %132 = vector.broadcast %121 : vector<1x128xf32> to vector<8x128xf32>
    %133 = arith.mulf %131, %132 : vector<8x128xf32>
    %134 = arith.truncf %133 : vector<8x128xf32> to vector<8x128xbf16>
    %c0_49 = arith.constant 0 : index
    %c0_50 = arith.constant 0 : index
    %c0_51 = arith.constant 0 : index
    %135 = vector.load %arg9[%c0_49, %c0_50, %c0_51] : memref<3x128x512xbf16, #tpu.memory_space<vmem>>, vector<1x128x512xbf16>
    %136 = vector.shape_cast %135 : vector<1x128x512xbf16> to vector<128x512xbf16>
    %cst_52 = arith.constant dense<0.000000e+00> : vector<8x512xf32>
    %137 = tpu.matmul %134, %136, %cst_52 {dimension_numbers = #tpu.dot_dimension_numbers<[1], [0], [0], [1], [0, 0, 1, 1], [], []>} : vector<8x128xbf16>, vector<128x512xbf16>, vector<8x512xf32> -> vector<8x512xf32>
    %138 = vector.extract_strided_slice %137 {offsets = [0, 0], sizes = [8, 256], strides = [1, 1]} : vector<8x512xf32> to vector<8x256xf32>
    %139 = vector.extract_strided_slice %137 {offsets = [0, 256], sizes = [8, 256], strides = [1, 1]} : vector<8x512xf32> to vector<8x256xf32>
    %cst_53 = arith.constant 0.000000e+00 : f32
    %140 = vector.broadcast %cst_53 : f32 to vector<8x256xf32>
    %141 = arith.subf %140, %138 : vector<8x256xf32>
    %142 = math.exp %141 : vector<8x256xf32>
    %cst_54 = arith.constant 1.000000e+00 : f32
    %143 = vector.broadcast %cst_54 : f32 to vector<8x256xf32>
    %144 = arith.addf %143, %142 : vector<8x256xf32>
    %145 = tpu.reciprocal %144 {approx = true} : vector<8x256xf32> -> vector<8x256xf32>
    %146 = arith.mulf %138, %145 : vector<8x256xf32>
    %147 = arith.mulf %146, %139 : vector<8x256xf32>
    %148 = arith.truncf %147 : vector<8x256xf32> to vector<8x256xbf16>
    %c0_55 = arith.constant 0 : index
    %c0_56 = arith.constant 0 : index
    %c0_57 = arith.constant 0 : index
    %149 = vector.load %arg10[%c0_55, %c0_56, %c0_57] : memref<3x256x128xbf16, #tpu.memory_space<vmem>>, vector<1x256x128xbf16>
    %150 = vector.shape_cast %149 : vector<1x256x128xbf16> to vector<256x128xbf16>
    %cst_58 = arith.constant dense<0.000000e+00> : vector<8x128xf32>
    %151 = tpu.matmul %148, %150, %cst_58 {dimension_numbers = #tpu.dot_dimension_numbers<[1], [0], [0], [1], [0, 0, 1, 1], [], []>} : vector<8x256xbf16>, vector<256x128xbf16>, vector<8x128xf32> -> vector<8x128xf32>
    %152 = arith.addf %119, %151 : vector<8x128xf32>
    %c1 = arith.constant 1 : index
    %c0_59 = arith.constant 0 : index
    %c0_60 = arith.constant 0 : index
    %153 = vector.load %arg5[%c1, %c0_59, %c0_60] : memref<3x1x128xf32, #tpu.memory_space<vmem>>, vector<1x1x128xf32>
    %154 = vector.shape_cast %153 : vector<1x1x128xf32> to vector<1x128xf32>
    %155 = arith.mulf %152, %152 : vector<8x128xf32>
    %cst_61 = arith.constant dense<0.000000e+00> : vector<8xf32>
    %156 = vector.multi_reduction <add>, %155, %cst_61 [1] : vector<8x128xf32> to vector<8xf32>
    %157 = vector.shape_cast %156 : vector<8xf32> to vector<8x1xf32>
    %cst_62 = arith.constant 1.280000e+02 : f32
    %158 = vector.broadcast %cst_62 : f32 to vector<8x1xf32>
    %159 = arith.divf %157, %158 : vector<8x1xf32>
    %cst_63 = arith.constant 9.99999974E-6 : f32
    %160 = vector.broadcast %cst_63 : f32 to vector<8x1xf32>
    %161 = arith.addf %159, %160 : vector<8x1xf32>
    %162 = math.rsqrt %161 : vector<8x1xf32>
    %163 = vector.broadcast %162 : vector<8x1xf32> to vector<8x128xf32>
    %164 = arith.mulf %152, %163 : vector<8x128xf32>
    %165 = vector.broadcast %154 : vector<1x128xf32> to vector<8x128xf32>
    %166 = arith.mulf %164, %165 : vector<8x128xf32>
    %167 = arith.truncf %166 : vector<8x128xf32> to vector<8x128xbf16>
    %c1_64 = arith.constant 1 : index
    %c0_65 = arith.constant 0 : index
    %c0_66 = arith.constant 0 : index
    %168 = vector.load %arg7[%c1_64, %c0_65, %c0_66] : memref<3x128x256xbf16, #tpu.memory_space<vmem>>, vector<1x128x256xbf16>
    %169 = vector.shape_cast %168 : vector<1x128x256xbf16> to vector<128x256xbf16>
    %cst_67 = arith.constant dense<0.000000e+00> : vector<8x256xf32>
    %170 = tpu.matmul %167, %169, %cst_67 {dimension_numbers = #tpu.dot_dimension_numbers<[1], [0], [0], [1], [0, 0, 1, 1], [], []>} : vector<8x128xbf16>, vector<128x256xbf16>, vector<8x256xf32> -> vector<8x256xf32>
    %171 = vector.extract_strided_slice %170 {offsets = [0, 0], sizes = [8, 32], strides = [1, 1]} : vector<8x256xf32> to vector<8x32xf32>
    %172 = vector.extract_strided_slice %170 {offsets = [0, 32], sizes = [8, 32], strides = [1, 1]} : vector<8x256xf32> to vector<8x32xf32>
    %173 = tpu.concatenate %171, %172 in 0 : vector<8x32xf32>, vector<8x32xf32> -> vector<16x32xf32>
    %174 = vector.extract_strided_slice %173 {offsets = [0, 16], sizes = [16, 16], strides = [1, 1]} : vector<16x32xf32> to vector<16x16xf32>
    %cst_68 = arith.constant 0.000000e+00 : f32
    %175 = vector.broadcast %cst_68 : f32 to vector<16x16xf32>
    %176 = arith.subf %175, %174 : vector<16x16xf32>
    %177 = vector.extract_strided_slice %173 {offsets = [0, 0], sizes = [16, 16], strides = [1, 1]} : vector<16x32xf32> to vector<16x16xf32>
    %178 = tpu.concatenate %176, %177 in 1 : vector<16x16xf32>, vector<16x16xf32> -> vector<16x32xf32>
    %179 = arith.mulf %173, %4 : vector<16x32xf32>
    %180 = arith.mulf %178, %5 : vector<16x32xf32>
    %181 = arith.addf %179, %180 : vector<16x32xf32>
    %182 = arith.truncf %181 : vector<16x32xf32> to vector<16x32xbf16>
    %183 = vector.extract_strided_slice %170 {offsets = [0, 128], sizes = [8, 32], strides = [1, 1]} : vector<8x256xf32> to vector<8x32xf32>
    %184 = vector.extract_strided_slice %183 {offsets = [0, 16], sizes = [8, 16], strides = [1, 1]} : vector<8x32xf32> to vector<8x16xf32>
    %cst_69 = arith.constant 0.000000e+00 : f32
    %185 = vector.broadcast %cst_69 : f32 to vector<8x16xf32>
    %186 = arith.subf %185, %184 : vector<8x16xf32>
    %187 = vector.extract_strided_slice %183 {offsets = [0, 0], sizes = [8, 16], strides = [1, 1]} : vector<8x32xf32> to vector<8x16xf32>
    %188 = tpu.concatenate %186, %187 in 1 : vector<8x16xf32>, vector<8x16xf32> -> vector<8x32xf32>
    %189 = arith.mulf %183, %6 : vector<8x32xf32>
    %190 = arith.mulf %188, %7 : vector<8x32xf32>
    %191 = arith.addf %189, %190 : vector<8x32xf32>
    %192 = arith.truncf %191 : vector<8x32xf32> to vector<8x32xbf16>
    %193 = vector.extract_strided_slice %170 {offsets = [0, 192], sizes = [8, 32], strides = [1, 1]} : vector<8x256xf32> to vector<8x32xf32>
    %194 = arith.truncf %193 : vector<8x32xf32> to vector<8x32xbf16>
    %cst_70 = arith.constant dense<0.000000e+00> : vector<16x8xf32>
    %195 = tpu.matmul %182, %192, %cst_70 {dimension_numbers = #tpu.dot_dimension_numbers<[1], [1], [0], [0], [0, 0, 1, 0], [], []>} : vector<16x32xbf16>, vector<8x32xbf16>, vector<16x8xf32> -> vector<16x8xf32>
    %cst_71 = arith.constant 0.176776692 : f32
    %196 = vector.broadcast %cst_71 : f32 to vector<16x8xf32>
    %197 = arith.mulf %195, %196 : vector<16x8xf32>
    %198 = vector.broadcast %3 : vector<1x8xf32> to vector<16x8xf32>
    %199 = arith.addf %197, %198 : vector<16x8xf32>
    %cst_72 = arith.constant dense<0xFF800000> : vector<16xf32>
    %200 = vector.multi_reduction <maximumf>, %199, %cst_72 [1] : vector<16x8xf32> to vector<16xf32>
    %201 = vector.shape_cast %200 : vector<16xf32> to vector<16x1xf32>
    %202 = vector.broadcast %201 : vector<16x1xf32> to vector<16x8xf32>
    %203 = arith.subf %199, %202 : vector<16x8xf32>
    %204 = math.exp %203 : vector<16x8xf32>
    %cst_73 = arith.constant dense<0.000000e+00> : vector<16xf32>
    %205 = vector.multi_reduction <add>, %204, %cst_73 [1] : vector<16x8xf32> to vector<16xf32>
    %206 = vector.shape_cast %205 : vector<16xf32> to vector<16x1xf32>
    %207 = vector.broadcast %206 : vector<16x1xf32> to vector<16x8xf32>
    %208 = arith.divf %204, %207 : vector<16x8xf32>
    %209 = arith.truncf %208 : vector<16x8xf32> to vector<16x8xbf16>
    %cst_74 = arith.constant dense<0.000000e+00> : vector<16x32xf32>
    %210 = tpu.matmul %209, %194, %cst_74 {dimension_numbers = #tpu.dot_dimension_numbers<[1], [0], [0], [1], [0, 0, 1, 1], [], []>} : vector<16x8xbf16>, vector<8x32xbf16>, vector<16x32xf32> -> vector<16x32xf32>
    %211 = vector.extract_strided_slice %210 {offsets = [0, 0], sizes = [8, 32], strides = [1, 1]} : vector<16x32xf32> to vector<8x32xf32>
    %c0_75 = arith.constant 0 : index
    %c0_76 = arith.constant 0 : index
    %212 = vector.load %arg15[%c0_75, %c0_76] : memref<8x128xf32, #tpu.memory_space<vmem>>, vector<8x32xf32>
    tpu.vector_store %arg15[%c0_75, %c0_76], %211 {strides = array<i32>} : memref<8x128xf32, #tpu.memory_space<vmem>>, vector<8x32xf32>,
    %213 = vector.extract_strided_slice %210 {offsets = [8, 0], sizes = [8, 32], strides = [1, 1]} : vector<16x32xf32> to vector<8x32xf32>
    %c0_77 = arith.constant 0 : index
    %c32_78 = arith.constant 32 : index
    %214 = vector.load %arg15[%c0_77, %c32_78] : memref<8x128xf32, #tpu.memory_space<vmem>>, vector<8x32xf32>
    tpu.vector_store %arg15[%c0_77, %c32_78], %213 {strides = array<i32>} : memref<8x128xf32, #tpu.memory_space<vmem>>, vector<8x32xf32>,
    %215 = vector.extract_strided_slice %170 {offsets = [0, 64], sizes = [8, 32], strides = [1, 1]} : vector<8x256xf32> to vector<8x32xf32>
    %216 = vector.extract_strided_slice %170 {offsets = [0, 96], sizes = [8, 32], strides = [1, 1]} : vector<8x256xf32> to vector<8x32xf32>
    %217 = tpu.concatenate %215, %216 in 0 : vector<8x32xf32>, vector<8x32xf32> -> vector<16x32xf32>
    %218 = vector.extract_strided_slice %217 {offsets = [0, 16], sizes = [16, 16], strides = [1, 1]} : vector<16x32xf32> to vector<16x16xf32>
    %cst_79 = arith.constant 0.000000e+00 : f32
    %219 = vector.broadcast %cst_79 : f32 to vector<16x16xf32>
    %220 = arith.subf %219, %218 : vector<16x16xf32>
    %221 = vector.extract_strided_slice %217 {offsets = [0, 0], sizes = [16, 16], strides = [1, 1]} : vector<16x32xf32> to vector<16x16xf32>
    %222 = tpu.concatenate %220, %221 in 1 : vector<16x16xf32>, vector<16x16xf32> -> vector<16x32xf32>
    %223 = arith.mulf %217, %4 : vector<16x32xf32>
    %224 = arith.mulf %222, %5 : vector<16x32xf32>
    %225 = arith.addf %223, %224 : vector<16x32xf32>
    %226 = arith.truncf %225 : vector<16x32xf32> to vector<16x32xbf16>
    %227 = vector.extract_strided_slice %170 {offsets = [0, 160], sizes = [8, 32], strides = [1, 1]} : vector<8x256xf32> to vector<8x32xf32>
    %228 = vector.extract_strided_slice %227 {offsets = [0, 16], sizes = [8, 16], strides = [1, 1]} : vector<8x32xf32> to vector<8x16xf32>
    %cst_80 = arith.constant 0.000000e+00 : f32
    %229 = vector.broadcast %cst_80 : f32 to vector<8x16xf32>
    %230 = arith.subf %229, %228 : vector<8x16xf32>
    %231 = vector.extract_strided_slice %227 {offsets = [0, 0], sizes = [8, 16], strides = [1, 1]} : vector<8x32xf32> to vector<8x16xf32>
    %232 = tpu.concatenate %230, %231 in 1 : vector<8x16xf32>, vector<8x16xf32> -> vector<8x32xf32>
    %233 = arith.mulf %227, %6 : vector<8x32xf32>
    %234 = arith.mulf %232, %7 : vector<8x32xf32>
    %235 = arith.addf %233, %234 : vector<8x32xf32>
    %236 = arith.truncf %235 : vector<8x32xf32> to vector<8x32xbf16>
    %237 = vector.extract_strided_slice %170 {offsets = [0, 224], sizes = [8, 32], strides = [1, 1]} : vector<8x256xf32> to vector<8x32xf32>
    %238 = arith.truncf %237 : vector<8x32xf32> to vector<8x32xbf16>
    %cst_81 = arith.constant dense<0.000000e+00> : vector<16x8xf32>
    %239 = tpu.matmul %226, %236, %cst_81 {dimension_numbers = #tpu.dot_dimension_numbers<[1], [1], [0], [0], [0, 0, 1, 0], [], []>} : vector<16x32xbf16>, vector<8x32xbf16>, vector<16x8xf32> -> vector<16x8xf32>
    %cst_82 = arith.constant 0.176776692 : f32
    %240 = vector.broadcast %cst_82 : f32 to vector<16x8xf32>
    %241 = arith.mulf %239, %240 : vector<16x8xf32>
    %242 = vector.broadcast %3 : vector<1x8xf32> to vector<16x8xf32>
    %243 = arith.addf %241, %242 : vector<16x8xf32>
    %cst_83 = arith.constant dense<0xFF800000> : vector<16xf32>
    %244 = vector.multi_reduction <maximumf>, %243, %cst_83 [1] : vector<16x8xf32> to vector<16xf32>
    %245 = vector.shape_cast %244 : vector<16xf32> to vector<16x1xf32>
    %246 = vector.broadcast %245 : vector<16x1xf32> to vector<16x8xf32>
    %247 = arith.subf %243, %246 : vector<16x8xf32>
    %248 = math.exp %247 : vector<16x8xf32>
    %cst_84 = arith.constant dense<0.000000e+00> : vector<16xf32>
    %249 = vector.multi_reduction <add>, %248, %cst_84 [1] : vector<16x8xf32> to vector<16xf32>
    %250 = vector.shape_cast %249 : vector<16xf32> to vector<16x1xf32>
    %251 = vector.broadcast %250 : vector<16x1xf32> to vector<16x8xf32>
    %252 = arith.divf %248, %251 : vector<16x8xf32>
    %253 = arith.truncf %252 : vector<16x8xf32> to vector<16x8xbf16>
    %cst_85 = arith.constant dense<0.000000e+00> : vector<16x32xf32>
    %254 = tpu.matmul %253, %238, %cst_85 {dimension_numbers = #tpu.dot_dimension_numbers<[1], [0], [0], [1], [0, 0, 1, 1], [], []>} : vector<16x8xbf16>, vector<8x32xbf16>, vector<16x32xf32> -> vector<16x32xf32>
    %255 = vector.extract_strided_slice %254 {offsets = [0, 0], sizes = [8, 32], strides = [1, 1]} : vector<16x32xf32> to vector<8x32xf32>
    %c0_86 = arith.constant 0 : index
    %c64_87 = arith.constant 64 : index
    %256 = vector.load %arg15[%c0_86, %c64_87] : memref<8x128xf32, #tpu.memory_space<vmem>>, vector<8x32xf32>
    tpu.vector_store %arg15[%c0_86, %c64_87], %255 {strides = array<i32>} : memref<8x128xf32, #tpu.memory_space<vmem>>, vector<8x32xf32>,
    %257 = vector.extract_strided_slice %254 {offsets = [8, 0], sizes = [8, 32], strides = [1, 1]} : vector<16x32xf32> to vector<8x32xf32>
    %c0_88 = arith.constant 0 : index
    %c96_89 = arith.constant 96 : index
    %258 = vector.load %arg15[%c0_88, %c96_89] : memref<8x128xf32, #tpu.memory_space<vmem>>, vector<8x32xf32>
    tpu.vector_store %arg15[%c0_88, %c96_89], %257 {strides = array<i32>} : memref<8x128xf32, #tpu.memory_space<vmem>>, vector<8x32xf32>,
    %c0_90 = arith.constant 0 : index
    %c0_91 = arith.constant 0 : index
    %259 = vector.load %arg15[%c0_90, %c0_91] : memref<8x128xf32, #tpu.memory_space<vmem>>, vector<8x128xf32>
    %260 = arith.truncf %259 : vector<8x128xf32> to vector<8x128xbf16>
    %c1_92 = arith.constant 1 : index
    %c0_93 = arith.constant 0 : index
    %c0_94 = arith.constant 0 : index
    %261 = vector.load %arg8[%c1_92, %c0_93, %c0_94] : memref<3x128x128xbf16, #tpu.memory_space<vmem>>, vector<1x128x128xbf16>
    %262 = vector.shape_cast %261 : vector<1x128x128xbf16> to vector<128x128xbf16>
    %cst_95 = arith.constant dense<0.000000e+00> : vector<8x128xf32>
    %263 = tpu.matmul %260, %262, %cst_95 {dimension_numbers = #tpu.dot_dimension_numbers<[1], [0], [0], [1], [0, 0, 1, 1], [], []>} : vector<8x128xbf16>, vector<128x128xbf16>, vector<8x128xf32> -> vector<8x128xf32>
    %264 = arith.addf %152, %263 : vector<8x128xf32>
    %c1_96 = arith.constant 1 : index
    %c0_97 = arith.constant 0 : index
    %c0_98 = arith.constant 0 : index
    %265 = vector.load %arg6[%c1_96, %c0_97, %c0_98] : memref<3x1x128xf32, #tpu.memory_space<vmem>>, vector<1x1x128xf32>
    %266 = vector.shape_cast %265 : vector<1x1x128xf32> to vector<1x128xf32>
    %267 = arith.mulf %264, %264 : vector<8x128xf32>
    %cst_99 = arith.constant dense<0.000000e+00> : vector<8xf32>
    %268 = vector.multi_reduction <add>, %267, %cst_99 [1] : vector<8x128xf32> to vector<8xf32>
    %269 = vector.shape_cast %268 : vector<8xf32> to vector<8x1xf32>
    %cst_100 = arith.constant 1.280000e+02 : f32
    %270 = vector.broadcast %cst_100 : f32 to vector<8x1xf32>
    %271 = arith.divf %269, %270 : vector<8x1xf32>
    %cst_101 = arith.constant 9.99999974E-6 : f32
    %272 = vector.broadcast %cst_101 : f32 to vector<8x1xf32>
    %273 = arith.addf %271, %272 : vector<8x1xf32>
    %274 = math.rsqrt %273 : vector<8x1xf32>
    %275 = vector.broadcast %274 : vector<8x1xf32> to vector<8x128xf32>
    %276 = arith.mulf %264, %275 : vector<8x128xf32>
    %277 = vector.broadcast %266 : vector<1x128xf32> to vector<8x128xf32>
    %278 = arith.mulf %276, %277 : vector<8x128xf32>
    %279 = arith.truncf %278 : vector<8x128xf32> to vector<8x128xbf16>
    %c1_102 = arith.constant 1 : index
    %c0_103 = arith.constant 0 : index
    %c0_104 = arith.constant 0 : index
    %280 = vector.load %arg9[%c1_102, %c0_103, %c0_104] : memref<3x128x512xbf16, #tpu.memory_space<vmem>>, vector<1x128x512xbf16>
    %281 = vector.shape_cast %280 : vector<1x128x512xbf16> to vector<128x512xbf16>
    %cst_105 = arith.constant dense<0.000000e+00> : vector<8x512xf32>
    %282 = tpu.matmul %279, %281, %cst_105 {dimension_numbers = #tpu.dot_dimension_numbers<[1], [0], [0], [1], [0, 0, 1, 1], [], []>} : vector<8x128xbf16>, vector<128x512xbf16>, vector<8x512xf32> -> vector<8x512xf32>
    %283 = vector.extract_strided_slice %282 {offsets = [0, 0], sizes = [8, 256], strides = [1, 1]} : vector<8x512xf32> to vector<8x256xf32>
    %284 = vector.extract_strided_slice %282 {offsets = [0, 256], sizes = [8, 256], strides = [1, 1]} : vector<8x512xf32> to vector<8x256xf32>
    %cst_106 = arith.constant 0.000000e+00 : f32
    %285 = vector.broadcast %cst_106 : f32 to vector<8x256xf32>
    %286 = arith.subf %285, %283 : vector<8x256xf32>
    %287 = math.exp %286 : vector<8x256xf32>
    %cst_107 = arith.constant 1.000000e+00 : f32
    %288 = vector.broadcast %cst_107 : f32 to vector<8x256xf32>
    %289 = arith.addf %288, %287 : vector<8x256xf32>
    %290 = tpu.reciprocal %289 {approx = true} : vector<8x256xf32> -> vector<8x256xf32>
    %291 = arith.mulf %283, %290 : vector<8x256xf32>
    %292 = arith.mulf %291, %284 : vector<8x256xf32>
    %293 = arith.truncf %292 : vector<8x256xf32> to vector<8x256xbf16>
    %c1_108 = arith.constant 1 : index
    %c0_109 = arith.constant 0 : index
    %c0_110 = arith.constant 0 : index
    %294 = vector.load %arg10[%c1_108, %c0_109, %c0_110] : memref<3x256x128xbf16, #tpu.memory_space<vmem>>, vector<1x256x128xbf16>
    %295 = vector.shape_cast %294 : vector<1x256x128xbf16> to vector<256x128xbf16>
    %cst_111 = arith.constant dense<0.000000e+00> : vector<8x128xf32>
    %296 = tpu.matmul %293, %295, %cst_111 {dimension_numbers = #tpu.dot_dimension_numbers<[1], [0], [0], [1], [0, 0, 1, 1], [], []>} : vector<8x256xbf16>, vector<256x128xbf16>, vector<8x128xf32> -> vector<8x128xf32>
    %297 = arith.addf %264, %296 : vector<8x128xf32>
    %c2 = arith.constant 2 : index
    %c0_112 = arith.constant 0 : index
    %c0_113 = arith.constant 0 : index
    %298 = vector.load %arg5[%c2, %c0_112, %c0_113] : memref<3x1x128xf32, #tpu.memory_space<vmem>>, vector<1x1x128xf32>
    %299 = vector.shape_cast %298 : vector<1x1x128xf32> to vector<1x128xf32>
    %300 = arith.mulf %297, %297 : vector<8x128xf32>
    %cst_114 = arith.constant dense<0.000000e+00> : vector<8xf32>
    %301 = vector.multi_reduction <add>, %300, %cst_114 [1] : vector<8x128xf32> to vector<8xf32>
    %302 = vector.shape_cast %301 : vector<8xf32> to vector<8x1xf32>
    %cst_115 = arith.constant 1.280000e+02 : f32
    %303 = vector.broadcast %cst_115 : f32 to vector<8x1xf32>
    %304 = arith.divf %302, %303 : vector<8x1xf32>
    %cst_116 = arith.constant 9.99999974E-6 : f32
    %305 = vector.broadcast %cst_116 : f32 to vector<8x1xf32>
    %306 = arith.addf %304, %305 : vector<8x1xf32>
    %307 = math.rsqrt %306 : vector<8x1xf32>
    %308 = vector.broadcast %307 : vector<8x1xf32> to vector<8x128xf32>
    %309 = arith.mulf %297, %308 : vector<8x128xf32>
    %310 = vector.broadcast %299 : vector<1x128xf32> to vector<8x128xf32>
    %311 = arith.mulf %309, %310 : vector<8x128xf32>
    %312 = arith.truncf %311 : vector<8x128xf32> to vector<8x128xbf16>
    %c2_117 = arith.constant 2 : index
    %c0_118 = arith.constant 0 : index
    %c0_119 = arith.constant 0 : index
    %313 = vector.load %arg7[%c2_117, %c0_118, %c0_119] : memref<3x128x256xbf16, #tpu.memory_space<vmem>>, vector<1x128x256xbf16>
    %314 = vector.shape_cast %313 : vector<1x128x256xbf16> to vector<128x256xbf16>
    %cst_120 = arith.constant dense<0.000000e+00> : vector<8x256xf32>
    %315 = tpu.matmul %312, %314, %cst_120 {dimension_numbers = #tpu.dot_dimension_numbers<[1], [0], [0], [1], [0, 0, 1, 1], [], []>} : vector<8x128xbf16>, vector<128x256xbf16>, vector<8x256xf32> -> vector<8x256xf32>
    %316 = vector.extract_strided_slice %315 {offsets = [0, 0], sizes = [8, 32], strides = [1, 1]} : vector<8x256xf32> to vector<8x32xf32>
    %317 = vector.extract_strided_slice %315 {offsets = [0, 32], sizes = [8, 32], strides = [1, 1]} : vector<8x256xf32> to vector<8x32xf32>
    %318 = tpu.concatenate %316, %317 in 0 : vector<8x32xf32>, vector<8x32xf32> -> vector<16x32xf32>
    %319 = vector.extract_strided_slice %318 {offsets = [0, 16], sizes = [16, 16], strides = [1, 1]} : vector<16x32xf32> to vector<16x16xf32>
    %cst_121 = arith.constant 0.000000e+00 : f32
    %320 = vector.broadcast %cst_121 : f32 to vector<16x16xf32>
    %321 = arith.subf %320, %319 : vector<16x16xf32>
    %322 = vector.extract_strided_slice %318 {offsets = [0, 0], sizes = [16, 16], strides = [1, 1]} : vector<16x32xf32> to vector<16x16xf32>
    %323 = tpu.concatenate %321, %322 in 1 : vector<16x16xf32>, vector<16x16xf32> -> vector<16x32xf32>
    %324 = arith.mulf %318, %4 : vector<16x32xf32>
    %325 = arith.mulf %323, %5 : vector<16x32xf32>
    %326 = arith.addf %324, %325 : vector<16x32xf32>
    %327 = arith.truncf %326 : vector<16x32xf32> to vector<16x32xbf16>
    %328 = vector.extract_strided_slice %315 {offsets = [0, 128], sizes = [8, 32], strides = [1, 1]} : vector<8x256xf32> to vector<8x32xf32>
    %329 = vector.extract_strided_slice %328 {offsets = [0, 16], sizes = [8, 16], strides = [1, 1]} : vector<8x32xf32> to vector<8x16xf32>
    %cst_122 = arith.constant 0.000000e+00 : f32
    %330 = vector.broadcast %cst_122 : f32 to vector<8x16xf32>
    %331 = arith.subf %330, %329 : vector<8x16xf32>
    %332 = vector.extract_strided_slice %328 {offsets = [0, 0], sizes = [8, 16], strides = [1, 1]} : vector<8x32xf32> to vector<8x16xf32>
    %333 = tpu.concatenate %331, %332 in 1 : vector<8x16xf32>, vector<8x16xf32> -> vector<8x32xf32>
    %334 = arith.mulf %328, %6 : vector<8x32xf32>
    %335 = arith.mulf %333, %7 : vector<8x32xf32>
    %336 = arith.addf %334, %335 : vector<8x32xf32>
    %337 = arith.truncf %336 : vector<8x32xf32> to vector<8x32xbf16>
    %338 = vector.extract_strided_slice %315 {offsets = [0, 192], sizes = [8, 32], strides = [1, 1]} : vector<8x256xf32> to vector<8x32xf32>
    %339 = arith.truncf %338 : vector<8x32xf32> to vector<8x32xbf16>
    %cst_123 = arith.constant dense<0.000000e+00> : vector<16x8xf32>
    %340 = tpu.matmul %327, %337, %cst_123 {dimension_numbers = #tpu.dot_dimension_numbers<[1], [1], [0], [0], [0, 0, 1, 0], [], []>} : vector<16x32xbf16>, vector<8x32xbf16>, vector<16x8xf32> -> vector<16x8xf32>
    %cst_124 = arith.constant 0.176776692 : f32
    %341 = vector.broadcast %cst_124 : f32 to vector<16x8xf32>
    %342 = arith.mulf %340, %341 : vector<16x8xf32>
    %343 = vector.broadcast %3 : vector<1x8xf32> to vector<16x8xf32>
    %344 = arith.addf %342, %343 : vector<16x8xf32>
    %cst_125 = arith.constant dense<0xFF800000> : vector<16xf32>
    %345 = vector.multi_reduction <maximumf>, %344, %cst_125 [1] : vector<16x8xf32> to vector<16xf32>
    %346 = vector.shape_cast %345 : vector<16xf32> to vector<16x1xf32>
    %347 = vector.broadcast %346 : vector<16x1xf32> to vector<16x8xf32>
    %348 = arith.subf %344, %347 : vector<16x8xf32>
    %349 = math.exp %348 : vector<16x8xf32>
    %cst_126 = arith.constant dense<0.000000e+00> : vector<16xf32>
    %350 = vector.multi_reduction <add>, %349, %cst_126 [1] : vector<16x8xf32> to vector<16xf32>
    %351 = vector.shape_cast %350 : vector<16xf32> to vector<16x1xf32>
    %352 = vector.broadcast %351 : vector<16x1xf32> to vector<16x8xf32>
    %353 = arith.divf %349, %352 : vector<16x8xf32>
    %354 = arith.truncf %353 : vector<16x8xf32> to vector<16x8xbf16>
    %cst_127 = arith.constant dense<0.000000e+00> : vector<16x32xf32>
    %355 = tpu.matmul %354, %339, %cst_127 {dimension_numbers = #tpu.dot_dimension_numbers<[1], [0], [0], [1], [0, 0, 1, 1], [], []>} : vector<16x8xbf16>, vector<8x32xbf16>, vector<16x32xf32> -> vector<16x32xf32>
    %356 = vector.extract_strided_slice %355 {offsets = [0, 0], sizes = [8, 32], strides = [1, 1]} : vector<16x32xf32> to vector<8x32xf32>
    %c0_128 = arith.constant 0 : index
    %c0_129 = arith.constant 0 : index
    %357 = vector.load %arg15[%c0_128, %c0_129] : memref<8x128xf32, #tpu.memory_space<vmem>>, vector<8x32xf32>
    tpu.vector_store %arg15[%c0_128, %c0_129], %356 {strides = array<i32>} : memref<8x128xf32, #tpu.memory_space<vmem>>, vector<8x32xf32>,
    %358 = vector.extract_strided_slice %355 {offsets = [8, 0], sizes = [8, 32], strides = [1, 1]} : vector<16x32xf32> to vector<8x32xf32>
    %c0_130 = arith.constant 0 : index
    %c32_131 = arith.constant 32 : index
    %359 = vector.load %arg15[%c0_130, %c32_131] : memref<8x128xf32, #tpu.memory_space<vmem>>, vector<8x32xf32>
    tpu.vector_store %arg15[%c0_130, %c32_131], %358 {strides = array<i32>} : memref<8x128xf32, #tpu.memory_space<vmem>>, vector<8x32xf32>,
    %360 = vector.extract_strided_slice %315 {offsets = [0, 64], sizes = [8, 32], strides = [1, 1]} : vector<8x256xf32> to vector<8x32xf32>
    %361 = vector.extract_strided_slice %315 {offsets = [0, 96], sizes = [8, 32], strides = [1, 1]} : vector<8x256xf32> to vector<8x32xf32>
    %362 = tpu.concatenate %360, %361 in 0 : vector<8x32xf32>, vector<8x32xf32> -> vector<16x32xf32>
    %363 = vector.extract_strided_slice %362 {offsets = [0, 16], sizes = [16, 16], strides = [1, 1]} : vector<16x32xf32> to vector<16x16xf32>
    %cst_132 = arith.constant 0.000000e+00 : f32
    %364 = vector.broadcast %cst_132 : f32 to vector<16x16xf32>
    %365 = arith.subf %364, %363 : vector<16x16xf32>
    %366 = vector.extract_strided_slice %362 {offsets = [0, 0], sizes = [16, 16], strides = [1, 1]} : vector<16x32xf32> to vector<16x16xf32>
    %367 = tpu.concatenate %365, %366 in 1 : vector<16x16xf32>, vector<16x16xf32> -> vector<16x32xf32>
    %368 = arith.mulf %362, %4 : vector<16x32xf32>
    %369 = arith.mulf %367, %5 : vector<16x32xf32>
    %370 = arith.addf %368, %369 : vector<16x32xf32>
    %371 = arith.truncf %370 : vector<16x32xf32> to vector<16x32xbf16>
    %372 = vector.extract_strided_slice %315 {offsets = [0, 160], sizes = [8, 32], strides = [1, 1]} : vector<8x256xf32> to vector<8x32xf32>
    %373 = vector.extract_strided_slice %372 {offsets = [0, 16], sizes = [8, 16], strides = [1, 1]} : vector<8x32xf32> to vector<8x16xf32>
    %cst_133 = arith.constant 0.000000e+00 : f32
    %374 = vector.broadcast %cst_133 : f32 to vector<8x16xf32>
    %375 = arith.subf %374, %373 : vector<8x16xf32>
    %376 = vector.extract_strided_slice %372 {offsets = [0, 0], sizes = [8, 16], strides = [1, 1]} : vector<8x32xf32> to vector<8x16xf32>
    %377 = tpu.concatenate %375, %376 in 1 : vector<8x16xf32>, vector<8x16xf32> -> vector<8x32xf32>
    %378 = arith.mulf %372, %6 : vector<8x32xf32>
    %379 = arith.mulf %377, %7 : vector<8x32xf32>
    %380 = arith.addf %378, %379 : vector<8x32xf32>
    %381 = arith.truncf %380 : vector<8x32xf32> to vector<8x32xbf16>
    %382 = vector.extract_strided_slice %315 {offsets = [0, 224], sizes = [8, 32], strides = [1, 1]} : vector<8x256xf32> to vector<8x32xf32>
    %383 = arith.truncf %382 : vector<8x32xf32> to vector<8x32xbf16>
    %cst_134 = arith.constant dense<0.000000e+00> : vector<16x8xf32>
    %384 = tpu.matmul %371, %381, %cst_134 {dimension_numbers = #tpu.dot_dimension_numbers<[1], [1], [0], [0], [0, 0, 1, 0], [], []>} : vector<16x32xbf16>, vector<8x32xbf16>, vector<16x8xf32> -> vector<16x8xf32>
    %cst_135 = arith.constant 0.176776692 : f32
    %385 = vector.broadcast %cst_135 : f32 to vector<16x8xf32>
    %386 = arith.mulf %384, %385 : vector<16x8xf32>
    %387 = vector.broadcast %3 : vector<1x8xf32> to vector<16x8xf32>
    %388 = arith.addf %386, %387 : vector<16x8xf32>
    %cst_136 = arith.constant dense<0xFF800000> : vector<16xf32>
    %389 = vector.multi_reduction <maximumf>, %388, %cst_136 [1] : vector<16x8xf32> to vector<16xf32>
    %390 = vector.shape_cast %389 : vector<16xf32> to vector<16x1xf32>
    %391 = vector.broadcast %390 : vector<16x1xf32> to vector<16x8xf32>
    %392 = arith.subf %388, %391 : vector<16x8xf32>
    %393 = math.exp %392 : vector<16x8xf32>
    %cst_137 = arith.constant dense<0.000000e+00> : vector<16xf32>
    %394 = vector.multi_reduction <add>, %393, %cst_137 [1] : vector<16x8xf32> to vector<16xf32>
    %395 = vector.shape_cast %394 : vector<16xf32> to vector<16x1xf32>
    %396 = vector.broadcast %395 : vector<16x1xf32> to vector<16x8xf32>
    %397 = arith.divf %393, %396 : vector<16x8xf32>
    %398 = arith.truncf %397 : vector<16x8xf32> to vector<16x8xbf16>
    %cst_138 = arith.constant dense<0.000000e+00> : vector<16x32xf32>
    %399 = tpu.matmul %398, %383, %cst_138 {dimension_numbers = #tpu.dot_dimension_numbers<[1], [0], [0], [1], [0, 0, 1, 1], [], []>} : vector<16x8xbf16>, vector<8x32xbf16>, vector<16x32xf32> -> vector<16x32xf32>
    %400 = vector.extract_strided_slice %399 {offsets = [0, 0], sizes = [8, 32], strides = [1, 1]} : vector<16x32xf32> to vector<8x32xf32>
    %c0_139 = arith.constant 0 : index
    %c64_140 = arith.constant 64 : index
    %401 = vector.load %arg15[%c0_139, %c64_140] : memref<8x128xf32, #tpu.memory_space<vmem>>, vector<8x32xf32>
    tpu.vector_store %arg15[%c0_139, %c64_140], %400 {strides = array<i32>} : memref<8x128xf32, #tpu.memory_space<vmem>>, vector<8x32xf32>,
    %402 = vector.extract_strided_slice %399 {offsets = [8, 0], sizes = [8, 32], strides = [1, 1]} : vector<16x32xf32> to vector<8x32xf32>
    %c0_141 = arith.constant 0 : index
    %c96_142 = arith.constant 96 : index
    %403 = vector.load %arg15[%c0_141, %c96_142] : memref<8x128xf32, #tpu.memory_space<vmem>>, vector<8x32xf32>
    tpu.vector_store %arg15[%c0_141, %c96_142], %402 {strides = array<i32>} : memref<8x128xf32, #tpu.memory_space<vmem>>, vector<8x32xf32>,
    %c0_143 = arith.constant 0 : index
    %c0_144 = arith.constant 0 : index
    %404 = vector.load %arg15[%c0_143, %c0_144] : memref<8x128xf32, #tpu.memory_space<vmem>>, vector<8x128xf32>
    %405 = arith.truncf %404 : vector<8x128xf32> to vector<8x128xbf16>
    %c2_145 = arith.constant 2 : index
    %c0_146 = arith.constant 0 : index
    %c0_147 = arith.constant 0 : index
    %406 = vector.load %arg8[%c2_145, %c0_146, %c0_147] : memref<3x128x128xbf16, #tpu.memory_space<vmem>>, vector<1x128x128xbf16>
    %407 = vector.shape_cast %406 : vector<1x128x128xbf16> to vector<128x128xbf16>
    %cst_148 = arith.constant dense<0.000000e+00> : vector<8x128xf32>
    %408 = tpu.matmul %405, %407, %cst_148 {dimension_numbers = #tpu.dot_dimension_numbers<[1], [0], [0], [1], [0, 0, 1, 1], [], []>} : vector<8x128xbf16>, vector<128x128xbf16>, vector<8x128xf32> -> vector<8x128xf32>
    %409 = arith.addf %297, %408 : vector<8x128xf32>
    %c2_149 = arith.constant 2 : index
    %c0_150 = arith.constant 0 : index
    %c0_151 = arith.constant 0 : index
    %410 = vector.load %arg6[%c2_149, %c0_150, %c0_151] : memref<3x1x128xf32, #tpu.memory_space<vmem>>, vector<1x1x128xf32>
    %411 = vector.shape_cast %410 : vector<1x1x128xf32> to vector<1x128xf32>
    %412 = arith.mulf %409, %409 : vector<8x128xf32>
    %cst_152 = arith.constant dense<0.000000e+00> : vector<8xf32>
    %413 = vector.multi_reduction <add>, %412, %cst_152 [1] : vector<8x128xf32> to vector<8xf32>
    %414 = vector.shape_cast %413 : vector<8xf32> to vector<8x1xf32>
    %cst_153 = arith.constant 1.280000e+02 : f32
    %415 = vector.broadcast %cst_153 : f32 to vector<8x1xf32>
    %416 = arith.divf %414, %415 : vector<8x1xf32>
    %cst_154 = arith.constant 9.99999974E-6 : f32
    %417 = vector.broadcast %cst_154 : f32 to vector<8x1xf32>
    %418 = arith.addf %416, %417 : vector<8x1xf32>
    %419 = math.rsqrt %418 : vector<8x1xf32>
    %420 = vector.broadcast %419 : vector<8x1xf32> to vector<8x128xf32>
    %421 = arith.mulf %409, %420 : vector<8x128xf32>
    %422 = vector.broadcast %411 : vector<1x128xf32> to vector<8x128xf32>
    %423 = arith.mulf %421, %422 : vector<8x128xf32>
    %424 = arith.truncf %423 : vector<8x128xf32> to vector<8x128xbf16>
    %c2_155 = arith.constant 2 : index
    %c0_156 = arith.constant 0 : index
    %c0_157 = arith.constant 0 : index
    %425 = vector.load %arg9[%c2_155, %c0_156, %c0_157] : memref<3x128x512xbf16, #tpu.memory_space<vmem>>, vector<1x128x512xbf16>
    %426 = vector.shape_cast %425 : vector<1x128x512xbf16> to vector<128x512xbf16>
    %cst_158 = arith.constant dense<0.000000e+00> : vector<8x512xf32>
    %427 = tpu.matmul %424, %426, %cst_158 {dimension_numbers = #tpu.dot_dimension_numbers<[1], [0], [0], [1], [0, 0, 1, 1], [], []>} : vector<8x128xbf16>, vector<128x512xbf16>, vector<8x512xf32> -> vector<8x512xf32>
    %428 = vector.extract_strided_slice %427 {offsets = [0, 0], sizes = [8, 256], strides = [1, 1]} : vector<8x512xf32> to vector<8x256xf32>
    %429 = vector.extract_strided_slice %427 {offsets = [0, 256], sizes = [8, 256], strides = [1, 1]} : vector<8x512xf32> to vector<8x256xf32>
    %cst_159 = arith.constant 0.000000e+00 : f32
    %430 = vector.broadcast %cst_159 : f32 to vector<8x256xf32>
    %431 = arith.subf %430, %428 : vector<8x256xf32>
    %432 = math.exp %431 : vector<8x256xf32>
    %cst_160 = arith.constant 1.000000e+00 : f32
    %433 = vector.broadcast %cst_160 : f32 to vector<8x256xf32>
    %434 = arith.addf %433, %432 : vector<8x256xf32>
    %435 = tpu.reciprocal %434 {approx = true} : vector<8x256xf32> -> vector<8x256xf32>
    %436 = arith.mulf %428, %435 : vector<8x256xf32>
    %437 = arith.mulf %436, %429 : vector<8x256xf32>
    %438 = arith.truncf %437 : vector<8x256xf32> to vector<8x256xbf16>
    %c2_161 = arith.constant 2 : index
    %c0_162 = arith.constant 0 : index
    %c0_163 = arith.constant 0 : index
    %439 = vector.load %arg10[%c2_161, %c0_162, %c0_163] : memref<3x256x128xbf16, #tpu.memory_space<vmem>>, vector<1x256x128xbf16>
    %440 = vector.shape_cast %439 : vector<1x256x128xbf16> to vector<256x128xbf16>
    %cst_164 = arith.constant dense<0.000000e+00> : vector<8x128xf32>
    %441 = tpu.matmul %438, %440, %cst_164 {dimension_numbers = #tpu.dot_dimension_numbers<[1], [0], [0], [1], [0, 0, 1, 1], [], []>} : vector<8x256xbf16>, vector<256x128xbf16>, vector<8x128xf32> -> vector<8x128xf32>
    %442 = arith.addf %409, %441 : vector<8x128xf32>
    %c0_165 = arith.constant 0 : index
    %c0_166 = arith.constant 0 : index
    %443 = vector.load %arg11[%c0_165, %c0_166] : memref<1x128xf32, #tpu.memory_space<vmem>>, vector<1x128xf32>
    %444 = arith.mulf %442, %442 : vector<8x128xf32>
    %cst_167 = arith.constant dense<0.000000e+00> : vector<8xf32>
    %445 = vector.multi_reduction <add>, %444, %cst_167 [1] : vector<8x128xf32> to vector<8xf32>
    %446 = vector.shape_cast %445 : vector<8xf32> to vector<8x1xf32>
    %cst_168 = arith.constant 1.280000e+02 : f32
    %447 = vector.broadcast %cst_168 : f32 to vector<8x1xf32>
    %448 = arith.divf %446, %447 : vector<8x1xf32>
    %cst_169 = arith.constant 9.99999974E-6 : f32
    %449 = vector.broadcast %cst_169 : f32 to vector<8x1xf32>
    %450 = arith.addf %448, %449 : vector<8x1xf32>
    %451 = math.rsqrt %450 : vector<8x1xf32>
    %452 = vector.broadcast %451 : vector<8x1xf32> to vector<8x128xf32>
    %453 = arith.mulf %442, %452 : vector<8x128xf32>
    %454 = vector.broadcast %443 : vector<1x128xf32> to vector<8x128xf32>
    %455 = arith.mulf %453, %454 : vector<8x128xf32>
    %456 = arith.truncf %455 : vector<8x128xf32> to vector<8x128xbf16>
    %c0_170 = arith.constant 0 : index
    %c0_171 = arith.constant 0 : index
    %457 = vector.load %arg12[%c0_170, %c0_171] : memref<128x512xbf16, #tpu.memory_space<vmem>>, vector<128x512xbf16>
    %cst_172 = arith.constant dense<0.000000e+00> : vector<8x512xf32>
    %458 = tpu.matmul %456, %457, %cst_172 {dimension_numbers = #tpu.dot_dimension_numbers<[1], [0], [0], [1], [0, 0, 1, 1], [], []>} : vector<8x128xbf16>, vector<128x512xbf16>, vector<8x512xf32> -> vector<8x512xf32>
    %c0_173 = arith.constant 0 : index
    %c0_174 = arith.constant 0 : index
    %459 = vector.load %arg13[%c0_173, %c0_174] : memref<1x512xf32, #tpu.memory_space<vmem>>, vector<1x512xf32>
    %460 = vector.broadcast %459 : vector<1x512xf32> to vector<8x512xf32>
    %461 = arith.addf %458, %460 : vector<8x512xf32>
    %c0_175 = arith.constant 0 : index
    %c0_176 = arith.constant 0 : index
    %c0_177 = arith.constant 0 : index
    %462 = vector.load %arg14[%c0_175, %c0_176, %c0_177] : memref<1x8x512xf32, #tpu.memory_space<vmem>>, vector<1x8x512xf32>
    %463 = vector.shape_cast %462 : vector<1x8x512xf32> to vector<8x512xf32>
    %464 = vector.shape_cast %461 : vector<8x512xf32> to vector<1x8x512xf32>
    tpu.vector_store %arg14[%c0_175, %c0_176, %c0_177], %464 {strides = array<i32>} : memref<1x8x512xf32, #tpu.memory_space<vmem>>, vector<1x8x512xf32>,
    return
  }
  func.func @transform_0(%arg0: i32) -> (i32, i32, i32) {
    %c0_i32 = arith.constant 0 : i32
    %c0_i32_0 = arith.constant 0 : i32
    %c0_i32_1 = arith.constant 0 : i32
    return %arg0, %c0_i32, %c0_i32_0 : i32, i32, i32
  }
  func.func @transform_1(%arg0: i32) -> (i32, i32, i32) {
    %c0_i32 = arith.constant 0 : i32
    %c0_i32_0 = arith.constant 0 : i32
    %c0_i32_1 = arith.constant 0 : i32
    return %arg0, %c0_i32, %c0_i32_0 : i32, i32, i32
  }
  func.func @transform_2(%arg0: i32) -> (i32, i32) {
    %c0_i32 = arith.constant 0 : i32
    %c0_i32_0 = arith.constant 0 : i32
    %c0_i32_1 = arith.constant 0 : i32
    return %c0_i32, %c0_i32_0 : i32, i32
  }
  func.func @transform_3(%arg0: i32) -> (i32, i32) {
    %c0_i32 = arith.constant 0 : i32
    %c0_i32_0 = arith.constant 0 : i32
    %c0_i32_1 = arith.constant 0 : i32
    return %c0_i32, %c0_i32_0 : i32, i32
  }
  func.func @transform_4(%arg0: i32) -> (i32, i32, i32) {
    %c0_i32 = arith.constant 0 : i32
    %c0_i32_0 = arith.constant 0 : i32
    %c0_i32_1 = arith.constant 0 : i32
    %c0_i32_2 = arith.constant 0 : i32
    return %c0_i32, %c0_i32_0, %c0_i32_1 : i32, i32, i32
  }
  func.func @transform_5(%arg0: i32) -> (i32, i32, i32) {
    %c0_i32 = arith.constant 0 : i32
    %c0_i32_0 = arith.constant 0 : i32
    %c0_i32_1 = arith.constant 0 : i32
    %c0_i32_2 = arith.constant 0 : i32
    return %c0_i32, %c0_i32_0, %c0_i32_1 : i32, i32, i32
  }
  func.func @transform_6(%arg0: i32) -> (i32, i32, i32) {
    %c0_i32 = arith.constant 0 : i32
    %c0_i32_0 = arith.constant 0 : i32
    %c0_i32_1 = arith.constant 0 : i32
    %c0_i32_2 = arith.constant 0 : i32
    return %c0_i32, %c0_i32_0, %c0_i32_1 : i32, i32, i32
  }
  func.func @transform_7(%arg0: i32) -> (i32, i32, i32) {
    %c0_i32 = arith.constant 0 : i32
    %c0_i32_0 = arith.constant 0 : i32
    %c0_i32_1 = arith.constant 0 : i32
    %c0_i32_2 = arith.constant 0 : i32
    return %c0_i32, %c0_i32_0, %c0_i32_1 : i32, i32, i32
  }
  func.func @transform_8(%arg0: i32) -> (i32, i32, i32) {
    %c0_i32 = arith.constant 0 : i32
    %c0_i32_0 = arith.constant 0 : i32
    %c0_i32_1 = arith.constant 0 : i32
    %c0_i32_2 = arith.constant 0 : i32
    return %c0_i32, %c0_i32_0, %c0_i32_1 : i32, i32, i32
  }
  func.func @transform_9(%arg0: i32) -> (i32, i32, i32) {
    %c0_i32 = arith.constant 0 : i32
    %c0_i32_0 = arith.constant 0 : i32
    %c0_i32_1 = arith.constant 0 : i32
    %c0_i32_2 = arith.constant 0 : i32
    return %c0_i32, %c0_i32_0, %c0_i32_1 : i32, i32, i32
  }
  func.func @transform_10(%arg0: i32) -> (i32, i32) {
    %c0_i32 = arith.constant 0 : i32
    %c0_i32_0 = arith.constant 0 : i32
    %c0_i32_1 = arith.constant 0 : i32
    return %c0_i32, %c0_i32_0 : i32, i32
  }
  func.func @transform_11(%arg0: i32) -> (i32, i32) {
    %c0_i32 = arith.constant 0 : i32
    %c0_i32_0 = arith.constant 0 : i32
    %c0_i32_1 = arith.constant 0 : i32
    return %c0_i32, %c0_i32_0 : i32, i32
  }
  func.func @transform_12(%arg0: i32) -> (i32, i32) {
    %c0_i32 = arith.constant 0 : i32
    %c0_i32_0 = arith.constant 0 : i32
    %c0_i32_1 = arith.constant 0 : i32
    return %c0_i32, %c0_i32_0 : i32, i32
  }
  func.func @transform_13(%arg0: i32) -> (i32, i32, i32) {
    %c0_i32 = arith.constant 0 : i32
    %c0_i32_0 = arith.constant 0 : i32
    %c0_i32_1 = arith.constant 0 : i32
    return %arg0, %c0_i32, %c0_i32_0 : i32, i32, i32
  }
}

</mosaic_0001>

<llo_original>
// kernel: speech_unit_forward.1
$region0: #{speech_unit_forward.1}
  #allocation0 [shape = 'u32[]', space=smem, size = 0x4, offset = 0x4, fixed_abs, tag = 'smem constant byte address 0x4 - core index']
  #allocation1 [shape = 'u32[144,128]{1,0:T(1,128)}', space=vmem, size = 0x12000, scoped, tag = 'internal scratch']
  #allocation2 [shape = 'f32[8,128]{1,0:T(8,128)}', space=vmem, size = 0x1000, scoped, tag = 'scratch operand']
  %s0 = inlined_call_operand.vmem [shape: f32[2,8,128], index: 0, kind: input, shape index: {}]
  %s1 = inlined_call_operand.vmem [shape: f32[2,1,8], index: 1, kind: input, shape index: {}]
  %s2 = inlined_call_operand.vmem [shape: f32[16,32], index: 2, kind: input, shape index: {}]
  %s3 = inlined_call_operand.vmem [shape: f32[16,32], index: 3, kind: input, shape index: {}]
  %s4 = inlined_call_operand.vmem [shape: f32[3,1,128], index: 4, kind: input, shape index: {}, may-alias: {4,5}]
  %s5 = inlined_call_operand.vmem [shape: f32[3,1,128], index: 5, kind: input, shape index: {}, may-alias: {4,5}]
  %s6 = inlined_call_operand.vmem [shape: bf16[3,128,256], index: 6, kind: input, shape index: {}]
  %s7 = inlined_call_operand.vmem [shape: bf16[3,128,128], index: 7, kind: input, shape index: {}]
  %s8 = inlined_call_operand.vmem [shape: bf16[3,128,512], index: 8, kind: input, shape index: {}]
  %s9 = inlined_call_operand.vmem [shape: bf16[3,256,128], index: 9, kind: input, shape index: {}]
  %s10 = inlined_call_operand.vmem [shape: f32[1,128], index: 10, kind: input, shape index: {}]
  %s11 = inlined_call_operand.vmem [shape: bf16[128,512], index: 11, kind: input, shape index: {}]
  %s12 = inlined_call_operand.vmem [shape: f32[1,512], index: 12, kind: input, shape index: {}]
  %s13 = inlined_call_operand.vmem [shape: f32[2,8,512], index: 13, kind: output, shape index: {}]
  %s14 = sld [smem:[#allocation0]]
  $region85: #{speech_unit_forward.1} parent=0
    _
  %s16 = ssub.s32 1, %s14
  %s17 = scalar_select 0, %s16, %s14
  loop: start=0, step=1, limit=4
  $region2: #{speech_unit_forward.1} parent=0 // loop_pre_header
    _
  $region3: #{speech_unit_forward.1} parent=0 // loop_header
    %s19 = sphi 0, %s23
    %p20 = scmp.ge.s32.totalorder %s19, 4
    %s29 = sphi 0, %s31
    %s32 = sphi 0, %s29
    %s33 = sphi 0, %s32
    %s49 = sphi 0, %s33
    %s55 = sphi 0, %s57
    %s58 = sphi 0, %s55
    %s59 = sphi 0, %s58
    %s75 = sphi 0, %s59
    %s79 = sphi 0, %s79
    %s81 = sphi 0, %s79
    %s82 = sphi 0, %s81
    %s96 = sphi 0, %s82
    %s100 = sphi 0, %s100
    %s102 = sphi 0, %s100
    %s103 = sphi 0, %s102
    %s117 = sphi 0, %s103
    %s121 = sphi 0, %s121
    %s123 = sphi 0, %s121
    %s124 = sphi 0, %s123
    %s138 = sphi 0, %s124
    %s142 = sphi 0, %s142
    %s144 = sphi 0, %s142
    %s145 = sphi 0, %s144
    %s159 = sphi 0, %s145
    %s163 = sphi 0, %s163
    %s165 = sphi 0, %s163
    %s166 = sphi 0, %s165
    %s180 = sphi 0, %s166
    %s184 = sphi 0, %s184
    %s186 = sphi 0, %s184
    %s187 = sphi 0, %s186
    %s201 = sphi 0, %s187
    %s205 = sphi 0, %s205
    %s207 = sphi 0, %s205
    %s208 = sphi 0, %s207
    %s222 = sphi 0, %s208
    %s226 = sphi 0, %s226
    %s228 = sphi 0, %s226
    %s229 = sphi 0, %s228
    %s243 = sphi 0, %s229
    %s247 = sphi 0, %s247
    %s249 = sphi 0, %s247
    %s250 = sphi 0, %s249
    %s264 = sphi 0, %s250
    %s268 = sphi 0, %s268
    %s270 = sphi 0, %s268
    %s271 = sphi 0, %s270
    %s285 = sphi 0, %s271
    %s289 = sphi 0, %s289
    %s291 = sphi 0, %s289
    %s292 = sphi 0, %s291
    %s306 = sphi 0, %s292
    %s312 = sphi 0, %s314
    %s315 = sphi 0, %s312
    %s316 = sphi 0, %s315
    %s332 = sphi 0, %s316
  $region4: #{speech_unit_forward.1} parent=0 // loop_header_branch
    %22 = sbr.rel (%p20) target = $region8
  $region5: #{speech_unit_forward.1} parent=0 // loop_body
    %s24 = ssub.s32 %s19, 1
    %s25 = ssub.s32 %s19, 2
    %s26 = sadd.s32 %s19, 1
    %s27 = ssub.s32 %s19, %s26
    %p28 = scmp.eq.s32.totalorder %s27, 0
    %s30 = sadd.s32 %s29, 1
    %s31 = scalar_select %p28, %s29, %s30
    %p34 = pneg %p28
    %p35 = scmp.eq.s32.totalorder %s19, 1
    %p36 = por %p34, %p35
    %p37 = scmp.ne.s32.totalorder %s29, %s32
    %p38 = scmp.eq.s32.totalorder %s19, 0
    %p39 = por %p37, %p38
    %p40 = scmp.ne.s32.totalorder %s29, %s32
    %p41 = scmp.eq.s32.totalorder %s24, 1
    %p42 = por %p40, %p41
    %p43 = scmp.ne.s32.totalorder %s32, %s33
    %p44 = scmp.eq.s32.totalorder %s24, 0
    %p45 = por %p43, %p44
    %p46 = scmp.ne.s32.totalorder %s32, %s33
    %p47 = scmp.eq.s32.totalorder %s25, 1
    %p48 = por %p46, %p47
    %p50 = scmp.ne.s32.totalorder %s33, %s49
    %p51 = scmp.eq.s32.totalorder %s25, 0
    %p52 = por %p50, %p51
    %s53 = ssub.s32 %s19, %s26
    %p54 = scmp.eq.s32.totalorder %s53, 0
    %s56 = sadd.s32 %s55, 1
    %s57 = scalar_select %p54, %s55, %s56
    %p60 = pneg %p54
    %p61 = scmp.eq.s32.totalorder %s19, 1
    %p62 = por %p60, %p61
    %p63 = scmp.ne.s32.totalorder %s55, %s58
    %p64 = scmp.eq.s32.totalorder %s19, 0
    %p65 = por %p63, %p64
    %p66 = scmp.ne.s32.totalorder %s55, %s58
    %p67 = scmp.eq.s32.totalorder %s24, 1
    %p68 = por %p66, %p67
    %p69 = scmp.ne.s32.totalorder %s58, %s59
    %p70 = scmp.eq.s32.totalorder %s24, 0
    %p71 = por %p69, %p70
    %p72 = scmp.ne.s32.totalorder %s58, %s59
    %p73 = scmp.eq.s32.totalorder %s25, 1
    %p74 = por %p72, %p73
    %p76 = scmp.ne.s32.totalorder %s59, %s75
    %p77 = scmp.eq.s32.totalorder %s25, 0
    %p78 = por %p76, %p77
    %s80 = sadd.s32 %s79, 1
    %p83 = scmp.eq.s32.totalorder %s19, 1
    %p84 = scmp.ne.s32.totalorder %s79, %s81
    %p85 = scmp.eq.s32.totalorder %s19, 0
    %p86 = por %p84, %p85
    %p87 = scmp.ne.s32.totalorder %s79, %s81
    %p88 = scmp.eq.s32.totalorder %s24, 1
    %p89 = por %p87, %p88
    %p90 = scmp.ne.s32.totalorder %s81, %s82
    %p91 = scmp.eq.s32.totalorder %s24, 0
    %p92 = por %p90, %p91
    %p93 = scmp.ne.s32.totalorder %s81, %s82
    %p94 = scmp.eq.s32.totalorder %s25, 1
    %p95 = por %p93, %p94
    %p97 = scmp.ne.s32.totalorder %s82, %s96
    %p98 = scmp.eq.s32.totalorder %s25, 0
    %p99 = por %p97, %p98
    %s101 = sadd.s32 %s100, 1
    %p104 = scmp.eq.s32.totalorder %s19, 1
    %p105 = scmp.ne.s32.totalorder %s100, %s102
    %p106 = scmp.eq.s32.totalorder %s19, 0
    %p107 = por %p105, %p106
    %p108 = scmp.ne.s32.totalorder %s100, %s102
    %p109 = scmp.eq.s32.totalorder %s24, 1
    %p110 = por %p108, %p109
    %p111 = scmp.ne.s32.totalorder %s102, %s103
    %p112 = scmp.eq.s32.totalorder %s24, 0
    %p113 = por %p111, %p112
    %p114 = scmp.ne.s32.totalorder %s102, %s103
    %p115 = scmp.eq.s32.totalorder %s25, 1
    %p116 = por %p114, %p115
    %p118 = scmp.ne.s32.totalorder %s103, %s117
    %p119 = scmp.eq.s32.totalorder %s25, 0
    %p120 = por %p118, %p119
    %s122 = sadd.s32 %s121, 1
    %p125 = scmp.eq.s32.totalorder %s19, 1
    %p126 = scmp.ne.s32.totalorder %s121, %s123
    %p127 = scmp.eq.s32.totalorder %s19, 0
    %p128 = por %p126, %p127
    %p129 = scmp.ne.s32.totalorder %s121, %s123
    %p130 = scmp.eq.s32.totalorder %s24, 1
    %p131 = por %p129, %p130
    %p132 = scmp.ne.s32.totalorder %s123, %s124
    %p133 = scmp.eq.s32.totalorder %s24, 0
    %p134 = por %p132, %p133
    %p135 = scmp.ne.s32.totalorder %s123, %s124
    %p136 = scmp.eq.s32.totalorder %s25, 1
    %p137 = por %p135, %p136
    %p139 = scmp.ne.s32.totalorder %s124, %s138
    %p140 = scmp.eq.s32.totalorder %s25, 0
    %p141 = por %p139, %p140
    %s143 = sadd.s32 %s142, 1
    %p146 = scmp.eq.s32.totalorder %s19, 1
    %p147 = scmp.ne.s32.totalorder %s142, %s144
    %p148 = scmp.eq.s32.totalorder %s19, 0
    %p149 = por %p147, %p148
    %p150 = scmp.ne.s32.totalorder %s142, %s144
    %p151 = scmp.eq.s32.totalorder %s24, 1
    %p152 = por %p150, %p151
    %p153 = scmp.ne.s32.totalorder %s144, %s145
    %p154 = scmp.eq.s32.totalorder %s24, 0
    %p155 = por %p153, %p154
    %p156 = scmp.ne.s32.totalorder %s144, %s145
    %p157 = scmp.eq.s32.totalorder %s25, 1
    %p158 = por %p156, %p157
    %p160 = scmp.ne.s32.totalorder %s145, %s159
    %p161 = scmp.eq.s32.totalorder %s25, 0
    %p162 = por %p160, %p161
    %s164 = sadd.s32 %s163, 1
    %p167 = scmp.eq.s32.totalorder %s19, 1
    %p168 = scmp.ne.s32.totalorder %s163, %s165
    %p169 = scmp.eq.s32.totalorder %s19, 0
    %p170 = por %p168, %p169
    %p171 = scmp.ne.s32.totalorder %s163, %s165
    %p172 = scmp.eq.s32.totalorder %s24, 1
    %p173 = por %p171, %p172
    %p174 = scmp.ne.s32.totalorder %s165, %s166
    %p175 = scmp.eq.s32.totalorder %s24, 0
    %p176 = por %p174, %p175
    %p177 = scmp.ne.s32.totalorder %s165, %s166
    %p178 = scmp.eq.s32.totalorder %s25, 1
    %p179 = por %p177, %p178
    %p181 = scmp.ne.s32.totalorder %s166, %s180
    %p182 = scmp.eq.s32.totalorder %s25, 0
    %p183 = por %p181, %p182
    %s185 = sadd.s32 %s184, 1
    %p188 = scmp.eq.s32.totalorder %s19, 1
    %p189 = scmp.ne.s32.totalorder %s184, %s186
    %p190 = scmp.eq.s32.totalorder %s19, 0
    %p191 = por %p189, %p190
    %p192 = scmp.ne.s32.totalorder %s184, %s186
    %p193 = scmp.eq.s32.totalorder %s24, 1
    %p194 = por %p192, %p193
    %p195 = scmp.ne.s32.totalorder %s186, %s187
    %p196 = scmp.eq.s32.totalorder %s24, 0
    %p197 = por %p195, %p196
    %p198 = scmp.ne.s32.totalorder %s186, %s187
    %p199 = scmp.eq.s32.totalorder %s25, 1
    %p200 = por %p198, %p199
    %p202 = scmp.ne.s32.totalorder %s187, %s201
    %p203 = scmp.eq.s32.totalorder %s25, 0
    %p204 = por %p202, %p203
    %s206 = sadd.s32 %s205, 1
    %p209 = scmp.eq.s32.totalorder %s19, 1
    %p210 = scmp.ne.s32.totalorder %s205, %s207
    %p211 = scmp.eq.s32.totalorder %s19, 0
    %p212 = por %p210, %p211
    %p213 = scmp.ne.s32.totalorder %s205, %s207
    %p214 = scmp.eq.s32.totalorder %s24, 1
    %p215 = por %p213, %p214
    %p216 = scmp.ne.s32.totalorder %s207, %s208
    %p217 = scmp.eq.s32.totalorder %s24, 0
    %p218 = por %p216, %p217
    %p219 = scmp.ne.s32.totalorder %s207, %s208
    %p220 = scmp.eq.s32.totalorder %s25, 1
    %p221 = por %p219, %p220
    %p223 = scmp.ne.s32.totalorder %s208, %s222
    %p224 = scmp.eq.s32.totalorder %s25, 0
    %p225 = por %p223, %p224
    %s227 = sadd.s32 %s226, 1
    %p230 = scmp.eq.s32.totalorder %s19, 1
    %p231 = scmp.ne.s32.totalorder %s226, %s228
    %p232 = scmp.eq.s32.totalorder %s19, 0
    %p233 = por %p231, %p232
    %p234 = scmp.ne.s32.totalorder %s226, %s228
    %p235 = scmp.eq.s32.totalorder %s24, 1
    %p236 = por %p234, %p235
    %p237 = scmp.ne.s32.totalorder %s228, %s229
    %p238 = scmp.eq.s32.totalorder %s24, 0
    %p239 = por %p237, %p238
    %p240 = scmp.ne.s32.totalorder %s228, %s229
    %p241 = scmp.eq.s32.totalorder %s25, 1
    %p242 = por %p240, %p241
    %p244 = scmp.ne.s32.totalorder %s229, %s243
    %p245 = scmp.eq.s32.totalorder %s25, 0
    %p246 = por %p244, %p245
    %s248 = sadd.s32 %s247, 1
    %p251 = scmp.eq.s32.totalorder %s19, 1
    %p252 = scmp.ne.s32.totalorder %s247, %s249
    %p253 = scmp.eq.s32.totalorder %s19, 0
    %p254 = por %p252, %p253
    %p255 = scmp.ne.s32.totalorder %s247, %s249
    %p256 = scmp.eq.s32.totalorder %s24, 1
    %p257 = por %p255, %p256
    %p258 = scmp.ne.s32.totalorder %s249, %s250
    %p259 = scmp.eq.s32.totalorder %s24, 0
    %p260 = por %p258, %p259
    %p261 = scmp.ne.s32.totalorder %s249, %s250
    %p262 = scmp.eq.s32.totalorder %s25, 1
    %p263 = por %p261, %p262
    %p265 = scmp.ne.s32.totalorder %s250, %s264
    %p266 = scmp.eq.s32.totalorder %s25, 0
    %p267 = por %p265, %p266
    %s269 = sadd.s32 %s268, 1
    %p272 = scmp.eq.s32.totalorder %s19, 1
    %p273 = scmp.ne.s32.totalorder %s268, %s270
    %p274 = scmp.eq.s32.totalorder %s19, 0
    %p275 = por %p273, %p274
    %p276 = scmp.ne.s32.totalorder %s268, %s270
    %p277 = scmp.eq.s32.totalorder %s24, 1
    %p278 = por %p276, %p277
    %p279 = scmp.ne.s32.totalorder %s270, %s271
    %p280 = scmp.eq.s32.totalorder %s24, 0
    %p281 = por %p279, %p280
    %p282 = scmp.ne.s32.totalorder %s270, %s271
    %p283 = scmp.eq.s32.totalorder %s25, 1
    %p284 = por %p282, %p283
    %p286 = scmp.ne.s32.totalorder %s271, %s285
    %p287 = scmp.eq.s32.totalorder %s25, 0
    %p288 = por %p286, %p287
    %s290 = sadd.s32 %s289, 1
    %p293 = scmp.eq.s32.totalorder %s19, 1
    %p294 = scmp.ne.s32.totalorder %s289, %s291
    %p295 = scmp.eq.s32.totalorder %s19, 0
    %p296 = por %p294, %p295
    %p297 = scmp.ne.s32.totalorder %s289, %s291
    %p298 = scmp.eq.s32.totalorder %s24, 1
    %p299 = por %p297, %p298
    %p300 = scmp.ne.s32.totalorder %s291, %s292
    %p301 = scmp.eq.s32.totalorder %s24, 0
    %p302 = por %p300, %p301
    %p303 = scmp.ne.s32.totalorder %s291, %s292
    %p304 = scmp.eq.s32.totalorder %s25, 1
    %p305 = por %p303, %p304
    %p307 = scmp.ne.s32.totalorder %s292, %s306
    %p308 = scmp.eq.s32.totalorder %s25, 0
    %p309 = por %p307, %p308
    %s310 = ssub.s32 %s19, %s26
    %p311 = scmp.eq.s32.totalorder %s310, 0
    %s313 = sadd.s32 %s312, 1
    %s314 = scalar_select %p311, %s312, %s313
    %p317 = pneg %p311
    %p318 = scmp.eq.s32.totalorder %s19, 1
    %p319 = por %p317, %p318
    %p320 = scmp.ne.s32.totalorder %s312, %s315
    %p321 = scmp.eq.s32.totalorder %s19, 0
    %p322 = por %p320, %p321
    %p323 = scmp.ne.s32.totalorder %s312, %s315
    %p324 = scmp.eq.s32.totalorder %s24, 1
    %p325 = por %p323, %p324
    %p326 = scmp.ne.s32.totalorder %s315, %s316
    %p327 = scmp.eq.s32.totalorder %s24, 0
    %p328 = por %p326, %p327
    %p329 = scmp.ne.s32.totalorder %s315, %s316
    %p330 = scmp.eq.s32.totalorder %s25, 1
    %p331 = por %p329, %p330
    %p333 = scmp.ne.s32.totalorder %s316, %s332
    %p334 = scmp.eq.s32.totalorder %s25, 0
    %p335 = por %p333, %p334
    %p336 = scmp.le.s32.totalorder 1, %s19
    %p337 = scmp.lt.s32.totalorder %s19, 3
    %p338 = pnand %p336, %p337
    %p339 = pneg %p338
    // Predicated region
    $region9: #{speech_unit_forward.1} parent=5 // pred_check
      _
    $region10: #{speech_unit_forward.1} parent=5 // pred_check_branch
      %341 = sbr.rel (%p338) target = $region12
    $region11: #{speech_unit_forward.1} parent=5 // pred_region
      %s342 = ssub.s32 %s19, 1
      // Predicated region
      $region13: #{speech_unit_forward.1} parent=11 // pred_check
        %p343 = pneg %p92
      $region14: #{speech_unit_forward.1} parent=11 // pred_check_branch
        %345 = sbr.rel (%p343) target = $region16
      $region15: #{speech_unit_forward.1} parent=11 // pred_region
        _
      $region16: #{speech_unit_forward.1} parent=11 // pred_fallthru
        _
      // Predicated region
      $region17: #{speech_unit_forward.1} parent=11 // pred_check
        %p346 = pneg %p113
      $region18: #{speech_unit_forward.1} parent=11 // pred_check_branch
        %348 = sbr.rel (%p346) target = $region20
      $region19: #{speech_unit_forward.1} parent=11 // pred_region
        _
      $region20: #{speech_unit_forward.1} parent=11 // pred_fallthru
        _
      // Predicated region
      $region21: #{speech_unit_forward.1} parent=11 // pred_check
        %p349 = pneg %p134
      $region22: #{speech_unit_forward.1} parent=11 // pred_check_branch
        %351 = sbr.rel (%p349) target = $region24
      $region23: #{speech_unit_forward.1} parent=11 // pred_region
        _
      $region24: #{speech_unit_forward.1} parent=11 // pred_fallthru
        _
      // Predicated region
      $region25: #{speech_unit_forward.1} parent=11 // pred_check
        %p352 = pneg %p155
      $region26: #{speech_unit_forward.1} parent=11 // pred_check_branch
        %354 = sbr.rel (%p352) target = $region28
      $region27: #{speech_unit_forward.1} parent=11 // pred_region
        _
      $region28: #{speech_unit_forward.1} parent=11 // pred_fallthru
        _
      // Predicated region
      $region29: #{speech_unit_forward.1} parent=11 // pred_check
        %p355 = pneg %p176
      $region30: #{speech_unit_forward.1} parent=11 // pred_check_branch
        %357 = sbr.rel (%p355) target = $region32
      $region31: #{speech_unit_forward.1} parent=11 // pred_region
        _
      $region32: #{speech_unit_forward.1} parent=11 // pred_fallthru
        _
      // Predicated region
      $region33: #{speech_unit_forward.1} parent=11 // pred_check
        %p358 = pneg %p197
      $region34: #{speech_unit_forward.1} parent=11 // pred_check_branch
        %360 = sbr.rel (%p358) target = $region36
      $region35: #{speech_unit_forward.1} parent=11 // pred_region
        _
      $region36: #{speech_unit_forward.1} parent=11 // pred_fallthru
        _
      // Predicated region
      $region37: #{speech_unit_forward.1} parent=11 // pred_check
        %p361 = pneg %p218
      $region38: #{speech_unit_forward.1} parent=11 // pred_check_branch
        %363 = sbr.rel (%p361) target = $region40
      $region39: #{speech_unit_forward.1} parent=11 // pred_region
        _
      $region40: #{speech_unit_forward.1} parent=11 // pred_fallthru
        _
      // Predicated region
      $region41: #{speech_unit_forward.1} parent=11 // pred_check
        %p364 = pneg %p239
      $region42: #{speech_unit_forward.1} parent=11 // pred_check_branch
        %366 = sbr.rel (%p364) target = $region44
      $region43: #{speech_unit_forward.1} parent=11 // pred_region
        _
      $region44: #{speech_unit_forward.1} parent=11 // pred_fallthru
        _
      // Predicated region
      $region45: #{speech_unit_forward.1} parent=11 // pred_check
        %p367 = pneg %p260
      $region46: #{speech_unit_forward.1} parent=11 // pred_check_branch
        %369 = sbr.rel (%p367) target = $region48
      $region47: #{speech_unit_forward.1} parent=11 // pred_region
        _
      $region48: #{speech_unit_forward.1} parent=11 // pred_fallthru
        _
      // Predicated region
      $region49: #{speech_unit_forward.1} parent=11 // pred_check
        %p370 = pneg %p281
      $region50: #{speech_unit_forward.1} parent=11 // pred_check_branch
        %372 = sbr.rel (%p370) target = $region52
      $region51: #{speech_unit_forward.1} parent=11 // pred_region
        _
      $region52: #{speech_unit_forward.1} parent=11 // pred_fallthru
        _
      // Predicated region
      $region53: #{speech_unit_forward.1} parent=11 // pred_check
        %p373 = pneg %p302
      $region54: #{speech_unit_forward.1} parent=11 // pred_check_branch
        %375 = sbr.rel (%p373) target = $region56
      $region55: #{speech_unit_forward.1} parent=11 // pred_region
        _
      $region56: #{speech_unit_forward.1} parent=11 // pred_fallthru
        _
    $region12: #{speech_unit_forward.1} parent=5 // pred_fallthru
      _
    %p376 = scmp.lt.s32.totalorder %s19, 2
    // Predicated region
    $region57: #{speech_unit_forward.1} parent=5 // pred_check
      %p377 = pneg %p376
    $region58: #{speech_unit_forward.1} parent=5 // pred_check_branch
      %379 = sbr.rel (%p377) target = $region60
    $region59: #{speech_unit_forward.1} parent=5 // pred_region
      // Predicated region
      $region61: #{speech_unit_forward.1} parent=59 // pred_check
        %p380 = pneg %p39
      $region62: #{speech_unit_forward.1} parent=59 // pred_check_branch
        %382 = sbr.rel (%p380) target = $region64
      $region63: #{speech_unit_forward.1} parent=59 // pred_region
        %p383 = scmp.lt.s32.totalorder %s19, 1
        %s384 = scalar_select %p383, %s19, 1
        %s385 = smul.addr %s384, 8
        %s386 = scalar_lea.vmem %s0, %s385
      $region64: #{speech_unit_forward.1} parent=59 // pred_fallthru
        _
      // Predicated region
      $region65: #{speech_unit_forward.1} parent=59 // pred_check
        %p387 = pneg %p65
      $region66: #{speech_unit_forward.1} parent=59 // pred_check_branch
        %389 = sbr.rel (%p387) target = $region68
      $region67: #{speech_unit_forward.1} parent=59 // pred_region
        %p390 = scmp.lt.s32.totalorder %s19, 1
        %s391 = scalar_select %p390, %s19, 1
        %s392 = scalar_lea.vmem %s1, %s391
      $region68: #{speech_unit_forward.1} parent=59 // pred_fallthru
        _
    $region60: #{speech_unit_forward.1} parent=5 // pred_fallthru
      _
    %p393 = scmp.le.s32.totalorder 1, %s19
    %p394 = scmp.lt.s32.totalorder %s19, 3
    %p395 = pnand %p393, %p394
    %p396 = pneg %p395
    // Predicated region
    $region69: #{speech_unit_forward.1} parent=5 // pred_check
      _
    $region70: #{speech_unit_forward.1} parent=5 // pred_check_branch
      %398 = sbr.rel (%p395) target = $region72
    $region71: #{speech_unit_forward.1} parent=5 // pred_region
      %s399 = ssub.s32 %s19, 1
      %p400 = scmp.lt.s32.totalorder %s24, 1
      %s401 = scalar_select %p400, %s24, 1
      %s402 = smul.addr %s401, 8
      %s403 = scalar_lea.vmem %s0, %s402
      %p404 = pneg %p45
      %p405 = pneg %p42
      %p406 = scmp.lt.s32.totalorder %s24, 1
      %s407 = scalar_select %p406, %s24, 1
      %s408 = scalar_lea.vmem %s1, %s407
      %p409 = pneg %p71
      %p410 = pneg %p68
      %p411 = pneg %p92
      %p412 = pneg %p89
      %p413 = pneg %p113
      %p414 = pneg %p110
      %p415 = pneg %p134
      %p416 = pneg %p131
      %p417 = pneg %p155
      %p418 = pneg %p152
      %p419 = pneg %p176
      %p420 = pneg %p173
      %p421 = pneg %p197
      %p422 = pneg %p194
      %p423 = pneg %p218
      %p424 = pneg %p215
      %p425 = pneg %p239
      %p426 = pneg %p236
      %p427 = pneg %p260
      %p428 = pneg %p257
      %p429 = pneg %p281
      %p430 = pneg %p278
      %p431 = pneg %p302
      %p432 = pneg %p299
      %p433 = pneg %p328
      %p434 = pneg %p325
      %p435 = scmp.lt.s32.totalorder %s24, 1
      %s436 = scalar_select %p435, %s24, 1
      %s437 = smul.addr %s436, 4
      %s438 = smul.addr %s437, 8
      %s439 = scalar_lea.vmem %s13, %s438
      %p440 = scmp.lt.s32.totalorder %s24, 1
      %s441 = scalar_select %p440, %s24, 1
      %s442 = smul.addr %s441, 8
      %s443 = scalar_lea.vmem %s0, %s442
      %p444 = scmp.lt.s32.totalorder %s24, 1
      %s445 = scalar_select %p444, %s24, 1
      %s446 = scalar_lea.vmem %s1, %s445
      %p447 = scmp.lt.s32.totalorder %s24, 1
      %s448 = scalar_select %p447, %s24, 1
      %s449 = smul.addr %s448, 4
      %s450 = smul.addr %s449, 8
      %s451 = scalar_lea.vmem %s13, %s450
      %v453 = vld [vmem:[%s443] sm:$0xff]
      %v454 = vld [vmem:[%s446] sm:$0x1]
      %v455 = vld [vmem:[%s2] sm:$0xff]
      %v456 = vld [vmem:[%s2 + $0x8] sm:$0xff]
      %v457 = vld [vmem:[%s3] sm:$0xff]
      %v458 = vld [vmem:[%s3 + $0x8] sm:$0xff]
      %v459 = vld [vmem:[%s4] sm:$0x1]
      %v460 = vmul.f32 %v453, %v453
      %461 = vadd.xlane.f32.xlu0 %v460
      %v462 = vpop.xlane.xlu0 %461
      %v463 = vrcp.pop 128.0
      %v464 = vmul.f32 %v462, %v463
      %v465 = vadd.f32 %v464, 1e-05
      %v466 = vrsqrt.pop %v465
      %v467 = vmul.f32 %v453, %v466
      %v469 = vlaneseq
      %v470 = vshrl.u32 %v469, 7
      %v471 = vsub.s32 0, %v470
      %v472 = vrot.slane %v459, %v471
      %v474 = vmul.f32 %v467, %v472
      %v475 = vpack.c.bf16 %v474, %v474
      %v476 = vld [vmem:[%s6] sm:$0xff]
      %v477 = vld [vmem:[%s6 + $0x8] sm:$0xff]
      %v478 = vld [vmem:[%s6 + $0x10] sm:$0xff]
      %v479 = vld [vmem:[%s6 + $0x18] sm:$0xff]
      %v480 = vld [vmem:[%s6 + $0x20] sm:$0xff]
      %v481 = vld [vmem:[%s6 + $0x28] sm:$0xff]
      %v482 = vld [vmem:[%s6 + $0x30] sm:$0xff]
      %v483 = vld [vmem:[%s6 + $0x38] sm:$0xff]
      %v484 = vld [vmem:[%s6 + $0x40] sm:$0xff]
      %v485 = vld [vmem:[%s6 + $0x48] sm:$0xff]
      %v486 = vld [vmem:[%s6 + $0x50] sm:$0xff]
      %v487 = vld [vmem:[%s6 + $0x58] sm:$0xff]
      %v488 = vld [vmem:[%s6 + $0x60] sm:$0xff]
      %v489 = vld [vmem:[%s6 + $0x68] sm:$0xff]
      %v490 = vld [vmem:[%s6 + $0x70] sm:$0xff]
      %v491 = vld [vmem:[%s6 + $0x78] sm:$0xff]
      %v508 = vunpack.c.l.b16 %v476
      %v509 = vunpack.c.h.b16 %v476
      %v510 = vunpack.c.l.b16 %v477
      %v511 = vunpack.c.h.b16 %v477
      %v512 = vunpack.c.l.b16 %v478
      %v513 = vunpack.c.h.b16 %v478
      %v514 = vunpack.c.l.b16 %v479
      %v515 = vunpack.c.h.b16 %v479
      %v516 = vunpack.c.l.b16 %v480
      %v517 = vunpack.c.h.b16 %v480
      %v518 = vunpack.c.l.b16 %v481
      %v519 = vunpack.c.h.b16 %v481
      %v520 = vunpack.c.l.b16 %v482
      %v521 = vunpack.c.h.b16 %v482
      %v522 = vunpack.c.l.b16 %v483
      %v523 = vunpack.c.h.b16 %v483
      %v524 = vunpack.c.l.b16 %v484
      %v525 = vunpack.c.h.b16 %v484
      %v526 = vunpack.c.l.b16 %v485
      %v527 = vunpack.c.h.b16 %v485
      %v528 = vunpack.c.l.b16 %v486
      %v529 = vunpack.c.h.b16 %v486
      %v530 = vunpack.c.l.b16 %v487
      %v531 = vunpack.c.h.b16 %v487
      %v532 = vunpack.c.l.b16 %v488
      %v533 = vunpack.c.h.b16 %v488
      %v534 = vunpack.c.l.b16 %v489
      %v535 = vunpack.c.h.b16 %v489
      %v536 = vunpack.c.l.b16 %v490
      %v537 = vunpack.c.h.b16 %v490
      %v538 = vunpack.c.l.b16 %v491
      %v539 = vunpack.c.h.b16 %v491
      %v540 = vpack.c.b16 %v510, %v508
      %v541 = vpack.c.b16 %v511, %v509
      %v542 = vpack.c.b16 %v514, %v512
      %v543 = vpack.c.b16 %v515, %v513
      %v544 = vpack.c.b16 %v518, %v516
      %v545 = vpack.c.b16 %v519, %v517
      %v546 = vpack.c.b16 %v522, %v520
      %v547 = vpack.c.b16 %v523, %v521
      %v548 = vpack.c.b16 %v526, %v524
      %v549 = vpack.c.b16 %v527, %v525
      %v550 = vpack.c.b16 %v530, %v528
      %v551 = vpack.c.b16 %v531, %v529
      %v552 = vpack.c.b16 %v534, %v532
      %v553 = vpack.c.b16 %v535, %v533
      %v554 = vpack.c.b16 %v538, %v536
      %v555 = vpack.c.b16 %v539, %v537
      %572 = vmatprep.subr.bf16.mxu0 %v541
      %573 = vmatpush1.bf16.msra.mxu0 %v540
      %574 = vmatprep.subr.bf16.mxu0 %v543
      %575 = vmatpush1.bf16.msra.mxu0 %v542
      %576 = vmatprep.subr.bf16.mxu0 %v545
      %577 = vmatpush1.bf16.msra.mxu0 %v544
      %578 = vmatprep.subr.bf16.mxu0 %v547
      %579 = vmatpush1.bf16.msra.mxu0 %v546
      %580 = vmatprep.subr.bf16.mxu0 %v549
      %581 = vmatpush1.bf16.msra.mxu0 %v548
      %582 = vmatprep.subr.bf16.mxu0 %v551
      %583 = vmatpush1.bf16.msra.mxu0 %v550
      %584 = vmatprep.subr.bf16.mxu0 %v553
      %585 = vmatpush1.bf16.msra.mxu0 %v552
      %586 = vmatprep.subr.bf16.mxu0 %v555
      %587 = vmatpush1.bf16.msra.mxu0 %v554
      %588 = vmatprep.subr.bf16.mxu0 0
      %589 = vmatpush1.bf16.msra.mxu0 0
      %590 = vmatprep.subr.bf16.mxu0 0
      %591 = vmatpush1.bf16.msra.mxu0 0
      %592 = vmatprep.subr.bf16.mxu0 0
      %593 = vmatpush1.bf16.msra.mxu0 0
      %594 = vmatprep.subr.bf16.mxu0 0
      %595 = vmatpush1.bf16.msra.mxu0 0
      %596 = vmatprep.subr.bf16.mxu0 0
      %597 = vmatpush1.bf16.msra.mxu0 0
      %598 = vmatprep.subr.bf16.mxu0 0
      %599 = vmatpush1.bf16.msra.mxu0 0
      %600 = vmatprep.subr.bf16.mxu0 0
      %601 = vmatpush1.bf16.msra.mxu0 0
      %602 = vmatprep.subr.bf16.mxu0 0
      %603 = vmatpush1.bf16.msra.mxu0 0
      %604 = vmatprep.mubr.bf16.mxu0 0
      %605 = vmatmul.mubr.bf16.gmra.mrb[0].mxu0 %v475
      %v606 = vpop.f32.mrb[0].mxu0
      %v607 = vadd.f32 0.0, %v606
      %v608 = vpop.f32.mrb[0].mxu0
      %v609 = vadd.f32 0.0, %v608
      %v610 = vpop.f32.mrb[0].mxu0
      %v611 = vpop.f32.mrb[0].mxu0
      %612 = vdwg.mxu0
      %614 = vrot.lane.b32.xlu0 %v607, 96
      %v615 = vpop.permute.xlu0 %614
      %v617 = vsub.f32 0.0, %v607
      %v618 = vsub.f32 0.0, %v615
      %621 = vrot.lane.b32.xlu0 %v617, 112
      %v622 = vpop.permute.xlu0 %621
      %623 = vrot.lane.b32.xlu0 %v618, 112
      %v624 = vpop.permute.xlu0 %623
      %627 = vrot.lane.b32.xlu0 %v607, 16
      %v628 = vpop.permute.xlu0 %627
      %629 = vrot.lane.b32.xlu0 %v615, 16
      %v630 = vpop.permute.xlu0 %629
      %vm633 = vcmask 130048
      %v634 = vsel %vm633, %v622, %v628
      %v635 = vsel %vm633, %v624, %v630
      %v636 = vmul.f32 %v607, %v455
      %v637 = vmul.f32 %v615, %v456
      %v638 = vmul.f32 %v634, %v457
      %v639 = vmul.f32 %v635, %v458
      %v640 = vadd.f32 %v636, %v638
      %v641 = vadd.f32 %v637, %v639
      %v642 = vpack.c.bf16 %v641, %v640
      %v643 = vsub.f32 0.0, %v609
      %645 = vrot.lane.b32.xlu0 %v643, 112
      %v646 = vpop.permute.xlu0 %645
      %649 = vrot.lane.b32.xlu0 %v609, 16
      %v650 = vpop.permute.xlu0 %649
      %v652 = vsel %vm633, %v646, %v650
      %v653 = vmul.f32 %v609, %v455
      %v654 = vmul.f32 %v652, %v457
      %v655 = vadd.f32 %v653, %v654
      %v656 = vpack.c.bf16 %v655, %v655
      %v657 = vpack.c.bf16 %v609, %v609
      %vm658 = vcmask 261120
      %v660 = vsel %vm658, %v642, 0
      %v663 = vsel %vm658, %v656, 0
      %665 = vmatprep.subr.bf16.mxu0 0
      %666 = vmatpush1.bf16.xpose.msra.mxu0 %v663
      %667 = vmatprep.subr.bf16.mxu0 0
      %668 = vmatpush1.bf16.xpose.msra.mxu0 0
      %669 = vmatprep.subr.bf16.mxu0 0
      %670 = vmatpush1.bf16.xpose.msra.mxu0 0
      %671 = vmatprep.subr.bf16.mxu0 0
      %672 = vmatpush1.bf16.xpose.msra.mxu0 0
      %673 = vmatprep.subr.bf16.mxu0 0
      %674 = vmatpush1.bf16.xpose.msra.mxu0 0
      %675 = vmatprep.subr.bf16.mxu0 0
      %676 = vmatpush1.bf16.xpose.msra.mxu0 0
      %677 = vmatprep.subr.bf16.mxu0 0
      %678 = vmatpush1.bf16.xpose.msra.mxu0 0
      %679 = vmatprep.subr.bf16.mxu0 0
      %680 = vmatpush1.bf16.xpose.msra.mxu0 0
      %681 = vmatprep.subr.bf16.mxu0 0
      %682 = vmatpush1.bf16.xpose.msra.mxu0 0
      %683 = vmatprep.subr.bf16.mxu0 0
      %684 = vmatpush1.bf16.xpose.msra.mxu0 0
      %685 = vmatprep.subr.bf16.mxu0 0
      %686 = vmatpush1.bf16.xpose.msra.mxu0 0
      %687 = vmatprep.subr.bf16.mxu0 0
      %688 = vmatpush1.bf16.xpose.msra.mxu0 0
      %689 = vmatprep.subr.bf16.mxu0 0
      %690 = vmatpush1.bf16.xpose.msra.mxu0 0
      %691 = vmatprep.subr.bf16.mxu0 0
      %692 = vmatpush1.bf16.xpose.msra.mxu0 0
      %693 = vmatprep.subr.bf16.mxu0 0
      %694 = vmatpush1.bf16.xpose.msra.mxu0 0
      %695 = vmatprep.subr.bf16.mxu0 0
      %696 = vmatpush1.bf16.xpose.msra.mxu0 0
      %697 = vmatprep.mubr.bf16.mxu0 0
      %698 = vmatmul.mubr.bf16.gmra.mrb[0].mxu0 %v660
      %v699 = vpop.f32.mrb[0].mxu0
      %v700 = vadd.f32 0.0, %v699
      %v701 = vpop.f32.mrb[0].mxu0
      %v702 = vpop.f32.mrb[0].mxu0
      %v703 = vadd.f32 0.0, %v702
      %v704 = vpop.f32.mrb[0].mxu0
      %705 = vdwg.mxu0
      %v706 = vmul.f32 %v700, 0.17677669
      %v707 = vmul.f32 %v703, 0.17677669
      %v709 = vlaneseq
      %v710 = vshrl.u32 %v709, 7
      %v711 = vsub.s32 0, %v710
      %v712 = vrot.slane %v454, %v711
      %v714 = vadd.f32 %v706, %v712
      %v715 = vadd.f32 %v707, %v712
      %vm716 = vcmask 64512
      %v717 = vsel %vm716, %v714, -inf
      %718 = vmax.xlane.f32.xlu0 %v717
      %v719 = vpop.xlane.xlu0 %718
      %v720 = vsel %vm716, %v715, -inf
      %721 = vmax.xlane.f32.xlu0 %v720
      %v722 = vpop.xlane.xlu0 %721
      %v723 = vsub.f32 %v714, %v719
      %v724 = vsub.f32 %v715, %v722
      %v725 = vmul.f32 %v723, 1.442695
      %v726 = vpow.pop %v725
      %v727 = vmul.f32 %v724, 1.442695
      %v728 = vpow.pop %v727
      %v729 = vsel %vm716, %v726, 0.0
      %730 = vadd.xlane.f32.xlu0 %v729
      %v731 = vpop.xlane.xlu0 %730
      %v732 = vsel %vm716, %v728, 0.0
      %733 = vadd.xlane.f32.xlu0 %v732
      %v734 = vpop.xlane.xlu0 %733
      %v735 = vrcp.pop %v731
      %v736 = vmul.f32 %v726, %v735
      %v737 = vrcp.pop %v734
      %v738 = vmul.f32 %v728, %v737
      %v739 = vpack.c.bf16 %v738, %v736
      %741 = vrot.lane.b32.xlu0 %v657, 64
      %v742 = vpop.permute.xlu0 %741
      %v744 = vsel %vm716, %v739, 0
      %vm746 = vcmask 1043456
      %v748 = vsel %vm746, %v742, 0
      %750 = vmatprep.subr.bf16.mxu0 0
      %751 = vmatpush1.bf16.msra.mxu0 %v748
      %752 = vmatprep.subr.bf16.mxu0 0
      %753 = vmatpush1.bf16.msra.mxu0 0
      %754 = vmatprep.subr.bf16.mxu0 0
      %755 = vmatpush1.bf16.msra.mxu0 0
      %756 = vmatprep.subr.bf16.mxu0 0
      %757 = vmatpush1.bf16.msra.mxu0 0
      %758 = vmatprep.subr.bf16.mxu0 0
      %759 = vmatpush1.bf16.msra.mxu0 0
      %760 = vmatprep.subr.bf16.mxu0 0
      %761 = vmatpush1.bf16.msra.mxu0 0
      %762 = vmatprep.subr.bf16.mxu0 0
      %763 = vmatpush1.bf16.msra.mxu0 0
      %764 = vmatprep.subr.bf16.mxu0 0
      %765 = vmatpush1.bf16.msra.mxu0 0
      %766 = vmatprep.subr.bf16.mxu0 0
      %767 = vmatpush1.bf16.msra.mxu0 0
      %768 = vmatprep.subr.bf16.mxu0 0
      %769 = vmatpush1.bf16.msra.mxu0 0
      %770 = vmatprep.subr.bf16.mxu0 0
      %771 = vmatpush1.bf16.msra.mxu0 0
      %772 = vmatprep.subr.bf16.mxu0 0
      %773 = vmatpush1.bf16.msra.mxu0 0
      %774 = vmatprep.subr.bf16.mxu0 0
      %775 = vmatpush1.bf16.msra.mxu0 0
      %776 = vmatprep.subr.bf16.mxu0 0
      %777 = vmatpush1.bf16.msra.mxu0 0
      %778 = vmatprep.subr.bf16.mxu0 0
      %779 = vmatpush1.bf16.msra.mxu0 0
      %780 = vmatprep.subr.bf16.mxu0 0
      %781 = vmatpush1.bf16.msra.mxu0 0
      %782 = vmatprep.mubr.bf16.mxu0 0
      %783 = vmatmul.mubr.bf16.gmra.mrb[0].mxu0 %v744
      %v784 = vpop.f32.mrb[0].mxu0
      %v785 = vadd.f32 0.0, %v784
      %v786 = vpop.f32.mrb[0].mxu0
      %v787 = vpop.f32.mrb[0].mxu0
      %v788 = vadd.f32 0.0, %v787
      %v789 = vpop.f32.mrb[0].mxu0
      %790 = vdwg.mxu0
      %791 = vst.msk [vmem:[#allocation2] sm:$0xff] %vm658, %v785
      %793 = vrot.lane.b32.xlu0 %v788, 32
      %v794 = vpop.permute.xlu0 %793
      %vm796 = vcmask 523520
      %797 = vst.msk [vmem:[#allocation2] sm:$0xff] %vm796, %v794
      %798 = vrot.lane.b32.xlu0 %v617, 48
      %v799 = vpop.permute.xlu0 %798
      %800 = vrot.lane.b32.xlu0 %v618, 48
      %v801 = vpop.permute.xlu0 %800
      %804 = vrot.lane.b32.xlu0 %v607, 80
      %v805 = vpop.permute.xlu0 %804
      %806 = vrot.lane.b32.xlu0 %v615, 80
      %v807 = vpop.permute.xlu0 %806
      %v810 = vsel %vm633, %v799, %v805
      %v811 = vsel %vm633, %v801, %v807
      %814 = vrot.lane.b32.xlu0 %v455, 64
      %v815 = vpop.permute.xlu0 %814
      %816 = vrot.lane.b32.xlu0 %v456, 64
      %v817 = vpop.permute.xlu0 %816
      %v820 = vmul.f32 %v607, %v815
      %v821 = vmul.f32 %v615, %v817
      %v822 = vmul.f32 %v810, %v457
      %v823 = vmul.f32 %v811, %v458
      %826 = vrot.lane.b32.xlu0 %v822, 64
      %v827 = vpop.permute.xlu0 %826
      %828 = vrot.lane.b32.xlu0 %v823, 64
      %v829 = vpop.permute.xlu0 %828
      %v832 = vadd.f32 %v820, %v827
      %v833 = vadd.f32 %v821, %v829
      %v834 = vpack.c.bf16 %v833, %v832
      %835 = vrot.lane.b32.xlu0 %v643, 80
      %v836 = vpop.permute.xlu0 %835
      %838 = vrot.lane.b32.xlu0 %v609, 112
      %v839 = vpop.permute.xlu0 %838
      %v841 = vsel %vm633, %v836, %v839
      %842 = vrot.lane.b32.xlu0 %v455, 32
      %v843 = vpop.permute.xlu0 %842
      %v845 = vmul.f32 %v609, %v843
      %v846 = vmul.f32 %v841, %v457
      %848 = vrot.lane.b32.xlu0 %v846, 32
      %v849 = vpop.permute.xlu0 %848
      %v851 = vadd.f32 %v845, %v849
      %v852 = vpack.c.bf16 %v851, %v851
      %854 = vrot.lane.b32.xlu0 %v834, 64
      %v855 = vpop.permute.xlu0 %854
      %857 = vrot.lane.b32.xlu0 %v852, 96
      %v858 = vpop.permute.xlu0 %857
      %v860 = vsel %vm658, %v855, 0
      %v863 = vsel %vm658, %v858, 0
      %865 = vmatprep.subr.bf16.mxu0 0
      %866 = vmatpush1.bf16.xpose.msra.mxu0 %v863
      %867 = vmatprep.subr.bf16.mxu0 0
      %868 = vmatpush1.bf16.xpose.msra.mxu0 0
      %869 = vmatprep.subr.bf16.mxu0 0
      %870 = vmatpush1.bf16.xpose.msra.mxu0 0
      %871 = vmatprep.subr.bf16.mxu0 0
      %872 = vmatpush1.bf16.xpose.msra.mxu0 0
      %873 = vmatprep.subr.bf16.mxu0 0
      %874 = vmatpush1.bf16.xpose.msra.mxu0 0
      %875 = vmatprep.subr.bf16.mxu0 0
      %876 = vmatpush1.bf16.xpose.msra.mxu0 0
      %877 = vmatprep.subr.bf16.mxu0 0
      %878 = vmatpush1.bf16.xpose.msra.mxu0 0
      %879 = vmatprep.subr.bf16.mxu0 0
      %880 = vmatpush1.bf16.xpose.msra.mxu0 0
      %881 = vmatprep.subr.bf16.mxu0 0
      %882 = vmatpush1.bf16.xpose.msra.mxu0 0
      %883 = vmatprep.subr.bf16.mxu0 0
      %884 = vmatpush1.bf16.xpose.msra.mxu0 0
      %885 = vmatprep.subr.bf16.mxu0 0
      %886 = vmatpush1.bf16.xpose.msra.mxu0 0
      %887 = vmatprep.subr.bf16.mxu0 0
      %888 = vmatpush1.bf16.xpose.msra.mxu0 0
      %889 = vmatprep.subr.bf16.mxu0 0
      %890 = vmatpush1.bf16.xpose.msra.mxu0 0
      %891 = vmatprep.subr.bf16.mxu0 0
      %892 = vmatpush1.bf16.xpose.msra.mxu0 0
      %893 = vmatprep.subr.bf16.mxu0 0
      %894 = vmatpush1.bf16.xpose.msra.mxu0 0
      %895 = vmatprep.subr.bf16.mxu0 0
      %896 = vmatpush1.bf16.xpose.msra.mxu0 0
      %897 = vmatprep.mubr.bf16.mxu0 0
      %898 = vmatmul.mubr.bf16.gmra.mrb[0].mxu0 %v860
      %v899 = vpop.f32.mrb[0].mxu0
      %v900 = vadd.f32 0.0, %v899
      %v901 = vpop.f32.mrb[0].mxu0
      %v902 = vpop.f32.mrb[0].mxu0
      %v903 = vadd.f32 0.0, %v902
      %v904 = vpop.f32.mrb[0].mxu0
      %905 = vdwg.mxu0
      %v906 = vmul.f32 %v900, 0.17677669
      %v907 = vmul.f32 %v903, 0.17677669
      %v908 = vadd.f32 %v906, %v712
      %v909 = vadd.f32 %v907, %v712
      %v910 = vsel %vm716, %v908, -inf
      %911 = vmax.xlane.f32.xlu0 %v910
      %v912 = vpop.xlane.xlu0 %911
      %v913 = vsel %vm716, %v909, -inf
      %914 = vmax.xlane.f32.xlu0 %v913
      %v915 = vpop.xlane.xlu0 %914
      %v916 = vsub.f32 %v908, %v912
      %v917 = vsub.f32 %v909, %v915
      %v918 = vmul.f32 %v916, 1.442695
      %v919 = vpow.pop %v918
      %v920 = vmul.f32 %v917, 1.442695
      %v921 = vpow.pop %v920
      %v922 = vsel %vm716, %v919, 0.0
      %923 = vadd.xlane.f32.xlu0 %v922
      %v924 = vpop.xlane.xlu0 %923
      %v925 = vsel %vm716, %v921, 0.0
      %926 = vadd.xlane.f32.xlu0 %v925
      %v927 = vpop.xlane.xlu0 %926
      %v928 = vrcp.pop %v924
      %v929 = vmul.f32 %v919, %v928
      %v930 = vrcp.pop %v927
      %v931 = vmul.f32 %v921, %v930
      %v932 = vpack.c.bf16 %v931, %v929
      %933 = vrot.lane.b32.xlu0 %v657, 32
      %v934 = vpop.permute.xlu0 %933
      %v936 = vsel %vm716, %v932, 0
      %v939 = vsel %vm746, %v934, 0
      %941 = vmatprep.subr.bf16.mxu0 0
      %942 = vmatpush1.bf16.msra.mxu0 %v939
      %943 = vmatprep.subr.bf16.mxu0 0
      %944 = vmatpush1.bf16.msra.mxu0 0
      %945 = vmatprep.subr.bf16.mxu0 0
      %946 = vmatpush1.bf16.msra.mxu0 0
      %947 = vmatprep.subr.bf16.mxu0 0
      %948 = vmatpush1.bf16.msra.mxu0 0
      %949 = vmatprep.subr.bf16.mxu0 0
      %950 = vmatpush1.bf16.msra.mxu0 0
      %951 = vmatprep.subr.bf16.mxu0 0
      %952 = vmatpush1.bf16.msra.mxu0 0
      %953 = vmatprep.subr.bf16.mxu0 0
      %954 = vmatpush1.bf16.msra.mxu0 0
      %955 = vmatprep.subr.bf16.mxu0 0
      %956 = vmatpush1.bf16.msra.mxu0 0
      %957 = vmatprep.subr.bf16.mxu0 0
      %958 = vmatpush1.bf16.msra.mxu0 0
      %959 = vmatprep.subr.bf16.mxu0 0
      %960 = vmatpush1.bf16.msra.mxu0 0
      %961 = vmatprep.subr.bf16.mxu0 0
      %962 = vmatpush1.bf16.msra.mxu0 0
      %963 = vmatprep.subr.bf16.mxu0 0
      %964 = vmatpush1.bf16.msra.mxu0 0
      %965 = vmatprep.subr.bf16.mxu0 0
      %966 = vmatpush1.bf16.msra.mxu0 0
      %967 = vmatprep.subr.bf16.mxu0 0
      %968 = vmatpush1.bf16.msra.mxu0 0
      %969 = vmatprep.subr.bf16.mxu0 0
      %970 = vmatpush1.bf16.msra.mxu0 0
      %971 = vmatprep.subr.bf16.mxu0 0
      %972 = vmatpush1.bf16.msra.mxu0 0
      %973 = vmatprep.mubr.bf16.mxu0 0
      %974 = vmatmul.mubr.bf16.gmra.mrb[0].mxu0 %v936
      %v975 = vpop.f32.mrb[0].mxu0
      %v976 = vadd.f32 0.0, %v975
      %v977 = vpop.f32.mrb[0].mxu0
      %v978 = vpop.f32.mrb[0].mxu0
      %v979 = vadd.f32 0.0, %v978
      %v980 = vpop.f32.mrb[0].mxu0
      %981 = vdwg.mxu0
      %983 = vrot.lane.b32.xlu0 %v976, 64
      %v984 = vpop.permute.xlu0 %983
      %vm986 = vcmask 785920
      %987 = vst.msk [vmem:[#allocation2] sm:$0xff] %vm986, %v984
      %989 = vrot.lane.b32.xlu0 %v979, 96
      %v990 = vpop.permute.xlu0 %989
      %vm992 = vcmask 1048320
      %993 = vst.msk [vmem:[#allocation2] sm:$0xff] %vm992, %v990
      %v994 = vld [vmem:[#allocation2] sm:$0xff]
      %v995 = vpack.c.bf16 %v994, %v994
      %v996 = vld [vmem:[%s7] sm:$0xf]
      %v997 = vld [vmem:[%s7 + $0x4] sm:$0xf]
      %v998 = vld [vmem:[%s7 + $0x8] sm:$0xf]
      %v999 = vld [vmem:[%s7 + $0xc] sm:$0xf]
      %v1000 = vld [vmem:[%s7 + $0x10] sm:$0xf]
      %v1001 = vld [vmem:[%s7 + $0x14] sm:$0xf]
      %v1002 = vld [vmem:[%s7 + $0x18] sm:$0xf]
      %v1003 = vld [vmem:[%s7 + $0x1c] sm:$0xf]
      %v1004 = vld [vmem:[%s7 + $0x20] sm:$0xf]
      %v1005 = vld [vmem:[%s7 + $0x24] sm:$0xf]
      %v1006 = vld [vmem:[%s7 + $0x28] sm:$0xf]
      %v1007 = vld [vmem:[%s7 + $0x2c] sm:$0xf]
      %v1008 = vld [vmem:[%s7 + $0x30] sm:$0xf]
      %v1009 = vld [vmem:[%s7 + $0x34] sm:$0xf]
      %v1010 = vld [vmem:[%s7 + $0x38] sm:$0xf]
      %v1011 = vld [vmem:[%s7 + $0x3c] sm:$0xf]
      %v1028 = vunpack.c.l.b16 %v996
      %v1029 = vunpack.c.l.b16 %v997
      %v1030 = vunpack.c.l.b16 %v998
      %v1031 = vunpack.c.l.b16 %v999
      %v1032 = vunpack.c.l.b16 %v1000
      %v1033 = vunpack.c.l.b16 %v1001
      %v1034 = vunpack.c.l.b16 %v1002
      %v1035 = vunpack.c.l.b16 %v1003
      %v1036 = vunpack.c.l.b16 %v1004
      %v1037 = vunpack.c.l.b16 %v1005
      %v1038 = vunpack.c.l.b16 %v1006
      %v1039 = vunpack.c.l.b16 %v1007
      %v1040 = vunpack.c.l.b16 %v1008
      %v1041 = vunpack.c.l.b16 %v1009
      %v1042 = vunpack.c.l.b16 %v1010
      %v1043 = vunpack.c.l.b16 %v1011
      %v1044 = vpack.c.b16 %v1029, %v1028
      %v1045 = vpack.c.b16 %v1031, %v1030
      %v1046 = vpack.c.b16 %v1033, %v1032
      %v1047 = vpack.c.b16 %v1035, %v1034
      %v1048 = vpack.c.b16 %v1037, %v1036
      %v1049 = vpack.c.b16 %v1039, %v1038
      %v1050 = vpack.c.b16 %v1041, %v1040
      %v1051 = vpack.c.b16 %v1043, %v1042
      %1060 = vmatprep.subr.bf16.mxu0 0
      %1061 = vmatpush1.bf16.msra.mxu0 %v1044
      %1062 = vmatprep.subr.bf16.mxu0 0
      %1063 = vmatpush1.bf16.msra.mxu0 %v1045
      %1064 = vmatprep.subr.bf16.mxu0 0
      %1065 = vmatpush1.bf16.msra.mxu0 %v1046
      %1066 = vmatprep.subr.bf16.mxu0 0
      %1067 = vmatpush1.bf16.msra.mxu0 %v1047
      %1068 = vmatprep.subr.bf16.mxu0 0
      %1069 = vmatpush1.bf16.msra.mxu0 %v1048
      %1070 = vmatprep.subr.bf16.mxu0 0
      %1071 = vmatpush1.bf16.msra.mxu0 %v1049
      %1072 = vmatprep.subr.bf16.mxu0 0
      %1073 = vmatpush1.bf16.msra.mxu0 %v1050
      %1074 = vmatprep.subr.bf16.mxu0 0
      %1075 = vmatpush1.bf16.msra.mxu0 %v1051
      %1076 = vmatprep.subr.bf16.mxu0 0
      %1077 = vmatpush1.bf16.msra.mxu0 0
      %1078 = vmatprep.subr.bf16.mxu0 0
      %1079 = vmatpush1.bf16.msra.mxu0 0
      %1080 = vmatprep.subr.bf16.mxu0 0
      %1081 = vmatpush1.bf16.msra.mxu0 0
      %1082 = vmatprep.subr.bf16.mxu0 0
      %1083 = vmatpush1.bf16.msra.mxu0 0
      %1084 = vmatprep.subr.bf16.mxu0 0
      %1085 = vmatpush1.bf16.msra.mxu0 0
      %1086 = vmatprep.subr.bf16.mxu0 0
      %1087 = vmatpush1.bf16.msra.mxu0 0
      %1088 = vmatprep.subr.bf16.mxu0 0
      %1089 = vmatpush1.bf16.msra.mxu0 0
      %1090 = vmatprep.subr.bf16.mxu0 0
      %1091 = vmatpush1.bf16.msra.mxu0 0
      %1092 = vmatprep.mubr.bf16.mxu0 0
      %1093 = vmatmul.mubr.bf16.gmra.mrb[0].mxu0 %v995
      %v1094 = vpop.f32.mrb[0].mxu0
      %v1095 = vadd.f32 0.0, %v1094
      %v1096 = vpop.f32.mrb[0].mxu0
      %v1097 = vpop.f32.mrb[0].mxu0
      %v1098 = vpop.f32.mrb[0].mxu0
      %1099 = vdwg.mxu0
      %v1100 = vadd.f32 %v453, %v1095
      %v1101 = vld [vmem:[%s5] sm:$0x1]
      %v1102 = vmul.f32 %v1100, %v1100
      %1103 = vadd.xlane.f32.xlu0 %v1102
      %v1104 = vpop.xlane.xlu0 %1103
      %v1105 = vmul.f32 %v1104, %v463
      %v1106 = vadd.f32 %v1105, 1e-05
      %v1107 = vrsqrt.pop %v1106
      %v1108 = vmul.f32 %v1100, %v1107
      %v1110 = vlaneseq
      %v1111 = vshrl.u32 %v1110, 7
      %v1112 = vsub.s32 0, %v1111
      %v1113 = vrot.slane %v1101, %v1112
      %v1115 = vmul.f32 %v1108, %v1113
      %v1116 = vpack.c.bf16 %v1115, %v1115
      %v1117 = vld [vmem:[%s8] sm:$0xff]
      %v1118 = vld [vmem:[%s8 + $0x8] sm:$0xff]
      %v1119 = vld [vmem:[%s8 + $0x10] sm:$0xff]
      %v1120 = vld [vmem:[%s8 + $0x18] sm:$0xff]
      %v1121 = vld [vmem:[%s8 + $0x20] sm:$0xff]
      %v1122 = vld [vmem:[%s8 + $0x28] sm:$0xff]
      %v1123 = vld [vmem:[%s8 + $0x30] sm:$0xff]
      %v1124 = vld [vmem:[%s8 + $0x38] sm:$0xff]
      %v1125 = vld [vmem:[%s8 + $0x40] sm:$0xff]
      %v1126 = vld [vmem:[%s8 + $0x48] sm:$0xff]
      %v1127 = vld [vmem:[%s8 + $0x50] sm:$0xff]
      %v1128 = vld [vmem:[%s8 + $0x58] sm:$0xff]
      %v1129 = vld [vmem:[%s8 + $0x60] sm:$0xff]
      %v1130 = vld [vmem:[%s8 + $0x68] sm:$0xff]
      %v1131 = vld [vmem:[%s8 + $0x70] sm:$0xff]
      %v1132 = vld [vmem:[%s8 + $0x78] sm:$0xff]
      %v1133 = vld [vmem:[%s8 + $0x80] sm:$0xff]
      %v1134 = vld [vmem:[%s8 + $0x88] sm:$0xff]
      %v1135 = vld [vmem:[%s8 + $0x90] sm:$0xff]
      %v1136 = vld [vmem:[%s8 + $0x98] sm:$0xff]
      %v1137 = vld [vmem:[%s8 + $0xa0] sm:$0xff]
      %v1138 = vld [vmem:[%s8 + $0xa8] sm:$0xff]
      %v1139 = vld [vmem:[%s8 + $0xb0] sm:$0xff]
      %v1140 = vld [vmem:[%s8 + $0xb8] sm:$0xff]
      %v1141 = vld [vmem:[%s8 + $0xc0] sm:$0xff]
      %v1142 = vld [vmem:[%s8 + $0xc8] sm:$0xff]
      %v1143 = vld [vmem:[%s8 + $0xd0] sm:$0xff]
      %v1144 = vld [vmem:[%s8 + $0xd8] sm:$0xff]
      %v1145 = vld [vmem:[%s8 + $0xe0] sm:$0xff]
      %v1146 = vld [vmem:[%s8 + $0xe8] sm:$0xff]
      %v1147 = vld [vmem:[%s8 + $0xf0] sm:$0xff]
      %v1148 = vld [vmem:[%s8 + $0xf8] sm:$0xff]
      %v1181 = vunpack.c.l.b16 %v1117
      %v1182 = vunpack.c.h.b16 %v1117
      %v1183 = vunpack.c.l.b16 %v1118
      %v1184 = vunpack.c.h.b16 %v1118
      %v1185 = vunpack.c.l.b16 %v1119
      %v1186 = vunpack.c.h.b16 %v1119
      %v1187 = vunpack.c.l.b16 %v1120
      %v1188 = vunpack.c.h.b16 %v1120
      %v1189 = vunpack.c.l.b16 %v1121
      %v1190 = vunpack.c.h.b16 %v1121
      %v1191 = vunpack.c.l.b16 %v1122
      %v1192 = vunpack.c.h.b16 %v1122
      %v1193 = vunpack.c.l.b16 %v1123
      %v1194 = vunpack.c.h.b16 %v1123
      %v1195 = vunpack.c.l.b16 %v1124
      %v1196 = vunpack.c.h.b16 %v1124
      %v1197 = vunpack.c.l.b16 %v1125
      %v1198 = vunpack.c.h.b16 %v1125
      %v1199 = vunpack.c.l.b16 %v1126
      %v1200 = vunpack.c.h.b16 %v1126
      %v1201 = vunpack.c.l.b16 %v1127
      %v1202 = vunpack.c.h.b16 %v1127
      %v1203 = vunpack.c.l.b16 %v1128
      %v1204 = vunpack.c.h.b16 %v1128
      %v1205 = vunpack.c.l.b16 %v1129
      %v1206 = vunpack.c.h.b16 %v1129
      %v1207 = vunpack.c.l.b16 %v1130
      %v1208 = vunpack.c.h.b16 %v1130
      %v1209 = vunpack.c.l.b16 %v1131
      %v1210 = vunpack.c.h.b16 %v1131
      %v1211 = vunpack.c.l.b16 %v1132
      %v1212 = vunpack.c.h.b16 %v1132
      %v1213 = vunpack.c.l.b16 %v1133
      %v1214 = vunpack.c.h.b16 %v1133
      %v1215 = vunpack.c.l.b16 %v1134
      %v1216 = vunpack.c.h.b16 %v1134
      %v1217 = vunpack.c.l.b16 %v1135
      %v1218 = vunpack.c.h.b16 %v1135
      %v1219 = vunpack.c.l.b16 %v1136
      %v1220 = vunpack.c.h.b16 %v1136
      %v1221 = vunpack.c.l.b16 %v1137
      %v1222 = vunpack.c.h.b16 %v1137
      %v1223 = vunpack.c.l.b16 %v1138
      %v1224 = vunpack.c.h.b16 %v1138
      %v1225 = vunpack.c.l.b16 %v1139
      %v1226 = vunpack.c.h.b16 %v1139
      %v1227 = vunpack.c.l.b16 %v1140
      %v1228 = vunpack.c.h.b16 %v1140
      %v1229 = vunpack.c.l.b16 %v1141
      %v1230 = vunpack.c.h.b16 %v1141
      %v1231 = vunpack.c.l.b16 %v1142
      %v1232 = vunpack.c.h.b16 %v1142
      %v1233 = vunpack.c.l.b16 %v1143
      %v1234 = vunpack.c.h.b16 %v1143
      %v1235 = vunpack.c.l.b16 %v1144
      %v1236 = vunpack.c.h.b16 %v1144
      %v1237 = vunpack.c.l.b16 %v1145
      %v1238 = vunpack.c.h.b16 %v1145
      %v1239 = vunpack.c.l.b16 %v1146
      %v1240 = vunpack.c.h.b16 %v1146
      %v1241 = vunpack.c.l.b16 %v1147
      %v1242 = vunpack.c.h.b16 %v1147
      %v1243 = vunpack.c.l.b16 %v1148
      %v1244 = vunpack.c.h.b16 %v1148
      %v1245 = vpack.c.b16 %v1185, %v1181
      %v1246 = vpack.c.b16 %v1186, %v1182
      %v1247 = vpack.c.b16 %v1187, %v1183
      %v1248 = vpack.c.b16 %v1188, %v1184
      %v1249 = vpack.c.b16 %v1193, %v1189
      %v1250 = vpack.c.b16 %v1194, %v1190
      %v1251 = vpack.c.b16 %v1195, %v1191
      %v1252 = vpack.c.b16 %v1196, %v1192
      %v1253 = vpack.c.b16 %v1201, %v1197
      %v1254 = vpack.c.b16 %v1202, %v1198
      %v1255 = vpack.c.b16 %v1203, %v1199
      %v1256 = vpack.c.b16 %v1204, %v1200
      %v1257 = vpack.c.b16 %v1209, %v1205
      %v1258 = vpack.c.b16 %v1210, %v1206
      %v1259 = vpack.c.b16 %v1211, %v1207
      %v1260 = vpack.c.b16 %v1212, %v1208
      %v1261 = vpack.c.b16 %v1217, %v1213
      %v1262 = vpack.c.b16 %v1218, %v1214
      %v1263 = vpack.c.b16 %v1219, %v1215
      %v1264 = vpack.c.b16 %v1220, %v1216
      %v1265 = vpack.c.b16 %v1225, %v1221
      %v1266 = vpack.c.b16 %v1226, %v1222
      %v1267 = vpack.c.b16 %v1227, %v1223
      %v1268 = vpack.c.b16 %v1228, %v1224
      %v1269 = vpack.c.b16 %v1233, %v1229
      %v1270 = vpack.c.b16 %v1234, %v1230
      %v1271 = vpack.c.b16 %v1235, %v1231
      %v1272 = vpack.c.b16 %v1236, %v1232
      %v1273 = vpack.c.b16 %v1241, %v1237
      %v1274 = vpack.c.b16 %v1242, %v1238
      %v1275 = vpack.c.b16 %v1243, %v1239
      %v1276 = vpack.c.b16 %v1244, %v1240
      %1309 = vmatprep.subr.bf16.mxu0 %v1246
      %1310 = vmatpush1.bf16.msra.mxu0 %v1245
      %1311 = vmatprep.subr.bf16.mxu0 %v1250
      %1312 = vmatpush1.bf16.msra.mxu0 %v1249
      %1313 = vmatprep.subr.bf16.mxu0 %v1254
      %1314 = vmatpush1.bf16.msra.mxu0 %v1253
      %1315 = vmatprep.subr.bf16.mxu0 %v1258
      %1316 = vmatpush1.bf16.msra.mxu0 %v1257
      %1317 = vmatprep.subr.bf16.mxu0 %v1262
      %1318 = vmatpush1.bf16.msra.mxu0 %v1261
      %1319 = vmatprep.subr.bf16.mxu0 %v1266
      %1320 = vmatpush1.bf16.msra.mxu0 %v1265
      %1321 = vmatprep.subr.bf16.mxu0 %v1270
      %1322 = vmatpush1.bf16.msra.mxu0 %v1269
      %1323 = vmatprep.subr.bf16.mxu0 %v1274
      %1324 = vmatpush1.bf16.msra.mxu0 %v1273
      %1325 = vmatprep.subr.bf16.mxu0 0
      %1326 = vmatpush1.bf16.msra.mxu0 0
      %1327 = vmatprep.subr.bf16.mxu0 0
      %1328 = vmatpush1.bf16.msra.mxu0 0
      %1329 = vmatprep.subr.bf16.mxu0 0
      %1330 = vmatpush1.bf16.msra.mxu0 0
      %1331 = vmatprep.subr.bf16.mxu0 0
      %1332 = vmatpush1.bf16.msra.mxu0 0
      %1333 = vmatprep.subr.bf16.mxu0 0
      %1334 = vmatpush1.bf16.msra.mxu0 0
      %1335 = vmatprep.subr.bf16.mxu0 0
      %1336 = vmatpush1.bf16.msra.mxu0 0
      %1337 = vmatprep.subr.bf16.mxu0 0
      %1338 = vmatpush1.bf16.msra.mxu0 0
      %1339 = vmatprep.subr.bf16.mxu0 0
      %1340 = vmatpush1.bf16.msra.mxu0 0
      %1341 = vmatprep.mubr.bf16.mxu0 0
      %1342 = vmatmul.mubr.bf16.gmra.mrb[0].mxu0 %v1116
      %v1343 = vpop.f32.mrb[0].mxu0
      %v1344 = vadd.f32 0.0, %v1343
      %v1345 = vpop.f32.mrb[0].mxu0
      %v1346 = vadd.f32 0.0, %v1345
      %v1347 = vpop.f32.mrb[0].mxu0
      %v1348 = vpop.f32.mrb[0].mxu0
      %1349 = vdwg.mxu0
      %1350 = vmatprep.subr.bf16.mxu0 %v1248
      %1351 = vmatpush1.bf16.msra.mxu0 %v1247
      %1352 = vmatprep.subr.bf16.mxu0 %v1252
      %1353 = vmatpush1.bf16.msra.mxu0 %v1251
      %1354 = vmatprep.subr.bf16.mxu0 %v1256
      %1355 = vmatpush1.bf16.msra.mxu0 %v1255
      %1356 = vmatprep.subr.bf16.mxu0 %v1260
      %1357 = vmatpush1.bf16.msra.mxu0 %v1259
      %1358 = vmatprep.subr.bf16.mxu0 %v1264
      %1359 = vmatpush1.bf16.msra.mxu0 %v1263
      %1360 = vmatprep.subr.bf16.mxu0 %v1268
      %1361 = vmatpush1.bf16.msra.mxu0 %v1267
      %1362 = vmatprep.subr.bf16.mxu0 %v1272
      %1363 = vmatpush1.bf16.msra.mxu0 %v1271
      %1364 = vmatprep.subr.bf16.mxu0 %v1276
      %1365 = vmatpush1.bf16.msra.mxu0 %v1275
      %1366 = vmatprep.subr.bf16.mxu0 0
      %1367 = vmatpush1.bf16.msra.mxu0 0
      %1368 = vmatprep.subr.bf16.mxu0 0
      %1369 = vmatpush1.bf16.msra.mxu0 0
      %1370 = vmatprep.subr.bf16.mxu0 0
      %1371 = vmatpush1.bf16.msra.mxu0 0
      %1372 = vmatprep.subr.bf16.mxu0 0
      %1373 = vmatpush1.bf16.msra.mxu0 0
      %1374 = vmatprep.subr.bf16.mxu0 0
      %1375 = vmatpush1.bf16.msra.mxu0 0
      %1376 = vmatprep.subr.bf16.mxu0 0
      %1377 = vmatpush1.bf16.msra.mxu0 0
      %1378 = vmatprep.subr.bf16.mxu0 0
      %1379 = vmatpush1.bf16.msra.mxu0 0
      %1380 = vmatprep.subr.bf16.mxu0 0
      %1381 = vmatpush1.bf16.msra.mxu0 0
      %1382 = vmatprep.mubr.bf16.mxu0 0
      %1383 = vmatmul.mubr.bf16.gmra.mrb[0].mxu0 %v1116
      %v1384 = vpop.f32.mrb[0].mxu0
      %v1385 = vadd.f32 0.0, %v1384
      %v1386 = vpop.f32.mrb[0].mxu0
      %v1387 = vadd.f32 0.0, %v1386
      %v1388 = vpop.f32.mrb[0].mxu0
      %v1389 = vpop.f32.mrb[0].mxu0
      %1390 = vdwg.mxu0
      %v1391 = vsub.f32 0.0, %v1344
      %v1392 = vsub.f32 0.0, %v1346
      %v1393 = vmul.f32 %v1391, 1.442695
      %v1394 = vpow.pop %v1393
      %v1395 = vmul.f32 %v1392, 1.442695
      %v1396 = vpow.pop %v1395
      %v1397 = vadd.f32 %v1394, 1.0
      %v1398 = vadd.f32 %v1396, 1.0
      %v1399 = vrcp.pop %v1397
      %v1400 = vrcp.pop %v1398
      %v1401 = vmul.f32 %v1344, %v1399
      %v1402 = vmul.f32 %v1346, %v1400
      %v1403 = vmul.f32 %v1401, %v1385
      %v1404 = vmul.f32 %v1402, %v1387
      %v1405 = vpack.c.bf16 %v1403, %v1403
      %v1406 = vpack.c.bf16 %v1404, %v1404
      %v1407 = vld [vmem:[%s9] sm:$0xf]
      %v1408 = vld [vmem:[%s9 + $0x4] sm:$0xf]
      %v1409 = vld [vmem:[%s9 + $0x8] sm:$0xf]
      %v1410 = vld [vmem:[%s9 + $0xc] sm:$0xf]
      %v1411 = vld [vmem:[%s9 + $0x10] sm:$0xf]
      %v1412 = vld [vmem:[%s9 + $0x14] sm:$0xf]
      %v1413 = vld [vmem:[%s9 + $0x18] sm:$0xf]
      %v1414 = vld [vmem:[%s9 + $0x1c] sm:$0xf]
      %v1415 = vld [vmem:[%s9 + $0x20] sm:$0xf]
      %v1416 = vld [vmem:[%s9 + $0x24] sm:$0xf]
      %v1417 = vld [vmem:[%s9 + $0x28] sm:$0xf]
      %v1418 = vld [vmem:[%s9 + $0x2c] sm:$0xf]
      %v1419 = vld [vmem:[%s9 + $0x30] sm:$0xf]
      %v1420 = vld [vmem:[%s9 + $0x34] sm:$0xf]
      %v1421 = vld [vmem:[%s9 + $0x38] sm:$0xf]
      %v1422 = vld [vmem:[%s9 + $0x3c] sm:$0xf]
      %v1423 = vld [vmem:[%s9 + $0x40] sm:$0xf]
      %v1424 = vld [vmem:[%s9 + $0x44] sm:$0xf]
      %v1425 = vld [vmem:[%s9 + $0x48] sm:$0xf]
      %v1426 = vld [vmem:[%s9 + $0x4c] sm:$0xf]
      %v1427 = vld [vmem:[%s9 + $0x50] sm:$0xf]
      %v1428 = vld [vmem:[%s9 + $0x54] sm:$0xf]
      %v1429 = vld [vmem:[%s9 + $0x58] sm:$0xf]
      %v1430 = vld [vmem:[%s9 + $0x5c] sm:$0xf]
      %v1431 = vld [vmem:[%s9 + $0x60] sm:$0xf]
      %v1432 = vld [vmem:[%s9 + $0x64] sm:$0xf]
      %v1433 = vld [vmem:[%s9 + $0x68] sm:$0xf]
      %v1434 = vld [vmem:[%s9 + $0x6c] sm:$0xf]
      %v1435 = vld [vmem:[%s9 + $0x70] sm:$0xf]
      %v1436 = vld [vmem:[%s9 + $0x74] sm:$0xf]
      %v1437 = vld [vmem:[%s9 + $0x78] sm:$0xf]
      %v1438 = vld [vmem:[%s9 + $0x7c] sm:$0xf]
      %v1471 = vunpack.c.l.b16 %v1407
      %v1472 = vunpack.c.l.b16 %v1408
      %v1473 = vunpack.c.l.b16 %v1409
      %v1474 = vunpack.c.l.b16 %v1410
      %v1475 = vunpack.c.l.b16 %v1411
      %v1476 = vunpack.c.l.b16 %v1412
      %v1477 = vunpack.c.l.b16 %v1413
      %v1478 = vunpack.c.l.b16 %v1414
      %v1479 = vunpack.c.l.b16 %v1415
      %v1480 = vunpack.c.l.b16 %v1416
      %v1481 = vunpack.c.l.b16 %v1417
      %v1482 = vunpack.c.l.b16 %v1418
      %v1483 = vunpack.c.l.b16 %v1419
      %v1484 = vunpack.c.l.b16 %v1420
      %v1485 = vunpack.c.l.b16 %v1421
      %v1486 = vunpack.c.l.b16 %v1422
      %v1487 = vunpack.c.l.b16 %v1423
      %v1488 = vunpack.c.l.b16 %v1424
      %v1489 = vunpack.c.l.b16 %v1425
      %v1490 = vunpack.c.l.b16 %v1426
      %v1491 = vunpack.c.l.b16 %v1427
      %v1492 = vunpack.c.l.b16 %v1428
      %v1493 = vunpack.c.l.b16 %v1429
      %v1494 = vunpack.c.l.b16 %v1430
      %v1495 = vunpack.c.l.b16 %v1431
      %v1496 = vunpack.c.l.b16 %v1432
      %v1497 = vunpack.c.l.b16 %v1433
      %v1498 = vunpack.c.l.b16 %v1434
      %v1499 = vunpack.c.l.b16 %v1435
      %v1500 = vunpack.c.l.b16 %v1436
      %v1501 = vunpack.c.l.b16 %v1437
      %v1502 = vunpack.c.l.b16 %v1438
      %v1503 = vpack.c.b16 %v1472, %v1471
      %v1504 = vpack.c.b16 %v1474, %v1473
      %v1505 = vpack.c.b16 %v1476, %v1475
      %v1506 = vpack.c.b16 %v1478, %v1477
      %v1507 = vpack.c.b16 %v1480, %v1479
      %v1508 = vpack.c.b16 %v1482, %v1481
      %v1509 = vpack.c.b16 %v1484, %v1483
      %v1510 = vpack.c.b16 %v1486, %v1485
      %v1511 = vpack.c.b16 %v1488, %v1487
      %v1512 = vpack.c.b16 %v1490, %v1489
      %v1513 = vpack.c.b16 %v1492, %v1491
      %v1514 = vpack.c.b16 %v1494, %v1493
      %v1515 = vpack.c.b16 %v1496, %v1495
      %v1516 = vpack.c.b16 %v1498, %v1497
      %v1517 = vpack.c.b16 %v1500, %v1499
      %v1518 = vpack.c.b16 %v1502, %v1501
      %1535 = vmatprep.subr.bf16.mxu0 0
      %1536 = vmatpush1.bf16.msra.mxu0 %v1503
      %1537 = vmatprep.subr.bf16.mxu0 0
      %1538 = vmatpush1.bf16.msra.mxu0 %v1504
      %1539 = vmatprep.subr.bf16.mxu0 0
      %1540 = vmatpush1.bf16.msra.mxu0 %v1505
      %1541 = vmatprep.subr.bf16.mxu0 0
      %1542 = vmatpush1.bf16.msra.mxu0 %v1506
      %1543 = vmatprep.subr.bf16.mxu0 0
      %1544 = vmatpush1.bf16.msra.mxu0 %v1507
      %1545 = vmatprep.subr.bf16.mxu0 0
      %1546 = vmatpush1.bf16.msra.mxu0 %v1508
      %1547 = vmatprep.subr.bf16.mxu0 0
      %1548 = vmatpush1.bf16.msra.mxu0 %v1509
      %1549 = vmatprep.subr.bf16.mxu0 0
      %1550 = vmatpush1.bf16.msra.mxu0 %v1510
      %1551 = vmatprep.subr.bf16.mxu0 0
      %1552 = vmatpush1.bf16.msra.mxu0 %v1511
      %1553 = vmatprep.subr.bf16.mxu0 0
      %1554 = vmatpush1.bf16.msra.mxu0 %v1512
      %1555 = vmatprep.subr.bf16.mxu0 0
      %1556 = vmatpush1.bf16.msra.mxu0 %v1513
      %1557 = vmatprep.subr.bf16.mxu0 0
      %1558 = vmatpush1.bf16.msra.mxu0 %v1514
      %1559 = vmatprep.subr.bf16.mxu0 0
      %1560 = vmatpush1.bf16.msra.mxu0 %v1515
      %1561 = vmatprep.subr.bf16.mxu0 0
      %1562 = vmatpush1.bf16.msra.mxu0 %v1516
      %1563 = vmatprep.subr.bf16.mxu0 0
      %1564 = vmatpush1.bf16.msra.mxu0 %v1517
      %1565 = vmatprep.subr.bf16.mxu0 0
      %1566 = vmatpush1.bf16.msra.mxu0 %v1518
      %1567 = vmatprep.mubr.bf16.mxu0 %v1406
      %1568 = vmatmul.mubr.bf16.gmra.mrb[0].mxu0 %v1405
      %v1569 = vpop.f32.mrb[0].mxu0
      %v1570 = vadd.f32 0.0, %v1569
      %v1571 = vpop.f32.mrb[0].mxu0
      %v1572 = vpop.f32.mrb[0].mxu0
      %v1573 = vpop.f32.mrb[0].mxu0
      %1574 = vdwg.mxu0
      %v1575 = vadd.f32 %v1100, %v1570
      %s1576 = scalar_lea.vmem %s4, 1
      %v1577 = vld [vmem:[%s1576] sm:$0x1]
      %v1578 = vmul.f32 %v1575, %v1575
      %1579 = vadd.xlane.f32.xlu0 %v1578
      %v1580 = vpop.xlane.xlu0 %1579
      %v1581 = vmul.f32 %v1580, %v463
      %v1582 = vadd.f32 %v1581, 1e-05
      %v1583 = vrsqrt.pop %v1582
      %v1584 = vmul.f32 %v1575, %v1583
      %v1586 = vlaneseq
      %v1587 = vshrl.u32 %v1586, 7
      %v1588 = vsub.s32 0, %v1587
      %v1589 = vrot.slane %v1577, %v1588
      %v1591 = vmul.f32 %v1584, %v1589
      %v1592 = vpack.c.bf16 %v1591, %v1591
      %s1593 = scalar_lea.vmem %s6, 128
      %v1594 = vld [vmem:[%s1593] sm:$0xff]
      %v1595 = vld [vmem:[%s1593 + $0x8] sm:$0xff]
      %v1596 = vld [vmem:[%s1593 + $0x10] sm:$0xff]
      %v1597 = vld [vmem:[%s1593 + $0x18] sm:$0xff]
      %v1598 = vld [vmem:[%s1593 + $0x20] sm:$0xff]
      %v1599 = vld [vmem:[%s1593 + $0x28] sm:$0xff]
      %v1600 = vld [vmem:[%s1593 + $0x30] sm:$0xff]
      %v1601 = vld [vmem:[%s1593 + $0x38] sm:$0xff]
      %v1602 = vld [vmem:[%s1593 + $0x40] sm:$0xff]
      %v1603 = vld [vmem:[%s1593 + $0x48] sm:$0xff]
      %v1604 = vld [vmem:[%s1593 + $0x50] sm:$0xff]
      %v1605 = vld [vmem:[%s1593 + $0x58] sm:$0xff]
      %v1606 = vld [vmem:[%s1593 + $0x60] sm:$0xff]
      %v1607 = vld [vmem:[%s1593 + $0x68] sm:$0xff]
      %v1608 = vld [vmem:[%s1593 + $0x70] sm:$0xff]
      %v1609 = vld [vmem:[%s1593 + $0x78] sm:$0xff]
      %v1626 = vunpack.c.l.b16 %v1594
      %v1627 = vunpack.c.h.b16 %v1594
      %v1628 = vunpack.c.l.b16 %v1595
      %v1629 = vunpack.c.h.b16 %v1595
      %v1630 = vunpack.c.l.b16 %v1596
      %v1631 = vunpack.c.h.b16 %v1596
      %v1632 = vunpack.c.l.b16 %v1597
      %v1633 = vunpack.c.h.b16 %v1597
      %v1634 = vunpack.c.l.b16 %v1598
      %v1635 = vunpack.c.h.b16 %v1598
      %v1636 = vunpack.c.l.b16 %v1599
      %v1637 = vunpack.c.h.b16 %v1599
      %v1638 = vunpack.c.l.b16 %v1600
      %v1639 = vunpack.c.h.b16 %v1600
      %v1640 = vunpack.c.l.b16 %v1601
      %v1641 = vunpack.c.h.b16 %v1601
      %v1642 = vunpack.c.l.b16 %v1602
      %v1643 = vunpack.c.h.b16 %v1602
      %v1644 = vunpack.c.l.b16 %v1603
      %v1645 = vunpack.c.h.b16 %v1603
      %v1646 = vunpack.c.l.b16 %v1604
      %v1647 = vunpack.c.h.b16 %v1604
      %v1648 = vunpack.c.l.b16 %v1605
      %v1649 = vunpack.c.h.b16 %v1605
      %v1650 = vunpack.c.l.b16 %v1606
      %v1651 = vunpack.c.h.b16 %v1606
      %v1652 = vunpack.c.l.b16 %v1607
      %v1653 = vunpack.c.h.b16 %v1607
      %v1654 = vunpack.c.l.b16 %v1608
      %v1655 = vunpack.c.h.b16 %v1608
      %v1656 = vunpack.c.l.b16 %v1609
      %v1657 = vunpack.c.h.b16 %v1609
      %v1658 = vpack.c.b16 %v1628, %v1626
      %v1659 = vpack.c.b16 %v1629, %v1627
      %v1660 = vpack.c.b16 %v1632, %v1630
      %v1661 = vpack.c.b16 %v1633, %v1631
      %v1662 = vpack.c.b16 %v1636, %v1634
      %v1663 = vpack.c.b16 %v1637, %v1635
      %v1664 = vpack.c.b16 %v1640, %v1638
      %v1665 = vpack.c.b16 %v1641, %v1639
      %v1666 = vpack.c.b16 %v1644, %v1642
      %v1667 = vpack.c.b16 %v1645, %v1643
      %v1668 = vpack.c.b16 %v1648, %v1646
      %v1669 = vpack.c.b16 %v1649, %v1647
      %v1670 = vpack.c.b16 %v1652, %v1650
      %v1671 = vpack.c.b16 %v1653, %v1651
      %v1672 = vpack.c.b16 %v1656, %v1654
      %v1673 = vpack.c.b16 %v1657, %v1655
      %1690 = vmatprep.subr.bf16.mxu0 %v1659
      %1691 = vmatpush1.bf16.msra.mxu0 %v1658
      %1692 = vmatprep.subr.bf16.mxu0 %v1661
      %1693 = vmatpush1.bf16.msra.mxu0 %v1660
      %1694 = vmatprep.subr.bf16.mxu0 %v1663
      %1695 = vmatpush1.bf16.msra.mxu0 %v1662
      %1696 = vmatprep.subr.bf16.mxu0 %v1665
      %1697 = vmatpush1.bf16.msra.mxu0 %v1664
      %1698 = vmatprep.subr.bf16.mxu0 %v1667
      %1699 = vmatpush1.bf16.msra.mxu0 %v1666
      %1700 = vmatprep.subr.bf16.mxu0 %v1669
      %1701 = vmatpush1.bf16.msra.mxu0 %v1668
      %1702 = vmatprep.subr.bf16.mxu0 %v1671
      %1703 = vmatpush1.bf16.msra.mxu0 %v1670
      %1704 = vmatprep.subr.bf16.mxu0 %v1673
      %1705 = vmatpush1.bf16.msra.mxu0 %v1672
      %1706 = vmatprep.subr.bf16.mxu0 0
      %1707 = vmatpush1.bf16.msra.mxu0 0
      %1708 = vmatprep.subr.bf16.mxu0 0
      %1709 = vmatpush1.bf16.msra.mxu0 0
      %1710 = vmatprep.subr.bf16.mxu0 0
      %1711 = vmatpush1.bf16.msra.mxu0 0
      %1712 = vmatprep.subr.bf16.mxu0 0
      %1713 = vmatpush1.bf16.msra.mxu0 0
      %1714 = vmatprep.subr.bf16.mxu0 0
      %1715 = vmatpush1.bf16.msra.mxu0 0
      %1716 = vmatprep.subr.bf16.mxu0 0
      %1717 = vmatpush1.bf16.msra.mxu0 0
      %1718 = vmatprep.subr.bf16.mxu0 0
      %1719 = vmatpush1.bf16.msra.mxu0 0
      %1720 = vmatprep.subr.bf16.mxu0 0
      %1721 = vmatpush1.bf16.msra.mxu0 0
      %1722 = vmatprep.mubr.bf16.mxu0 0
      %1723 = vmatmul.mubr.bf16.gmra.mrb[0].mxu0 %v1592
      %v1724 = vpop.f32.mrb[0].mxu0
      %v1725 = vadd.f32 0.0, %v1724
      %v1726 = vpop.f32.mrb[0].mxu0
      %v1727 = vadd.f32 0.0, %v1726
      %v1728 = vpop.f32.mrb[0].mxu0
      %v1729 = vpop.f32.mrb[0].mxu0
      %1730 = vdwg.mxu0
      %1732 = vrot.lane.b32.xlu0 %v1725, 96
      %v1733 = vpop.permute.xlu0 %1732
      %v1735 = vsub.f32 0.0, %v1725
      %v1736 = vsub.f32 0.0, %v1733
      %1739 = vrot.lane.b32.xlu0 %v1735, 112
      %v1740 = vpop.permute.xlu0 %1739
      %1741 = vrot.lane.b32.xlu0 %v1736, 112
      %v1742 = vpop.permute.xlu0 %1741
      %1745 = vrot.lane.b32.xlu0 %v1725, 16
      %v1746 = vpop.permute.xlu0 %1745
      %1747 = vrot.lane.b32.xlu0 %v1733, 16
      %v1748 = vpop.permute.xlu0 %1747
      %v1751 = vsel %vm633, %v1740, %v1746
      %v1752 = vsel %vm633, %v1742, %v1748
      %v1753 = vmul.f32 %v1725, %v455
      %v1754 = vmul.f32 %v1733, %v456
      %v1755 = vmul.f32 %v1751, %v457
      %v1756 = vmul.f32 %v1752, %v458
      %v1757 = vadd.f32 %v1753, %v1755
      %v1758 = vadd.f32 %v1754, %v1756
      %v1759 = vpack.c.bf16 %v1758, %v1757
      %v1760 = vsub.f32 0.0, %v1727
      %1762 = vrot.lane.b32.xlu0 %v1760, 112
      %v1763 = vpop.permute.xlu0 %1762
      %1766 = vrot.lane.b32.xlu0 %v1727, 16
      %v1767 = vpop.permute.xlu0 %1766
      %v1769 = vsel %vm633, %v1763, %v1767
      %v1770 = vmul.f32 %v1727, %v455
      %v1771 = vmul.f32 %v1769, %v457
      %v1772 = vadd.f32 %v1770, %v1771
      %v1773 = vpack.c.bf16 %v1772, %v1772
      %v1774 = vpack.c.bf16 %v1727, %v1727
      %v1776 = vsel %vm658, %v1759, 0
      %v1779 = vsel %vm658, %v1773, 0
      %1781 = vmatprep.subr.bf16.mxu0 0
      %1782 = vmatpush1.bf16.xpose.msra.mxu0 %v1779
      %1783 = vmatprep.subr.bf16.mxu0 0
      %1784 = vmatpush1.bf16.xpose.msra.mxu0 0
      %1785 = vmatprep.subr.bf16.mxu0 0
      %1786 = vmatpush1.bf16.xpose.msra.mxu0 0
      %1787 = vmatprep.subr.bf16.mxu0 0
      %1788 = vmatpush1.bf16.xpose.msra.mxu0 0
      %1789 = vmatprep.subr.bf16.mxu0 0
      %1790 = vmatpush1.bf16.xpose.msra.mxu0 0
      %1791 = vmatprep.subr.bf16.mxu0 0
      %1792 = vmatpush1.bf16.xpose.msra.mxu0 0
      %1793 = vmatprep.subr.bf16.mxu0 0
      %1794 = vmatpush1.bf16.xpose.msra.mxu0 0
      %1795 = vmatprep.subr.bf16.mxu0 0
      %1796 = vmatpush1.bf16.xpose.msra.mxu0 0
      %1797 = vmatprep.subr.bf16.mxu0 0
      %1798 = vmatpush1.bf16.xpose.msra.mxu0 0
      %1799 = vmatprep.subr.bf16.mxu0 0
      %1800 = vmatpush1.bf16.xpose.msra.mxu0 0
      %1801 = vmatprep.subr.bf16.mxu0 0
      %1802 = vmatpush1.bf16.xpose.msra.mxu0 0
      %1803 = vmatprep.subr.bf16.mxu0 0
      %1804 = vmatpush1.bf16.xpose.msra.mxu0 0
      %1805 = vmatprep.subr.bf16.mxu0 0
      %1806 = vmatpush1.bf16.xpose.msra.mxu0 0
      %1807 = vmatprep.subr.bf16.mxu0 0
      %1808 = vmatpush1.bf16.xpose.msra.mxu0 0
      %1809 = vmatprep.subr.bf16.mxu0 0
      %1810 = vmatpush1.bf16.xpose.msra.mxu0 0
      %1811 = vmatprep.subr.bf16.mxu0 0
      %1812 = vmatpush1.bf16.xpose.msra.mxu0 0
      %1813 = vmatprep.mubr.bf16.mxu0 0
      %1814 = vmatmul.mubr.bf16.gmra.mrb[0].mxu0 %v1776
      %v1815 = vpop.f32.mrb[0].mxu0
      %v1816 = vadd.f32 0.0, %v1815
      %v1817 = vpop.f32.mrb[0].mxu0
      %v1818 = vpop.f32.mrb[0].mxu0
      %v1819 = vadd.f32 0.0, %v1818
      %v1820 = vpop.f32.mrb[0].mxu0
      %1821 = vdwg.mxu0
      %v1822 = vmul.f32 %v1816, 0.17677669
      %v1823 = vmul.f32 %v1819, 0.17677669
      %v1824 = vadd.f32 %v1822, %v712
      %v1825 = vadd.f32 %v1823, %v712
      %v1826 = vsel %vm716, %v1824, -inf
      %1827 = vmax.xlane.f32.xlu0 %v1826
      %v1828 = vpop.xlane.xlu0 %1827
      %v1829 = vsel %vm716, %v1825, -inf
      %1830 = vmax.xlane.f32.xlu0 %v1829
      %v1831 = vpop.xlane.xlu0 %1830
      %v1832 = vsub.f32 %v1824, %v1828
      %v1833 = vsub.f32 %v1825, %v1831
      %v1834 = vmul.f32 %v1832, 1.442695
      %v1835 = vpow.pop %v1834
      %v1836 = vmul.f32 %v1833, 1.442695
      %v1837 = vpow.pop %v1836
      %v1838 = vsel %vm716, %v1835, 0.0
      %1839 = vadd.xlane.f32.xlu0 %v1838
      %v1840 = vpop.xlane.xlu0 %1839
      %v1841 = vsel %vm716, %v1837, 0.0
      %1842 = vadd.xlane.f32.xlu0 %v1841
      %v1843 = vpop.xlane.xlu0 %1842
      %v1844 = vrcp.pop %v1840
      %v1845 = vmul.f32 %v1835, %v1844
      %v1846 = vrcp.pop %v1843
      %v1847 = vmul.f32 %v1837, %v1846
      %v1848 = vpack.c.bf16 %v1847, %v1845
      %1850 = vrot.lane.b32.xlu0 %v1774, 64
      %v1851 = vpop.permute.xlu0 %1850
      %v1853 = vsel %vm716, %v1848, 0
      %v1856 = vsel %vm746, %v1851, 0
      %1858 = vmatprep.subr.bf16.mxu0 0
      %1859 = vmatpush1.bf16.msra.mxu0 %v1856
      %1860 = vmatprep.subr.bf16.mxu0 0
      %1861 = vmatpush1.bf16.msra.mxu0 0
      %1862 = vmatprep.subr.bf16.mxu0 0
      %1863 = vmatpush1.bf16.msra.mxu0 0
      %1864 = vmatprep.subr.bf16.mxu0 0
      %1865 = vmatpush1.bf16.msra.mxu0 0
      %1866 = vmatprep.subr.bf16.mxu0 0
      %1867 = vmatpush1.bf16.msra.mxu0 0
      %1868 = vmatprep.subr.bf16.mxu0 0
      %1869 = vmatpush1.bf16.msra.mxu0 0
      %1870 = vmatprep.subr.bf16.mxu0 0
      %1871 = vmatpush1.bf16.msra.mxu0 0
      %1872 = vmatprep.subr.bf16.mxu0 0
      %1873 = vmatpush1.bf16.msra.mxu0 0
      %1874 = vmatprep.subr.bf16.mxu0 0
      %1875 = vmatpush1.bf16.msra.mxu0 0
      %1876 = vmatprep.subr.bf16.mxu0 0
      %1877 = vmatpush1.bf16.msra.mxu0 0
      %1878 = vmatprep.subr.bf16.mxu0 0
      %1879 = vmatpush1.bf16.msra.mxu0 0
      %1880 = vmatprep.subr.bf16.mxu0 0
      %1881 = vmatpush1.bf16.msra.mxu0 0
      %1882 = vmatprep.subr.bf16.mxu0 0
      %1883 = vmatpush1.bf16.msra.mxu0 0
      %1884 = vmatprep.subr.bf16.mxu0 0
      %1885 = vmatpush1.bf16.msra.mxu0 0
      %1886 = vmatprep.subr.bf16.mxu0 0
      %1887 = vmatpush1.bf16.msra.mxu0 0
      %1888 = vmatprep.subr.bf16.mxu0 0
      %1889 = vmatpush1.bf16.msra.mxu0 0
      %1890 = vmatprep.mubr.bf16.mxu0 0
      %1891 = vmatmul.mubr.bf16.gmra.mrb[0].mxu0 %v1853
      %v1892 = vpop.f32.mrb[0].mxu0
      %v1893 = vadd.f32 0.0, %v1892
      %v1894 = vpop.f32.mrb[0].mxu0
      %v1895 = vpop.f32.mrb[0].mxu0
      %v1896 = vadd.f32 0.0, %v1895
      %v1897 = vpop.f32.mrb[0].mxu0
      %1898 = vdwg.mxu0
      %1899 = vst.msk [vmem:[#allocation2] sm:$0xff] %vm658, %v1893
      %1901 = vrot.lane.b32.xlu0 %v1896, 32
      %v1902 = vpop.permute.xlu0 %1901
      %1904 = vst.msk [vmem:[#allocation2] sm:$0xff] %vm796, %v1902
      %1905 = vrot.lane.b32.xlu0 %v1735, 48
      %v1906 = vpop.permute.xlu0 %1905
      %1907 = vrot.lane.b32.xlu0 %v1736, 48
      %v1908 = vpop.permute.xlu0 %1907
      %1911 = vrot.lane.b32.xlu0 %v1725, 80
      %v1912 = vpop.permute.xlu0 %1911
      %1913 = vrot.lane.b32.xlu0 %v1733, 80
      %v1914 = vpop.permute.xlu0 %1913
      %v1917 = vsel %vm633, %v1906, %v1912
      %v1918 = vsel %vm633, %v1908, %v1914
      %v1919 = vmul.f32 %v1725, %v815
      %v1920 = vmul.f32 %v1733, %v817
      %v1921 = vmul.f32 %v1917, %v457
      %v1922 = vmul.f32 %v1918, %v458
      %1925 = vrot.lane.b32.xlu0 %v1921, 64
      %v1926 = vpop.permute.xlu0 %1925
      %1927 = vrot.lane.b32.xlu0 %v1922, 64
      %v1928 = vpop.permute.xlu0 %1927
      %v1931 = vadd.f32 %v1919, %v1926
      %v1932 = vadd.f32 %v1920, %v1928
      %v1933 = vpack.c.bf16 %v1932, %v1931
      %1934 = vrot.lane.b32.xlu0 %v1760, 80
      %v1935 = vpop.permute.xlu0 %1934
      %1937 = vrot.lane.b32.xlu0 %v1727, 112
      %v1938 = vpop.permute.xlu0 %1937
      %v1940 = vsel %vm633, %v1935, %v1938
      %v1941 = vmul.f32 %v1727, %v843
      %v1942 = vmul.f32 %v1940, %v457
      %1944 = vrot.lane.b32.xlu0 %v1942, 32
      %v1945 = vpop.permute.xlu0 %1944
      %v1947 = vadd.f32 %v1941, %v1945
      %v1948 = vpack.c.bf16 %v1947, %v1947
      %1950 = vrot.lane.b32.xlu0 %v1933, 64
      %v1951 = vpop.permute.xlu0 %1950
      %1953 = vrot.lane.b32.xlu0 %v1948, 96
      %v1954 = vpop.permute.xlu0 %1953
      %v1956 = vsel %vm658, %v1951, 0
      %v1959 = vsel %vm658, %v1954, 0
      %1961 = vmatprep.subr.bf16.mxu0 0
      %1962 = vmatpush1.bf16.xpose.msra.mxu0 %v1959
      %1963 = vmatprep.subr.bf16.mxu0 0
      %1964 = vmatpush1.bf16.xpose.msra.mxu0 0
      %1965 = vmatprep.subr.bf16.mxu0 0
      %1966 = vmatpush1.bf16.xpose.msra.mxu0 0
      %1967 = vmatprep.subr.bf16.mxu0 0
      %1968 = vmatpush1.bf16.xpose.msra.mxu0 0
      %1969 = vmatprep.subr.bf16.mxu0 0
      %1970 = vmatpush1.bf16.xpose.msra.mxu0 0
      %1971 = vmatprep.subr.bf16.mxu0 0
      %1972 = vmatpush1.bf16.xpose.msra.mxu0 0
      %1973 = vmatprep.subr.bf16.mxu0 0
      %1974 = vmatpush1.bf16.xpose.msra.mxu0 0
      %1975 = vmatprep.subr.bf16.mxu0 0
      %1976 = vmatpush1.bf16.xpose.msra.mxu0 0
      %1977 = vmatprep.subr.bf16.mxu0 0
      %1978 = vmatpush1.bf16.xpose.msra.mxu0 0
      %1979 = vmatprep.subr.bf16.mxu0 0
      %1980 = vmatpush1.bf16.xpose.msra.mxu0 0
      %1981 = vmatprep.subr.bf16.mxu0 0
      %1982 = vmatpush1.bf16.xpose.msra.mxu0 0
      %1983 = vmatprep.subr.bf16.mxu0 0
      %1984 = vmatpush1.bf16.xpose.msra.mxu0 0
      %1985 = vmatprep.subr.bf16.mxu0 0
      %1986 = vmatpush1.bf16.xpose.msra.mxu0 0
      %1987 = vmatprep.subr.bf16.mxu0 0
      %1988 = vmatpush1.bf16.xpose.msra.mxu0 0
      %1989 = vmatprep.subr.bf16.mxu0 0
      %1990 = vmatpush1.bf16.xpose.msra.mxu0 0
      %1991 = vmatprep.subr.bf16.mxu0 0
      %1992 = vmatpush1.bf16.xpose.msra.mxu0 0
      %1993 = vmatprep.mubr.bf16.mxu0 0
      %1994 = vmatmul.mubr.bf16.gmra.mrb[0].mxu0 %v1956
      %v1995 = vpop.f32.mrb[0].mxu0
      %v1996 = vadd.f32 0.0, %v1995
      %v1997 = vpop.f32.mrb[0].mxu0
      %v1998 = vpop.f32.mrb[0].mxu0
      %v1999 = vadd.f32 0.0, %v1998
      %v2000 = vpop.f32.mrb[0].mxu0
      %2001 = vdwg.mxu0
      %v2002 = vmul.f32 %v1996, 0.17677669
      %v2003 = vmul.f32 %v1999, 0.17677669
      %v2004 = vadd.f32 %v2002, %v712
      %v2005 = vadd.f32 %v2003, %v712
      %v2006 = vsel %vm716, %v2004, -inf
      %2007 = vmax.xlane.f32.xlu0 %v2006
      %v2008 = vpop.xlane.xlu0 %2007
      %v2009 = vsel %vm716, %v2005, -inf
      %2010 = vmax.xlane.f32.xlu0 %v2009
      %v2011 = vpop.xlane.xlu0 %2010
      %v2012 = vsub.f32 %v2004, %v2008
      %v2013 = vsub.f32 %v2005, %v2011
      %v2014 = vmul.f32 %v2012, 1.442695
      %v2015 = vpow.pop %v2014
      %v2016 = vmul.f32 %v2013, 1.442695
      %v2017 = vpow.pop %v2016
      %v2018 = vsel %vm716, %v2015, 0.0
      %2019 = vadd.xlane.f32.xlu0 %v2018
      %v2020 = vpop.xlane.xlu0 %2019
      %v2021 = vsel %vm716, %v2017, 0.0
      %2022 = vadd.xlane.f32.xlu0 %v2021
      %v2023 = vpop.xlane.xlu0 %2022
      %v2024 = vrcp.pop %v2020
      %v2025 = vmul.f32 %v2015, %v2024
      %v2026 = vrcp.pop %v2023
      %v2027 = vmul.f32 %v2017, %v2026
      %v2028 = vpack.c.bf16 %v2027, %v2025
      %2029 = vrot.lane.b32.xlu0 %v1774, 32
      %v2030 = vpop.permute.xlu0 %2029
      %v2032 = vsel %vm716, %v2028, 0
      %v2035 = vsel %vm746, %v2030, 0
      %2037 = vmatprep.subr.bf16.mxu0 0
      %2038 = vmatpush1.bf16.msra.mxu0 %v2035
      %2039 = vmatprep.subr.bf16.mxu0 0
      %2040 = vmatpush1.bf16.msra.mxu0 0
      %2041 = vmatprep.subr.bf16.mxu0 0
      %2042 = vmatpush1.bf16.msra.mxu0 0
      %2043 = vmatprep.subr.bf16.mxu0 0
      %2044 = vmatpush1.bf16.msra.mxu0 0
      %2045 = vmatprep.subr.bf16.mxu0 0
      %2046 = vmatpush1.bf16.msra.mxu0 0
      %2047 = vmatprep.subr.bf16.mxu0 0
      %2048 = vmatpush1.bf16.msra.mxu0 0
      %2049 = vmatprep.subr.bf16.mxu0 0
      %2050 = vmatpush1.bf16.msra.mxu0 0
      %2051 = vmatprep.subr.bf16.mxu0 0
      %2052 = vmatpush1.bf16.msra.mxu0 0
      %2053 = vmatprep.subr.bf16.mxu0 0
      %2054 = vmatpush1.bf16.msra.mxu0 0
      %2055 = vmatprep.subr.bf16.mxu0 0
      %2056 = vmatpush1.bf16.msra.mxu0 0
      %2057 = vmatprep.subr.bf16.mxu0 0
      %2058 = vmatpush1.bf16.msra.mxu0 0
      %2059 = vmatprep.subr.bf16.mxu0 0
      %2060 = vmatpush1.bf16.msra.mxu0 0
      %2061 = vmatprep.subr.bf16.mxu0 0
      %2062 = vmatpush1.bf16.msra.mxu0 0
      %2063 = vmatprep.subr.bf16.mxu0 0
      %2064 = vmatpush1.bf16.msra.mxu0 0
      %2065 = vmatprep.subr.bf16.mxu0 0
      %2066 = vmatpush1.bf16.msra.mxu0 0
      %2067 = vmatprep.subr.bf16.mxu0 0
      %2068 = vmatpush1.bf16.msra.mxu0 0
      %2069 = vmatprep.mubr.bf16.mxu0 0
      %2070 = vmatmul.mubr.bf16.gmra.mrb[0].mxu0 %v2032
      %v2071 = vpop.f32.mrb[0].mxu0
      %v2072 = vadd.f32 0.0, %v2071
      %v2073 = vpop.f32.mrb[0].mxu0
      %v2074 = vpop.f32.mrb[0].mxu0
      %v2075 = vadd.f32 0.0, %v2074
      %v2076 = vpop.f32.mrb[0].mxu0
      %2077 = vdwg.mxu0
      %2079 = vrot.lane.b32.xlu0 %v2072, 64
      %v2080 = vpop.permute.xlu0 %2079
      %2082 = vst.msk [vmem:[#allocation2] sm:$0xff] %vm986, %v2080
      %2084 = vrot.lane.b32.xlu0 %v2075, 96
      %v2085 = vpop.permute.xlu0 %2084
      %2087 = vst.msk [vmem:[#allocation2] sm:$0xff] %vm992, %v2085
      %v2088 = vld [vmem:[#allocation2] sm:$0xff]
      %v2089 = vpack.c.bf16 %v2088, %v2088
      %s2090 = scalar_lea.vmem %s7, 64
      %v2091 = vld [vmem:[%s2090] sm:$0xf]
      %v2092 = vld [vmem:[%s2090 + $0x4] sm:$0xf]
      %v2093 = vld [vmem:[%s2090 + $0x8] sm:$0xf]
      %v2094 = vld [vmem:[%s2090 + $0xc] sm:$0xf]
      %v2095 = vld [vmem:[%s2090 + $0x10] sm:$0xf]
      %v2096 = vld [vmem:[%s2090 + $0x14] sm:$0xf]
      %v2097 = vld [vmem:[%s2090 + $0x18] sm:$0xf]
      %v2098 = vld [vmem:[%s2090 + $0x1c] sm:$0xf]
      %v2099 = vld [vmem:[%s2090 + $0x20] sm:$0xf]
      %v2100 = vld [vmem:[%s2090 + $0x24] sm:$0xf]
      %v2101 = vld [vmem:[%s2090 + $0x28] sm:$0xf]
      %v2102 = vld [vmem:[%s2090 + $0x2c] sm:$0xf]
      %v2103 = vld [vmem:[%s2090 + $0x30] sm:$0xf]
      %v2104 = vld [vmem:[%s2090 + $0x34] sm:$0xf]
      %v2105 = vld [vmem:[%s2090 + $0x38] sm:$0xf]
      %v2106 = vld [vmem:[%s2090 + $0x3c] sm:$0xf]
      %v2123 = vunpack.c.l.b16 %v2091
      %v2124 = vunpack.c.l.b16 %v2092
      %v2125 = vunpack.c.l.b16 %v2093
      %v2126 = vunpack.c.l.b16 %v2094
      %v2127 = vunpack.c.l.b16 %v2095
      %v2128 = vunpack.c.l.b16 %v2096
      %v2129 = vunpack.c.l.b16 %v2097
      %v2130 = vunpack.c.l.b16 %v2098
      %v2131 = vunpack.c.l.b16 %v2099
      %v2132 = vunpack.c.l.b16 %v2100
      %v2133 = vunpack.c.l.b16 %v2101
      %v2134 = vunpack.c.l.b16 %v2102
      %v2135 = vunpack.c.l.b16 %v2103
      %v2136 = vunpack.c.l.b16 %v2104
      %v2137 = vunpack.c.l.b16 %v2105
      %v2138 = vunpack.c.l.b16 %v2106
      %v2139 = vpack.c.b16 %v2124, %v2123
      %v2140 = vpack.c.b16 %v2126, %v2125
      %v2141 = vpack.c.b16 %v2128, %v2127
      %v2142 = vpack.c.b16 %v2130, %v2129
      %v2143 = vpack.c.b16 %v2132, %v2131
      %v2144 = vpack.c.b16 %v2134, %v2133
      %v2145 = vpack.c.b16 %v2136, %v2135
      %v2146 = vpack.c.b16 %v2138, %v2137
      %2155 = vmatprep.subr.bf16.mxu0 0
      %2156 = vmatpush1.bf16.msra.mxu0 %v2139
      %2157 = vmatprep.subr.bf16.mxu0 0
      %2158 = vmatpush1.bf16.msra.mxu0 %v2140
      %2159 = vmatprep.subr.bf16.mxu0 0
      %2160 = vmatpush1.bf16.msra.mxu0 %v2141
      %2161 = vmatprep.subr.bf16.mxu0 0
      %2162 = vmatpush1.bf16.msra.mxu0 %v2142
      %2163 = vmatprep.subr.bf16.mxu0 0
      %2164 = vmatpush1.bf16.msra.mxu0 %v2143
      %2165 = vmatprep.subr.bf16.mxu0 0
      %2166 = vmatpush1.bf16.msra.mxu0 %v2144
      %2167 = vmatprep.subr.bf16.mxu0 0
      %2168 = vmatpush1.bf16.msra.mxu0 %v2145
      %2169 = vmatprep.subr.bf16.mxu0 0
      %2170 = vmatpush1.bf16.msra.mxu0 %v2146
      %2171 = vmatprep.subr.bf16.mxu0 0
      %2172 = vmatpush1.bf16.msra.mxu0 0
      %2173 = vmatprep.subr.bf16.mxu0 0
      %2174 = vmatpush1.bf16.msra.mxu0 0
      %2175 = vmatprep.subr.bf16.mxu0 0
      %2176 = vmatpush1.bf16.msra.mxu0 0
      %2177 = vmatprep.subr.bf16.mxu0 0
      %2178 = vmatpush1.bf16.msra.mxu0 0
      %2179 = vmatprep.subr.bf16.mxu0 0
      %2180 = vmatpush1.bf16.msra.mxu0 0
      %2181 = vmatprep.subr.bf16.mxu0 0
      %2182 = vmatpush1.bf16.msra.mxu0 0
      %2183 = vmatprep.subr.bf16.mxu0 0
      %2184 = vmatpush1.bf16.msra.mxu0 0
      %2185 = vmatprep.subr.bf16.mxu0 0
      %2186 = vmatpush1.bf16.msra.mxu0 0
      %2187 = vmatprep.mubr.bf16.mxu0 0
      %2188 = vmatmul.mubr.bf16.gmra.mrb[0].mxu0 %v2089
      %v2189 = vpop.f32.mrb[0].mxu0
      %v2190 = vadd.f32 0.0, %v2189
      %v2191 = vpop.f32.mrb[0].mxu0
      %v2192 = vpop.f32.mrb[0].mxu0
      %v2193 = vpop.f32.mrb[0].mxu0
      %2194 = vdwg.mxu0
      %v2195 = vadd.f32 %v1575, %v2190
      %s2196 = scalar_lea.vmem %s5, 1
      %v2197 = vld [vmem:[%s2196] sm:$0x1]
      %v2198 = vmul.f32 %v2195, %v2195
      %2199 = vadd.xlane.f32.xlu0 %v2198
      %v2200 = vpop.xlane.xlu0 %2199
      %v2201 = vmul.f32 %v2200, %v463
      %v2202 = vadd.f32 %v2201, 1e-05
      %v2203 = vrsqrt.pop %v2202
      %v2204 = vmul.f32 %v2195, %v2203
      %v2206 = vlaneseq
      %v2207 = vshrl.u32 %v2206, 7
      %v2208 = vsub.s32 0, %v2207
      %v2209 = vrot.slane %v2197, %v2208
      %v2211 = vmul.f32 %v2204, %v2209
      %v2212 = vpack.c.bf16 %v2211, %v2211
      %s2213 = scalar_lea.vmem %s8, 256
      %v2214 = vld [vmem:[%s2213] sm:$0xff]
      %v2215 = vld [vmem:[%s2213 + $0x8] sm:$0xff]
      %v2216 = vld [vmem:[%s2213 + $0x10] sm:$0xff]
      %v2217 = vld [vmem:[%s2213 + $0x18] sm:$0xff]
      %v2218 = vld [vmem:[%s2213 + $0x20] sm:$0xff]
      %v2219 = vld [vmem:[%s2213 + $0x28] sm:$0xff]
      %v2220 = vld [vmem:[%s2213 + $0x30] sm:$0xff]
      %v2221 = vld [vmem:[%s2213 + $0x38] sm:$0xff]
      %v2222 = vld [vmem:[%s2213 + $0x40] sm:$0xff]
      %v2223 = vld [vmem:[%s2213 + $0x48] sm:$0xff]
      %v2224 = vld [vmem:[%s2213 + $0x50] sm:$0xff]
      %v2225 = vld [vmem:[%s2213 + $0x58] sm:$0xff]
      %v2226 = vld [vmem:[%s2213 + $0x60] sm:$0xff]
      %v2227 = vld [vmem:[%s2213 + $0x68] sm:$0xff]
      %v2228 = vld [vmem:[%s2213 + $0x70] sm:$0xff]
      %v2229 = vld [vmem:[%s2213 + $0x78] sm:$0xff]
      %v2230 = vld [vmem:[%s2213 + $0x80] sm:$0xff]
      %v2231 = vld [vmem:[%s2213 + $0x88] sm:$0xff]
      %v2232 = vld [vmem:[%s2213 + $0x90] sm:$0xff]
      %v2233 = vld [vmem:[%s2213 + $0x98] sm:$0xff]
      %v2234 = vld [vmem:[%s2213 + $0xa0] sm:$0xff]
      %v2235 = vld [vmem:[%s2213 + $0xa8] sm:$0xff]
      %v2236 = vld [vmem:[%s2213 + $0xb0] sm:$0xff]
      %v2237 = vld [vmem:[%s2213 + $0xb8] sm:$0xff]
      %v2238 = vld [vmem:[%s2213 + $0xc0] sm:$0xff]
      %v2239 = vld [vmem:[%s2213 + $0xc8] sm:$0xff]
      %v2240 = vld [vmem:[%s2213 + $0xd0] sm:$0xff]
      %v2241 = vld [vmem:[%s2213 + $0xd8] sm:$0xff]
      %v2242 = vld [vmem:[%s2213 + $0xe0] sm:$0xff]
      %v2243 = vld [vmem:[%s2213 + $0xe8] sm:$0xff]
      %v2244 = vld [vmem:[%s2213 + $0xf0] sm:$0xff]
      %v2245 = vld [vmem:[%s2213 + $0xf8] sm:$0xff]
      %v2278 = vunpack.c.l.b16 %v2214
      %v2279 = vunpack.c.h.b16 %v2214
      %v2280 = vunpack.c.l.b16 %v2215
      %v2281 = vunpack.c.h.b16 %v2215
      %v2282 = vunpack.c.l.b16 %v2216
      %v2283 = vunpack.c.h.b16 %v2216
      %v2284 = vunpack.c.l.b16 %v2217
      %v2285 = vunpack.c.h.b16 %v2217
      %v2286 = vunpack.c.l.b16 %v2218
      %v2287 = vunpack.c.h.b16 %v2218
      %v2288 = vunpack.c.l.b16 %v2219
      %v2289 = vunpack.c.h.b16 %v2219
      %v2290 = vunpack.c.l.b16 %v2220
      %v2291 = vunpack.c.h.b16 %v2220
      %v2292 = vunpack.c.l.b16 %v2221
      %v2293 = vunpack.c.h.b16 %v2221
      %v2294 = vunpack.c.l.b16 %v2222
      %v2295 = vunpack.c.h.b16 %v2222
      %v2296 = vunpack.c.l.b16 %v2223
      %v2297 = vunpack.c.h.b16 %v2223
      %v2298 = vunpack.c.l.b16 %v2224
      %v2299 = vunpack.c.h.b16 %v2224
      %v2300 = vunpack.c.l.b16 %v2225
      %v2301 = vunpack.c.h.b16 %v2225
      %v2302 = vunpack.c.l.b16 %v2226
      %v2303 = vunpack.c.h.b16 %v2226
      %v2304 = vunpack.c.l.b16 %v2227
      %v2305 = vunpack.c.h.b16 %v2227
      %v2306 = vunpack.c.l.b16 %v2228
      %v2307 = vunpack.c.h.b16 %v2228
      %v2308 = vunpack.c.l.b16 %v2229
      %v2309 = vunpack.c.h.b16 %v2229
      %v2310 = vunpack.c.l.b16 %v2230
      %v2311 = vunpack.c.h.b16 %v2230
      %v2312 = vunpack.c.l.b16 %v2231
      %v2313 = vunpack.c.h.b16 %v2231
      %v2314 = vunpack.c.l.b16 %v2232
      %v2315 = vunpack.c.h.b16 %v2232
      %v2316 = vunpack.c.l.b16 %v2233
      %v2317 = vunpack.c.h.b16 %v2233
      %v2318 = vunpack.c.l.b16 %v2234
      %v2319 = vunpack.c.h.b16 %v2234
      %v2320 = vunpack.c.l.b16 %v2235
      %v2321 = vunpack.c.h.b16 %v2235
      %v2322 = vunpack.c.l.b16 %v2236
      %v2323 = vunpack.c.h.b16 %v2236
      %v2324 = vunpack.c.l.b16 %v2237
      %v2325 = vunpack.c.h.b16 %v2237
      %v2326 = vunpack.c.l.b16 %v2238
      %v2327 = vunpack.c.h.b16 %v2238
      %v2328 = vunpack.c.l.b16 %v2239
      %v2329 = vunpack.c.h.b16 %v2239
      %v2330 = vunpack.c.l.b16 %v2240
      %v2331 = vunpack.c.h.b16 %v2240
      %v2332 = vunpack.c.l.b16 %v2241
      %v2333 = vunpack.c.h.b16 %v2241
      %v2334 = vunpack.c.l.b16 %v2242
      %v2335 = vunpack.c.h.b16 %v2242
      %v2336 = vunpack.c.l.b16 %v2243
      %v2337 = vunpack.c.h.b16 %v2243
      %v2338 = vunpack.c.l.b16 %v2244
      %v2339 = vunpack.c.h.b16 %v2244
      %v2340 = vunpack.c.l.b16 %v2245
      %v2341 = vunpack.c.h.b16 %v2245
      %v2342 = vpack.c.b16 %v2282, %v2278
      %v2343 = vpack.c.b16 %v2283, %v2279
      %v2344 = vpack.c.b16 %v2284, %v2280
      %v2345 = vpack.c.b16 %v2285, %v2281
      %v2346 = vpack.c.b16 %v2290, %v2286
      %v2347 = vpack.c.b16 %v2291, %v2287
      %v2348 = vpack.c.b16 %v2292, %v2288
      %v2349 = vpack.c.b16 %v2293, %v2289
      %v2350 = vpack.c.b16 %v2298, %v2294
      %v2351 = vpack.c.b16 %v2299, %v2295
      %v2352 = vpack.c.b16 %v2300, %v2296
      %v2353 = vpack.c.b16 %v2301, %v2297
      %v2354 = vpack.c.b16 %v2306, %v2302
      %v2355 = vpack.c.b16 %v2307, %v2303
      %v2356 = vpack.c.b16 %v2308, %v2304
      %v2357 = vpack.c.b16 %v2309, %v2305
      %v2358 = vpack.c.b16 %v2314, %v2310
      %v2359 = vpack.c.b16 %v2315, %v2311
      %v2360 = vpack.c.b16 %v2316, %v2312
      %v2361 = vpack.c.b16 %v2317, %v2313
      %v2362 = vpack.c.b16 %v2322, %v2318
      %v2363 = vpack.c.b16 %v2323, %v2319
      %v2364 = vpack.c.b16 %v2324, %v2320
      %v2365 = vpack.c.b16 %v2325, %v2321
      %v2366 = vpack.c.b16 %v2330, %v2326
      %v2367 = vpack.c.b16 %v2331, %v2327
      %v2368 = vpack.c.b16 %v2332, %v2328
      %v2369 = vpack.c.b16 %v2333, %v2329
      %v2370 = vpack.c.b16 %v2338, %v2334
      %v2371 = vpack.c.b16 %v2339, %v2335
      %v2372 = vpack.c.b16 %v2340, %v2336
      %v2373 = vpack.c.b16 %v2341, %v2337
      %2406 = vmatprep.subr.bf16.mxu0 %v2343
      %2407 = vmatpush1.bf16.msra.mxu0 %v2342
      %2408 = vmatprep.subr.bf16.mxu0 %v2347
      %2409 = vmatpush1.bf16.msra.mxu0 %v2346
      %2410 = vmatprep.subr.bf16.mxu0 %v2351
      %2411 = vmatpush1.bf16.msra.mxu0 %v2350
      %2412 = vmatprep.subr.bf16.mxu0 %v2355
      %2413 = vmatpush1.bf16.msra.mxu0 %v2354
      %2414 = vmatprep.subr.bf16.mxu0 %v2359
      %2415 = vmatpush1.bf16.msra.mxu0 %v2358
      %2416 = vmatprep.subr.bf16.mxu0 %v2363
      %2417 = vmatpush1.bf16.msra.mxu0 %v2362
      %2418 = vmatprep.subr.bf16.mxu0 %v2367
      %2419 = vmatpush1.bf16.msra.mxu0 %v2366
      %2420 = vmatprep.subr.bf16.mxu0 %v2371
      %2421 = vmatpush1.bf16.msra.mxu0 %v2370
      %2422 = vmatprep.subr.bf16.mxu0 0
      %2423 = vmatpush1.bf16.msra.mxu0 0
      %2424 = vmatprep.subr.bf16.mxu0 0
      %2425 = vmatpush1.bf16.msra.mxu0 0
      %2426 = vmatprep.subr.bf16.mxu0 0
      %2427 = vmatpush1.bf16.msra.mxu0 0
      %2428 = vmatprep.subr.bf16.mxu0 0
      %2429 = vmatpush1.bf16.msra.mxu0 0
      %2430 = vmatprep.subr.bf16.mxu0 0
      %2431 = vmatpush1.bf16.msra.mxu0 0
      %2432 = vmatprep.subr.bf16.mxu0 0
      %2433 = vmatpush1.bf16.msra.mxu0 0
      %2434 = vmatprep.subr.bf16.mxu0 0
      %2435 = vmatpush1.bf16.msra.mxu0 0
      %2436 = vmatprep.subr.bf16.mxu0 0
      %2437 = vmatpush1.bf16.msra.mxu0 0
      %2438 = vmatprep.mubr.bf16.mxu0 0
      %2439 = vmatmul.mubr.bf16.gmra.mrb[0].mxu0 %v2212
      %v2440 = vpop.f32.mrb[0].mxu0
      %v2441 = vadd.f32 0.0, %v2440
      %v2442 = vpop.f32.mrb[0].mxu0
      %v2443 = vadd.f32 0.0, %v2442
      %v2444 = vpop.f32.mrb[0].mxu0
      %v2445 = vpop.f32.mrb[0].mxu0
      %2446 = vdwg.mxu0
      %2447 = vmatprep.subr.bf16.mxu0 %v2345
      %2448 = vmatpush1.bf16.msra.mxu0 %v2344
      %2449 = vmatprep.subr.bf16.mxu0 %v2349
      %2450 = vmatpush1.bf16.msra.mxu0 %v2348
      %2451 = vmatprep.subr.bf16.mxu0 %v2353
      %2452 = vmatpush1.bf16.msra.mxu0 %v2352
      %2453 = vmatprep.subr.bf16.mxu0 %v2357
      %2454 = vmatpush1.bf16.msra.mxu0 %v2356
      %2455 = vmatprep.subr.bf16.mxu0 %v2361
      %2456 = vmatpush1.bf16.msra.mxu0 %v2360
      %2457 = vmatprep.subr.bf16.mxu0 %v2365
      %2458 = vmatpush1.bf16.msra.mxu0 %v2364
      %2459 = vmatprep.subr.bf16.mxu0 %v2369
      %2460 = vmatpush1.bf16.msra.mxu0 %v2368
      %2461 = vmatprep.subr.bf16.mxu0 %v2373
      %2462 = vmatpush1.bf16.msra.mxu0 %v2372
      %2463 = vmatprep.subr.bf16.mxu0 0
      %2464 = vmatpush1.bf16.msra.mxu0 0
      %2465 = vmatprep.subr.bf16.mxu0 0
      %2466 = vmatpush1.bf16.msra.mxu0 0
      %2467 = vmatprep.subr.bf16.mxu0 0
      %2468 = vmatpush1.bf16.msra.mxu0 0
      %2469 = vmatprep.subr.bf16.mxu0 0
      %2470 = vmatpush1.bf16.msra.mxu0 0
      %2471 = vmatprep.subr.bf16.mxu0 0
      %2472 = vmatpush1.bf16.msra.mxu0 0
      %2473 = vmatprep.subr.bf16.mxu0 0
      %2474 = vmatpush1.bf16.msra.mxu0 0
      %2475 = vmatprep.subr.bf16.mxu0 0
      %2476 = vmatpush1.bf16.msra.mxu0 0
      %2477 = vmatprep.subr.bf16.mxu0 0
      %2478 = vmatpush1.bf16.msra.mxu0 0
      %2479 = vmatprep.mubr.bf16.mxu0 0
      %2480 = vmatmul.mubr.bf16.gmra.mrb[0].mxu0 %v2212
      %v2481 = vpop.f32.mrb[0].mxu0
      %v2482 = vadd.f32 0.0, %v2481
      %v2483 = vpop.f32.mrb[0].mxu0
      %v2484 = vadd.f32 0.0, %v2483
      %v2485 = vpop.f32.mrb[0].mxu0
      %v2486 = vpop.f32.mrb[0].mxu0
      %2487 = vdwg.mxu0
      %v2488 = vsub.f32 0.0, %v2441
      %v2489 = vsub.f32 0.0, %v2443
      %v2490 = vmul.f32 %v2488, 1.442695
      %v2491 = vpow.pop %v2490
      %v2492 = vmul.f32 %v2489, 1.442695
      %v2493 = vpow.pop %v2492
      %v2494 = vadd.f32 %v2491, 1.0
      %v2495 = vadd.f32 %v2493, 1.0
      %v2496 = vrcp.pop %v2494
      %v2497 = vrcp.pop %v2495
      %v2498 = vmul.f32 %v2441, %v2496
      %v2499 = vmul.f32 %v2443, %v2497
      %v2500 = vmul.f32 %v2498, %v2482
      %v2501 = vmul.f32 %v2499, %v2484
      %v2502 = vpack.c.bf16 %v2500, %v2500
      %v2503 = vpack.c.bf16 %v2501, %v2501
      %s2504 = scalar_lea.vmem %s9, 128
      %v2505 = vld [vmem:[%s2504] sm:$0xf]
      %v2506 = vld [vmem:[%s2504 + $0x4] sm:$0xf]
      %v2507 = vld [vmem:[%s2504 + $0x8] sm:$0xf]
      %v2508 = vld [vmem:[%s2504 + $0xc] sm:$0xf]
      %v2509 = vld [vmem:[%s2504 + $0x10] sm:$0xf]
      %v2510 = vld [vmem:[%s2504 + $0x14] sm:$0xf]
      %v2511 = vld [vmem:[%s2504 + $0x18] sm:$0xf]
      %v2512 = vld [vmem:[%s2504 + $0x1c] sm:$0xf]
      %v2513 = vld [vmem:[%s2504 + $0x20] sm:$0xf]
      %v2514 = vld [vmem:[%s2504 + $0x24] sm:$0xf]
      %v2515 = vld [vmem:[%s2504 + $0x28] sm:$0xf]
      %v2516 = vld [vmem:[%s2504 + $0x2c] sm:$0xf]
      %v2517 = vld [vmem:[%s2504 + $0x30] sm:$0xf]
      %v2518 = vld [vmem:[%s2504 + $0x34] sm:$0xf]
      %v2519 = vld [vmem:[%s2504 + $0x38] sm:$0xf]
      %v2520 = vld [vmem:[%s2504 + $0x3c] sm:$0xf]
      %v2521 = vld [vmem:[%s2504 + $0x40] sm:$0xf]
      %v2522 = vld [vmem:[%s2504 + $0x44] sm:$0xf]
      %v2523 = vld [vmem:[%s2504 + $0x48] sm:$0xf]
      %v2524 = vld [vmem:[%s2504 + $0x4c] sm:$0xf]
      %v2525 = vld [vmem:[%s2504 + $0x50] sm:$0xf]
      %v2526 = vld [vmem:[%s2504 + $0x54] sm:$0xf]
      %v2527 = vld [vmem:[%s2504 + $0x58] sm:$0xf]
      %v2528 = vld [vmem:[%s2504 + $0x5c] sm:$0xf]
      %v2529 = vld [vmem:[%s2504 + $0x60] sm:$0xf]
      %v2530 = vld [vmem:[%s2504 + $0x64] sm:$0xf]
      %v2531 = vld [vmem:[%s2504 + $0x68] sm:$0xf]
      %v2532 = vld [vmem:[%s2504 + $0x6c] sm:$0xf]
      %v2533 = vld [vmem:[%s2504 + $0x70] sm:$0xf]
      %v2534 = vld [vmem:[%s2504 + $0x74] sm:$0xf]
      %v2535 = vld [vmem:[%s2504 + $0x78] sm:$0xf]
      %v2536 = vld [vmem:[%s2504 + $0x7c] sm:$0xf]
      %v2569 = vunpack.c.l.b16 %v2505
      %v2570 = vunpack.c.l.b16 %v2506
      %v2571 = vunpack.c.l.b16 %v2507
      %v2572 = vunpack.c.l.b16 %v2508
      %v2573 = vunpack.c.l.b16 %v2509
      %v2574 = vunpack.c.l.b16 %v2510
      %v2575 = vunpack.c.l.b16 %v2511
      %v2576 = vunpack.c.l.b16 %v2512
      %v2577 = vunpack.c.l.b16 %v2513
      %v2578 = vunpack.c.l.b16 %v2514
      %v2579 = vunpack.c.l.b16 %v2515
      %v2580 = vunpack.c.l.b16 %v2516
      %v2581 = vunpack.c.l.b16 %v2517
      %v2582 = vunpack.c.l.b16 %v2518
      %v2583 = vunpack.c.l.b16 %v2519
      %v2584 = vunpack.c.l.b16 %v2520
      %v2585 = vunpack.c.l.b16 %v2521
      %v2586 = vunpack.c.l.b16 %v2522
      %v2587 = vunpack.c.l.b16 %v2523
      %v2588 = vunpack.c.l.b16 %v2524
      %v2589 = vunpack.c.l.b16 %v2525
      %v2590 = vunpack.c.l.b16 %v2526
      %v2591 = vunpack.c.l.b16 %v2527
      %v2592 = vunpack.c.l.b16 %v2528
      %v2593 = vunpack.c.l.b16 %v2529
      %v2594 = vunpack.c.l.b16 %v2530
      %v2595 = vunpack.c.l.b16 %v2531
      %v2596 = vunpack.c.l.b16 %v2532
      %v2597 = vunpack.c.l.b16 %v2533
      %v2598 = vunpack.c.l.b16 %v2534
      %v2599 = vunpack.c.l.b16 %v2535
      %v2600 = vunpack.c.l.b16 %v2536
      %v2601 = vpack.c.b16 %v2570, %v2569
      %v2602 = vpack.c.b16 %v2572, %v2571
      %v2603 = vpack.c.b16 %v2574, %v2573
      %v2604 = vpack.c.b16 %v2576, %v2575
      %v2605 = vpack.c.b16 %v2578, %v2577
      %v2606 = vpack.c.b16 %v2580, %v2579
      %v2607 = vpack.c.b16 %v2582, %v2581
      %v2608 = vpack.c.b16 %v2584, %v2583
      %v2609 = vpack.c.b16 %v2586, %v2585
      %v2610 = vpack.c.b16 %v2588, %v2587
      %v2611 = vpack.c.b16 %v2590, %v2589
      %v2612 = vpack.c.b16 %v2592, %v2591
      %v2613 = vpack.c.b16 %v2594, %v2593
      %v2614 = vpack.c.b16 %v2596, %v2595
      %v2615 = vpack.c.b16 %v2598, %v2597
      %v2616 = vpack.c.b16 %v2600, %v2599
      %2633 = vmatprep.subr.bf16.mxu0 0
      %2634 = vmatpush1.bf16.msra.mxu0 %v2601
      %2635 = vmatprep.subr.bf16.mxu0 0
      %2636 = vmatpush1.bf16.msra.mxu0 %v2602
      %2637 = vmatprep.subr.bf16.mxu0 0
      %2638 = vmatpush1.bf16.msra.mxu0 %v2603
      %2639 = vmatprep.subr.bf16.mxu0 0
      %2640 = vmatpush1.bf16.msra.mxu0 %v2604
      %2641 = vmatprep.subr.bf16.mxu0 0
      %2642 = vmatpush1.bf16.msra.mxu0 %v2605
      %2643 = vmatprep.subr.bf16.mxu0 0
      %2644 = vmatpush1.bf16.msra.mxu0 %v2606
      %2645 = vmatprep.subr.bf16.mxu0 0
      %2646 = vmatpush1.bf16.msra.mxu0 %v2607
      %2647 = vmatprep.subr.bf16.mxu0 0
      %2648 = vmatpush1.bf16.msra.mxu0 %v2608
      %2649 = vmatprep.subr.bf16.mxu0 0
      %2650 = vmatpush1.bf16.msra.mxu0 %v2609
      %2651 = vmatprep.subr.bf16.mxu0 0
      %2652 = vmatpush1.bf16.msra.mxu0 %v2610
      %2653 = vmatprep.subr.bf16.mxu0 0
      %2654 = vmatpush1.bf16.msra.mxu0 %v2611
      %2655 = vmatprep.subr.bf16.mxu0 0
      %2656 = vmatpush1.bf16.msra.mxu0 %v2612
      %2657 = vmatprep.subr.bf16.mxu0 0
      %2658 = vmatpush1.bf16.msra.mxu0 %v2613
      %2659 = vmatprep.subr.bf16.mxu0 0
      %2660 = vmatpush1.bf16.msra.mxu0 %v2614
      %2661 = vmatprep.subr.bf16.mxu0 0
      %2662 = vmatpush1.bf16.msra.mxu0 %v2615
      %2663 = vmatprep.subr.bf16.mxu0 0
      %2664 = vmatpush1.bf16.msra.mxu0 %v2616
      %2665 = vmatprep.mubr.bf16.mxu0 %v2503
      %2666 = vmatmul.mubr.bf16.gmra.mrb[0].mxu0 %v2502
      %v2667 = vpop.f32.mrb[0].mxu0
      %v2668 = vadd.f32 0.0, %v2667
      %v2669 = vpop.f32.mrb[0].mxu0
      %v2670 = vpop.f32.mrb[0].mxu0
      %v2671 = vpop.f32.mrb[0].mxu0
      %2672 = vdwg.mxu0
      %v2673 = vadd.f32 %v2195, %v2668
      %s2674 = scalar_lea.vmem %s4, 2
      %v2675 = vld [vmem:[%s2674] sm:$0x1]
      %v2676 = vmul.f32 %v2673, %v2673
      %2677 = vadd.xlane.f32.xlu0 %v2676
      %v2678 = vpop.xlane.xlu0 %2677
      %v2679 = vmul.f32 %v2678, %v463
      %v2680 = vadd.f32 %v2679, 1e-05
      %v2681 = vrsqrt.pop %v2680
      %v2682 = vmul.f32 %v2673, %v2681
      %v2684 = vlaneseq
      %v2685 = vshrl.u32 %v2684, 7
      %v2686 = vsub.s32 0, %v2685
      %v2687 = vrot.slane %v2675, %v2686
      %v2689 = vmul.f32 %v2682, %v2687
      %v2690 = vpack.c.bf16 %v2689, %v2689
      %s2691 = scalar_lea.vmem %s6, 256
      %v2692 = vld [vmem:[%s2691] sm:$0xff]
      %v2693 = vld [vmem:[%s2691 + $0x8] sm:$0xff]
      %v2694 = vld [vmem:[%s2691 + $0x10] sm:$0xff]
      %v2695 = vld [vmem:[%s2691 + $0x18] sm:$0xff]
      %v2696 = vld [vmem:[%s2691 + $0x20] sm:$0xff]
      %v2697 = vld [vmem:[%s2691 + $0x28] sm:$0xff]
      %v2698 = vld [vmem:[%s2691 + $0x30] sm:$0xff]
      %v2699 = vld [vmem:[%s2691 + $0x38] sm:$0xff]
      %v2700 = vld [vmem:[%s2691 + $0x40] sm:$0xff]
      %v2701 = vld [vmem:[%s2691 + $0x48] sm:$0xff]
      %v2702 = vld [vmem:[%s2691 + $0x50] sm:$0xff]
      %v2703 = vld [vmem:[%s2691 + $0x58] sm:$0xff]
      %v2704 = vld [vmem:[%s2691 + $0x60] sm:$0xff]
      %v2705 = vld [vmem:[%s2691 + $0x68] sm:$0xff]
      %v2706 = vld [vmem:[%s2691 + $0x70] sm:$0xff]
      %v2707 = vld [vmem:[%s2691 + $0x78] sm:$0xff]
      %v2724 = vunpack.c.l.b16 %v2692
      %v2725 = vunpack.c.h.b16 %v2692
      %v2726 = vunpack.c.l.b16 %v2693
      %v2727 = vunpack.c.h.b16 %v2693
      %v2728 = vunpack.c.l.b16 %v2694
      %v2729 = vunpack.c.h.b16 %v2694
      %v2730 = vunpack.c.l.b16 %v2695
      %v2731 = vunpack.c.h.b16 %v2695
      %v2732 = vunpack.c.l.b16 %v2696
      %v2733 = vunpack.c.h.b16 %v2696
      %v2734 = vunpack.c.l.b16 %v2697
      %v2735 = vunpack.c.h.b16 %v2697
      %v2736 = vunpack.c.l.b16 %v2698
      %v2737 = vunpack.c.h.b16 %v2698
      %v2738 = vunpack.c.l.b16 %v2699
      %v2739 = vunpack.c.h.b16 %v2699
      %v2740 = vunpack.c.l.b16 %v2700
      %v2741 = vunpack.c.h.b16 %v2700
      %v2742 = vunpack.c.l.b16 %v2701
      %v2743 = vunpack.c.h.b16 %v2701
      %v2744 = vunpack.c.l.b16 %v2702
      %v2745 = vunpack.c.h.b16 %v2702
      %v2746 = vunpack.c.l.b16 %v2703
      %v2747 = vunpack.c.h.b16 %v2703
      %v2748 = vunpack.c.l.b16 %v2704
      %v2749 = vunpack.c.h.b16 %v2704
      %v2750 = vunpack.c.l.b16 %v2705
      %v2751 = vunpack.c.h.b16 %v2705
      %v2752 = vunpack.c.l.b16 %v2706
      %v2753 = vunpack.c.h.b16 %v2706
      %v2754 = vunpack.c.l.b16 %v2707
      %v2755 = vunpack.c.h.b16 %v2707
      %v2756 = vpack.c.b16 %v2726, %v2724
      %v2757 = vpack.c.b16 %v2727, %v2725
      %v2758 = vpack.c.b16 %v2730, %v2728
      %v2759 = vpack.c.b16 %v2731, %v2729
      %v2760 = vpack.c.b16 %v2734, %v2732
      %v2761 = vpack.c.b16 %v2735, %v2733
      %v2762 = vpack.c.b16 %v2738, %v2736
      %v2763 = vpack.c.b16 %v2739, %v2737
      %v2764 = vpack.c.b16 %v2742, %v2740
      %v2765 = vpack.c.b16 %v2743, %v2741
      %v2766 = vpack.c.b16 %v2746, %v2744
      %v2767 = vpack.c.b16 %v2747, %v2745
      %v2768 = vpack.c.b16 %v2750, %v2748
      %v2769 = vpack.c.b16 %v2751, %v2749
      %v2770 = vpack.c.b16 %v2754, %v2752
      %v2771 = vpack.c.b16 %v2755, %v2753
      %2788 = vmatprep.subr.bf16.mxu0 %v2757
      %2789 = vmatpush1.bf16.msra.mxu0 %v2756
      %2790 = vmatprep.subr.bf16.mxu0 %v2759
      %2791 = vmatpush1.bf16.msra.mxu0 %v2758
      %2792 = vmatprep.subr.bf16.mxu0 %v2761
      %2793 = vmatpush1.bf16.msra.mxu0 %v2760
      %2794 = vmatprep.subr.bf16.mxu0 %v2763
      %2795 = vmatpush1.bf16.msra.mxu0 %v2762
      %2796 = vmatprep.subr.bf16.mxu0 %v2765
      %2797 = vmatpush1.bf16.msra.mxu0 %v2764
      %2798 = vmatprep.subr.bf16.mxu0 %v2767
      %2799 = vmatpush1.bf16.msra.mxu0 %v2766
      %2800 = vmatprep.subr.bf16.mxu0 %v2769
      %2801 = vmatpush1.bf16.msra.mxu0 %v2768
      %2802 = vmatprep.subr.bf16.mxu0 %v2771
      %2803 = vmatpush1.bf16.msra.mxu0 %v2770
      %2804 = vmatprep.subr.bf16.mxu0 0
      %2805 = vmatpush1.bf16.msra.mxu0 0
      %2806 = vmatprep.subr.bf16.mxu0 0
      %2807 = vmatpush1.bf16.msra.mxu0 0
      %2808 = vmatprep.subr.bf16.mxu0 0
      %2809 = vmatpush1.bf16.msra.mxu0 0
      %2810 = vmatprep.subr.bf16.mxu0 0
      %2811 = vmatpush1.bf16.msra.mxu0 0
      %2812 = vmatprep.subr.bf16.mxu0 0
      %2813 = vmatpush1.bf16.msra.mxu0 0
      %2814 = vmatprep.subr.bf16.mxu0 0
      %2815 = vmatpush1.bf16.msra.mxu0 0
      %2816 = vmatprep.subr.bf16.mxu0 0
      %2817 = vmatpush1.bf16.msra.mxu0 0
      %2818 = vmatprep.subr.bf16.mxu0 0
      %2819 = vmatpush1.bf16.msra.mxu0 0
      %2820 = vmatprep.mubr.bf16.mxu0 0
      %2821 = vmatmul.mubr.bf16.gmra.mrb[0].mxu0 %v2690
      %v2822 = vpop.f32.mrb[0].mxu0
      %v2823 = vadd.f32 0.0, %v2822
      %v2824 = vpop.f32.mrb[0].mxu0
      %v2825 = vadd.f32 0.0, %v2824
      %v2826 = vpop.f32.mrb[0].mxu0
      %v2827 = vpop.f32.mrb[0].mxu0
      %2828 = vdwg.mxu0
      %2830 = vrot.lane.b32.xlu0 %v2823, 96
      %v2831 = vpop.permute.xlu0 %2830
      %v2833 = vsub.f32 0.0, %v2823
      %v2834 = vsub.f32 0.0, %v2831
      %2837 = vrot.lane.b32.xlu0 %v2833, 112
      %v2838 = vpop.permute.xlu0 %2837
      %2839 = vrot.lane.b32.xlu0 %v2834, 112
      %v2840 = vpop.permute.xlu0 %2839
      %2843 = vrot.lane.b32.xlu0 %v2823, 16
      %v2844 = vpop.permute.xlu0 %2843
      %2845 = vrot.lane.b32.xlu0 %v2831, 16
      %v2846 = vpop.permute.xlu0 %2845
      %v2849 = vsel %vm633, %v2838, %v2844
      %v2850 = vsel %vm633, %v2840, %v2846
      %v2851 = vmul.f32 %v2823, %v455
      %v2852 = vmul.f32 %v2831, %v456
      %v2853 = vmul.f32 %v2849, %v457
      %v2854 = vmul.f32 %v2850, %v458
      %v2855 = vadd.f32 %v2851, %v2853
      %v2856 = vadd.f32 %v2852, %v2854
      %v2857 = vpack.c.bf16 %v2856, %v2855
      %v2858 = vsub.f32 0.0, %v2825
      %2860 = vrot.lane.b32.xlu0 %v2858, 112
      %v2861 = vpop.permute.xlu0 %2860
      %2864 = vrot.lane.b32.xlu0 %v2825, 16
      %v2865 = vpop.permute.xlu0 %2864
      %v2867 = vsel %vm633, %v2861, %v2865
      %v2868 = vmul.f32 %v2825, %v455
      %v2869 = vmul.f32 %v2867, %v457
      %v2870 = vadd.f32 %v2868, %v2869
      %v2871 = vpack.c.bf16 %v2870, %v2870
      %v2872 = vpack.c.bf16 %v2825, %v2825
      %v2874 = vsel %vm658, %v2857, 0
      %v2877 = vsel %vm658, %v2871, 0
      %2879 = vmatprep.subr.bf16.mxu0 0
      %2880 = vmatpush1.bf16.xpose.msra.mxu0 %v2877
      %2881 = vmatprep.subr.bf16.mxu0 0
      %2882 = vmatpush1.bf16.xpose.msra.mxu0 0
      %2883 = vmatprep.subr.bf16.mxu0 0
      %2884 = vmatpush1.bf16.xpose.msra.mxu0 0
      %2885 = vmatprep.subr.bf16.mxu0 0
      %2886 = vmatpush1.bf16.xpose.msra.mxu0 0
      %2887 = vmatprep.subr.bf16.mxu0 0
      %2888 = vmatpush1.bf16.xpose.msra.mxu0 0
      %2889 = vmatprep.subr.bf16.mxu0 0
      %2890 = vmatpush1.bf16.xpose.msra.mxu0 0
      %2891 = vmatprep.subr.bf16.mxu0 0
      %2892 = vmatpush1.bf16.xpose.msra.mxu0 0
      %2893 = vmatprep.subr.bf16.mxu0 0
      %2894 = vmatpush1.bf16.xpose.msra.mxu0 0
      %2895 = vmatprep.subr.bf16.mxu0 0
      %2896 = vmatpush1.bf16.xpose.msra.mxu0 0
      %2897 = vmatprep.subr.bf16.mxu0 0
      %2898 = vmatpush1.bf16.xpose.msra.mxu0 0
      %2899 = vmatprep.subr.bf16.mxu0 0
      %2900 = vmatpush1.bf16.xpose.msra.mxu0 0
      %2901 = vmatprep.subr.bf16.mxu0 0
      %2902 = vmatpush1.bf16.xpose.msra.mxu0 0
      %2903 = vmatprep.subr.bf16.mxu0 0
      %2904 = vmatpush1.bf16.xpose.msra.mxu0 0
      %2905 = vmatprep.subr.bf16.mxu0 0
      %2906 = vmatpush1.bf16.xpose.msra.mxu0 0
      %2907 = vmatprep.subr.bf16.mxu0 0
      %2908 = vmatpush1.bf16.xpose.msra.mxu0 0
      %2909 = vmatprep.subr.bf16.mxu0 0
      %2910 = vmatpush1.bf16.xpose.msra.mxu0 0
      %2911 = vmatprep.mubr.bf16.mxu0 0
      %2912 = vmatmul.mubr.bf16.gmra.mrb[0].mxu0 %v2874
      %v2913 = vpop.f32.mrb[0].mxu0
      %v2914 = vadd.f32 0.0, %v2913
      %v2915 = vpop.f32.mrb[0].mxu0
      %v2916 = vpop.f32.mrb[0].mxu0
      %v2917 = vadd.f32 0.0, %v2916
      %v2918 = vpop.f32.mrb[0].mxu0
      %2919 = vdwg.mxu0
      %v2920 = vmul.f32 %v2914, 0.17677669
      %v2921 = vmul.f32 %v2917, 0.17677669
      %v2922 = vadd.f32 %v2920, %v712
      %v2923 = vadd.f32 %v2921, %v712
      %v2924 = vsel %vm716, %v2922, -inf
      %2925 = vmax.xlane.f32.xlu0 %v2924
      %v2926 = vpop.xlane.xlu0 %2925
      %v2927 = vsel %vm716, %v2923, -inf
      %2928 = vmax.xlane.f32.xlu0 %v2927
      %v2929 = vpop.xlane.xlu0 %2928
      %v2930 = vsub.f32 %v2922, %v2926
      %v2931 = vsub.f32 %v2923, %v2929
      %v2932 = vmul.f32 %v2930, 1.442695
      %v2933 = vpow.pop %v2932
      %v2934 = vmul.f32 %v2931, 1.442695
      %v2935 = vpow.pop %v2934
      %v2936 = vsel %vm716, %v2933, 0.0
      %2937 = vadd.xlane.f32.xlu0 %v2936
      %v2938 = vpop.xlane.xlu0 %2937
      %v2939 = vsel %vm716, %v2935, 0.0
      %2940 = vadd.xlane.f32.xlu0 %v2939
      %v2941 = vpop.xlane.xlu0 %2940
      %v2942 = vrcp.pop %v2938
      %v2943 = vmul.f32 %v2933, %v2942
      %v2944 = vrcp.pop %v2941
      %v2945 = vmul.f32 %v2935, %v2944
      %v2946 = vpack.c.bf16 %v2945, %v2943
      %2948 = vrot.lane.b32.xlu0 %v2872, 64
      %v2949 = vpop.permute.xlu0 %2948
      %v2951 = vsel %vm716, %v2946, 0
      %v2954 = vsel %vm746, %v2949, 0
      %2956 = vmatprep.subr.bf16.mxu0 0
      %2957 = vmatpush1.bf16.msra.mxu0 %v2954
      %2958 = vmatprep.subr.bf16.mxu0 0
      %2959 = vmatpush1.bf16.msra.mxu0 0
      %2960 = vmatprep.subr.bf16.mxu0 0
      %2961 = vmatpush1.bf16.msra.mxu0 0
      %2962 = vmatprep.subr.bf16.mxu0 0
      %2963 = vmatpush1.bf16.msra.mxu0 0
      %2964 = vmatprep.subr.bf16.mxu0 0
      %2965 = vmatpush1.bf16.msra.mxu0 0
      %2966 = vmatprep.subr.bf16.mxu0 0
      %2967 = vmatpush1.bf16.msra.mxu0 0
      %2968 = vmatprep.subr.bf16.mxu0 0
      %2969 = vmatpush1.bf16.msra.mxu0 0
      %2970 = vmatprep.subr.bf16.mxu0 0
      %2971 = vmatpush1.bf16.msra.mxu0 0
      %2972 = vmatprep.subr.bf16.mxu0 0
      %2973 = vmatpush1.bf16.msra.mxu0 0
      %2974 = vmatprep.subr.bf16.mxu0 0
      %2975 = vmatpush1.bf16.msra.mxu0 0
      %2976 = vmatprep.subr.bf16.mxu0 0
      %2977 = vmatpush1.bf16.msra.mxu0 0
      %2978 = vmatprep.subr.bf16.mxu0 0
      %2979 = vmatpush1.bf16.msra.mxu0 0
      %2980 = vmatprep.subr.bf16.mxu0 0
      %2981 = vmatpush1.bf16.msra.mxu0 0
      %2982 = vmatprep.subr.bf16.mxu0 0
      %2983 = vmatpush1.bf16.msra.mxu0 0
      %2984 = vmatprep.subr.bf16.mxu0 0
      %2985 = vmatpush1.bf16.msra.mxu0 0
      %2986 = vmatprep.subr.bf16.mxu0 0
      %2987 = vmatpush1.bf16.msra.mxu0 0
      %2988 = vmatprep.mubr.bf16.mxu0 0
      %2989 = vmatmul.mubr.bf16.gmra.mrb[0].mxu0 %v2951
      %v2990 = vpop.f32.mrb[0].mxu0
      %v2991 = vadd.f32 0.0, %v2990
      %v2992 = vpop.f32.mrb[0].mxu0
      %v2993 = vpop.f32.mrb[0].mxu0
      %v2994 = vadd.f32 0.0, %v2993
      %v2995 = vpop.f32.mrb[0].mxu0
      %2996 = vdwg.mxu0
      %2997 = vst.msk [vmem:[#allocation2] sm:$0xff] %vm658, %v2991
      %2999 = vrot.lane.b32.xlu0 %v2994, 32
      %v3000 = vpop.permute.xlu0 %2999
      %3002 = vst.msk [vmem:[#allocation2] sm:$0xff] %vm796, %v3000
      %3003 = vrot.lane.b32.xlu0 %v2833, 48
      %v3004 = vpop.permute.xlu0 %3003
      %3005 = vrot.lane.b32.xlu0 %v2834, 48
      %v3006 = vpop.permute.xlu0 %3005
      %3009 = vrot.lane.b32.xlu0 %v2823, 80
      %v3010 = vpop.permute.xlu0 %3009
      %3011 = vrot.lane.b32.xlu0 %v2831, 80
      %v3012 = vpop.permute.xlu0 %3011
      %v3015 = vsel %vm633, %v3004, %v3010
      %v3016 = vsel %vm633, %v3006, %v3012
      %v3017 = vmul.f32 %v2823, %v815
      %v3018 = vmul.f32 %v2831, %v817
      %v3019 = vmul.f32 %v3015, %v457
      %v3020 = vmul.f32 %v3016, %v458
      %3023 = vrot.lane.b32.xlu0 %v3019, 64
      %v3024 = vpop.permute.xlu0 %3023
      %3025 = vrot.lane.b32.xlu0 %v3020, 64
      %v3026 = vpop.permute.xlu0 %3025
      %v3029 = vadd.f32 %v3017, %v3024
      %v3030 = vadd.f32 %v3018, %v3026
      %v3031 = vpack.c.bf16 %v3030, %v3029
      %3032 = vrot.lane.b32.xlu0 %v2858, 80
      %v3033 = vpop.permute.xlu0 %3032
      %3035 = vrot.lane.b32.xlu0 %v2825, 112
      %v3036 = vpop.permute.xlu0 %3035
      %v3038 = vsel %vm633, %v3033, %v3036
      %v3039 = vmul.f32 %v2825, %v843
      %v3040 = vmul.f32 %v3038, %v457
      %3042 = vrot.lane.b32.xlu0 %v3040, 32
      %v3043 = vpop.permute.xlu0 %3042
      %v3045 = vadd.f32 %v3039, %v3043
      %v3046 = vpack.c.bf16 %v3045, %v3045
      %3048 = vrot.lane.b32.xlu0 %v3031, 64
      %v3049 = vpop.permute.xlu0 %3048
      %3051 = vrot.lane.b32.xlu0 %v3046, 96
      %v3052 = vpop.permute.xlu0 %3051
      %v3054 = vsel %vm658, %v3049, 0
      %v3057 = vsel %vm658, %v3052, 0
      %3059 = vmatprep.subr.bf16.mxu0 0
      %3060 = vmatpush1.bf16.xpose.msra.mxu0 %v3057
      %3061 = vmatprep.subr.bf16.mxu0 0
      %3062 = vmatpush1.bf16.xpose.msra.mxu0 0
      %3063 = vmatprep.subr.bf16.mxu0 0
      %3064 = vmatpush1.bf16.xpose.msra.mxu0 0
      %3065 = vmatprep.subr.bf16.mxu0 0
      %3066 = vmatpush1.bf16.xpose.msra.mxu0 0
      %3067 = vmatprep.subr.bf16.mxu0 0
      %3068 = vmatpush1.bf16.xpose.msra.mxu0 0
      %3069 = vmatprep.subr.bf16.mxu0 0
      %3070 = vmatpush1.bf16.xpose.msra.mxu0 0
      %3071 = vmatprep.subr.bf16.mxu0 0
      %3072 = vmatpush1.bf16.xpose.msra.mxu0 0
      %3073 = vmatprep.subr.bf16.mxu0 0
      %3074 = vmatpush1.bf16.xpose.msra.mxu0 0
      %3075 = vmatprep.subr.bf16.mxu0 0
      %3076 = vmatpush1.bf16.xpose.msra.mxu0 0
      %3077 = vmatprep.subr.bf16.mxu0 0
      %3078 = vmatpush1.bf16.xpose.msra.mxu0 0
      %3079 = vmatprep.subr.bf16.mxu0 0
      %3080 = vmatpush1.bf16.xpose.msra.mxu0 0
      %3081 = vmatprep.subr.bf16.mxu0 0
      %3082 = vmatpush1.bf16.xpose.msra.mxu0 0
      %3083 = vmatprep.subr.bf16.mxu0 0
      %3084 = vmatpush1.bf16.xpose.msra.mxu0 0
      %3085 = vmatprep.subr.bf16.mxu0 0
      %3086 = vmatpush1.bf16.xpose.msra.mxu0 0
      %3087 = vmatprep.subr.bf16.mxu0 0
      %3088 = vmatpush1.bf16.xpose.msra.mxu0 0
      %3089 = vmatprep.subr.bf16.mxu0 0
      %3090 = vmatpush1.bf16.xpose.msra.mxu0 0
      %3091 = vmatprep.mubr.bf16.mxu0 0
      %3092 = vmatmul.mubr.bf16.gmra.mrb[0].mxu0 %v3054
      %v3093 = vpop.f32.mrb[0].mxu0
      %v3094 = vadd.f32 0.0, %v3093
      %v3095 = vpop.f32.mrb[0].mxu0
      %v3096 = vpop.f32.mrb[0].mxu0
      %v3097 = vadd.f32 0.0, %v3096
      %v3098 = vpop.f32.mrb[0].mxu0
      %3099 = vdwg.mxu0
      %v3100 = vmul.f32 %v3094, 0.17677669
      %v3101 = vmul.f32 %v3097, 0.17677669
      %v3102 = vadd.f32 %v3100, %v712
      %v3103 = vadd.f32 %v3101, %v712
      %v3104 = vsel %vm716, %v3102, -inf
      %3105 = vmax.xlane.f32.xlu0 %v3104
      %v3106 = vpop.xlane.xlu0 %3105
      %v3107 = vsel %vm716, %v3103, -inf
      %3108 = vmax.xlane.f32.xlu0 %v3107
      %v3109 = vpop.xlane.xlu0 %3108
      %v3110 = vsub.f32 %v3102, %v3106
      %v3111 = vsub.f32 %v3103, %v3109
      %v3112 = vmul.f32 %v3110, 1.442695
      %v3113 = vpow.pop %v3112
      %v3114 = vmul.f32 %v3111, 1.442695
      %v3115 = vpow.pop %v3114
      %v3116 = vsel %vm716, %v3113, 0.0
      %3117 = vadd.xlane.f32.xlu0 %v3116
      %v3118 = vpop.xlane.xlu0 %3117
      %v3119 = vsel %vm716, %v3115, 0.0
      %3120 = vadd.xlane.f32.xlu0 %v3119
      %v3121 = vpop.xlane.xlu0 %3120
      %v3122 = vrcp.pop %v3118
      %v3123 = vmul.f32 %v3113, %v3122
      %v3124 = vrcp.pop %v3121
      %v3125 = vmul.f32 %v3115, %v3124
      %v3126 = vpack.c.bf16 %v3125, %v3123
      %3127 = vrot.lane.b32.xlu0 %v2872, 32
      %v3128 = vpop.permute.xlu0 %3127
      %v3130 = vsel %vm716, %v3126, 0
      %v3133 = vsel %vm746, %v3128, 0
      %3135 = vmatprep.subr.bf16.mxu0 0
      %3136 = vmatpush1.bf16.msra.mxu0 %v3133
      %3137 = vmatprep.subr.bf16.mxu0 0
      %3138 = vmatpush1.bf16.msra.mxu0 0
      %3139 = vmatprep.subr.bf16.mxu0 0
      %3140 = vmatpush1.bf16.msra.mxu0 0
      %3141 = vmatprep.subr.bf16.mxu0 0
      %3142 = vmatpush1.bf16.msra.mxu0 0
      %3143 = vmatprep.subr.bf16.mxu0 0
      %3144 = vmatpush1.bf16.msra.mxu0 0
      %3145 = vmatprep.subr.bf16.mxu0 0
      %3146 = vmatpush1.bf16.msra.mxu0 0
      %3147 = vmatprep.subr.bf16.mxu0 0
      %3148 = vmatpush1.bf16.msra.mxu0 0
      %3149 = vmatprep.subr.bf16.mxu0 0
      %3150 = vmatpush1.bf16.msra.mxu0 0
      %3151 = vmatprep.subr.bf16.mxu0 0
      %3152 = vmatpush1.bf16.msra.mxu0 0
      %3153 = vmatprep.subr.bf16.mxu0 0
      %3154 = vmatpush1.bf16.msra.mxu0 0
      %3155 = vmatprep.subr.bf16.mxu0 0
      %3156 = vmatpush1.bf16.msra.mxu0 0
      %3157 = vmatprep.subr.bf16.mxu0 0
      %3158 = vmatpush1.bf16.msra.mxu0 0
      %3159 = vmatprep.subr.bf16.mxu0 0
      %3160 = vmatpush1.bf16.msra.mxu0 0
      %3161 = vmatprep.subr.bf16.mxu0 0
      %3162 = vmatpush1.bf16.msra.mxu0 0
      %3163 = vmatprep.subr.bf16.mxu0 0
      %3164 = vmatpush1.bf16.msra.mxu0 0
      %3165 = vmatprep.subr.bf16.mxu0 0
      %3166 = vmatpush1.bf16.msra.mxu0 0
      %3167 = vmatprep.mubr.bf16.mxu0 0
      %3168 = vmatmul.mubr.bf16.gmra.mrb[0].mxu0 %v3130
      %v3169 = vpop.f32.mrb[0].mxu0
      %v3170 = vadd.f32 0.0, %v3169
      %v3171 = vpop.f32.mrb[0].mxu0
      %v3172 = vpop.f32.mrb[0].mxu0
      %v3173 = vadd.f32 0.0, %v3172
      %v3174 = vpop.f32.mrb[0].mxu0
      %3175 = vdwg.mxu0
      %3177 = vrot.lane.b32.xlu0 %v3170, 64
      %v3178 = vpop.permute.xlu0 %3177
      %3180 = vst.msk [vmem:[#allocation2] sm:$0xff] %vm986, %v3178
      %3182 = vrot.lane.b32.xlu0 %v3173, 96
      %v3183 = vpop.permute.xlu0 %3182
      %3185 = vst.msk [vmem:[#allocation2] sm:$0xff] %vm992, %v3183
      %v3186 = vld [vmem:[#allocation2] sm:$0xff]
      %v3187 = vpack.c.bf16 %v3186, %v3186
      %s3188 = scalar_lea.vmem %s7, 128
      %v3189 = vld [vmem:[%s3188] sm:$0xf]
      %v3190 = vld [vmem:[%s3188 + $0x4] sm:$0xf]
      %v3191 = vld [vmem:[%s3188 + $0x8] sm:$0xf]
      %v3192 = vld [vmem:[%s3188 + $0xc] sm:$0xf]
      %v3193 = vld [vmem:[%s3188 + $0x10] sm:$0xf]
      %v3194 = vld [vmem:[%s3188 + $0x14] sm:$0xf]
      %v3195 = vld [vmem:[%s3188 + $0x18] sm:$0xf]
      %v3196 = vld [vmem:[%s3188 + $0x1c] sm:$0xf]
      %v3197 = vld [vmem:[%s3188 + $0x20] sm:$0xf]
      %v3198 = vld [vmem:[%s3188 + $0x24] sm:$0xf]
      %v3199 = vld [vmem:[%s3188 + $0x28] sm:$0xf]
      %v3200 = vld [vmem:[%s3188 + $0x2c] sm:$0xf]
      %v3201 = vld [vmem:[%s3188 + $0x30] sm:$0xf]
      %v3202 = vld [vmem:[%s3188 + $0x34] sm:$0xf]
      %v3203 = vld [vmem:[%s3188 + $0x38] sm:$0xf]
      %v3204 = vld [vmem:[%s3188 + $0x3c] sm:$0xf]
      %v3221 = vunpack.c.l.b16 %v3189
      %v3222 = vunpack.c.l.b16 %v3190
      %v3223 = vunpack.c.l.b16 %v3191
      %v3224 = vunpack.c.l.b16 %v3192
      %v3225 = vunpack.c.l.b16 %v3193
      %v3226 = vunpack.c.l.b16 %v3194
      %v3227 = vunpack.c.l.b16 %v3195
      %v3228 = vunpack.c.l.b16 %v3196
      %v3229 = vunpack.c.l.b16 %v3197
      %v3230 = vunpack.c.l.b16 %v3198
      %v3231 = vunpack.c.l.b16 %v3199
      %v3232 = vunpack.c.l.b16 %v3200
      %v3233 = vunpack.c.l.b16 %v3201
      %v3234 = vunpack.c.l.b16 %v3202
      %v3235 = vunpack.c.l.b16 %v3203
      %v3236 = vunpack.c.l.b16 %v3204
      %v3237 = vpack.c.b16 %v3222, %v3221
      %v3238 = vpack.c.b16 %v3224, %v3223
      %v3239 = vpack.c.b16 %v3226, %v3225
      %v3240 = vpack.c.b16 %v3228, %v3227
      %v3241 = vpack.c.b16 %v3230, %v3229
      %v3242 = vpack.c.b16 %v3232, %v3231
      %v3243 = vpack.c.b16 %v3234, %v3233
      %v3244 = vpack.c.b16 %v3236, %v3235
      %3253 = vmatprep.subr.bf16.mxu0 0
      %3254 = vmatpush1.bf16.msra.mxu0 %v3237
      %3255 = vmatprep.subr.bf16.mxu0 0
      %3256 = vmatpush1.bf16.msra.mxu0 %v3238
      %3257 = vmatprep.subr.bf16.mxu0 0
      %3258 = vmatpush1.bf16.msra.mxu0 %v3239
      %3259 = vmatprep.subr.bf16.mxu0 0
      %3260 = vmatpush1.bf16.msra.mxu0 %v3240
      %3261 = vmatprep.subr.bf16.mxu0 0
      %3262 = vmatpush1.bf16.msra.mxu0 %v3241
      %3263 = vmatprep.subr.bf16.mxu0 0
      %3264 = vmatpush1.bf16.msra.mxu0 %v3242
      %3265 = vmatprep.subr.bf16.mxu0 0
      %3266 = vmatpush1.bf16.msra.mxu0 %v3243
      %3267 = vmatprep.subr.bf16.mxu0 0
      %3268 = vmatpush1.bf16.msra.mxu0 %v3244
      %3269 = vmatprep.subr.bf16.mxu0 0
      %3270 = vmatpush1.bf16.msra.mxu0 0
      %3271 = vmatprep.subr.bf16.mxu0 0
      %3272 = vmatpush1.bf16.msra.mxu0 0
      %3273 = vmatprep.subr.bf16.mxu0 0
      %3274 = vmatpush1.bf16.msra.mxu0 0
      %3275 = vmatprep.subr.bf16.mxu0 0
      %3276 = vmatpush1.bf16.msra.mxu0 0
      %3277 = vmatprep.subr.bf16.mxu0 0
      %3278 = vmatpush1.bf16.msra.mxu0 0
      %3279 = vmatprep.subr.bf16.mxu0 0
      %3280 = vmatpush1.bf16.msra.mxu0 0
      %3281 = vmatprep.subr.bf16.mxu0 0
      %3282 = vmatpush1.bf16.msra.mxu0 0
      %3283 = vmatprep.subr.bf16.mxu0 0
      %3284 = vmatpush1.bf16.msra.mxu0 0
      %3285 = vmatprep.mubr.bf16.mxu0 0
      %3286 = vmatmul.mubr.bf16.gmra.mrb[0].mxu0 %v3187
      %v3287 = vpop.f32.mrb[0].mxu0
      %v3288 = vadd.f32 0.0, %v3287
      %v3289 = vpop.f32.mrb[0].mxu0
      %v3290 = vpop.f32.mrb[0].mxu0
      %v3291 = vpop.f32.mrb[0].mxu0
      %3292 = vdwg.mxu0
      %v3293 = vadd.f32 %v2673, %v3288
      %s3294 = scalar_lea.vmem %s5, 2
      %v3295 = vld [vmem:[%s3294] sm:$0x1]
      %v3296 = vmul.f32 %v3293, %v3293
      %3297 = vadd.xlane.f32.xlu0 %v3296
      %v3298 = vpop.xlane.xlu0 %3297
      %v3299 = vmul.f32 %v3298, %v463
      %v3300 = vadd.f32 %v3299, 1e-05
      %v3301 = vrsqrt.pop %v3300
      %v3302 = vmul.f32 %v3293, %v3301
      %v3304 = vlaneseq
      %v3305 = vshrl.u32 %v3304, 7
      %v3306 = vsub.s32 0, %v3305
      %v3307 = vrot.slane %v3295, %v3306
      %v3309 = vmul.f32 %v3302, %v3307
      %v3310 = vpack.c.bf16 %v3309, %v3309
      %s3311 = scalar_lea.vmem %s8, 512
      %v3312 = vld [vmem:[%s3311] sm:$0xff]
      %v3313 = vld [vmem:[%s3311 + $0x8] sm:$0xff]
      %v3314 = vld [vmem:[%s3311 + $0x10] sm:$0xff]
      %v3315 = vld [vmem:[%s3311 + $0x18] sm:$0xff]
      %v3316 = vld [vmem:[%s3311 + $0x20] sm:$0xff]
      %v3317 = vld [vmem:[%s3311 + $0x28] sm:$0xff]
      %v3318 = vld [vmem:[%s3311 + $0x30] sm:$0xff]
      %v3319 = vld [vmem:[%s3311 + $0x38] sm:$0xff]
      %v3320 = vld [vmem:[%s3311 + $0x40] sm:$0xff]
      %v3321 = vld [vmem:[%s3311 + $0x48] sm:$0xff]
      %v3322 = vld [vmem:[%s3311 + $0x50] sm:$0xff]
      %v3323 = vld [vmem:[%s3311 + $0x58] sm:$0xff]
      %v3324 = vld [vmem:[%s3311 + $0x60] sm:$0xff]
      %v3325 = vld [vmem:[%s3311 + $0x68] sm:$0xff]
      %v3326 = vld [vmem:[%s3311 + $0x70] sm:$0xff]
      %v3327 = vld [vmem:[%s3311 + $0x78] sm:$0xff]
      %v3328 = vld [vmem:[%s3311 + $0x80] sm:$0xff]
      %v3329 = vld [vmem:[%s3311 + $0x88] sm:$0xff]
      %v3330 = vld [vmem:[%s3311 + $0x90] sm:$0xff]
      %v3331 = vld [vmem:[%s3311 + $0x98] sm:$0xff]
      %v3332 = vld [vmem:[%s3311 + $0xa0] sm:$0xff]
      %v3333 = vld [vmem:[%s3311 + $0xa8] sm:$0xff]
      %v3334 = vld [vmem:[%s3311 + $0xb0] sm:$0xff]
      %v3335 = vld [vmem:[%s3311 + $0xb8] sm:$0xff]
      %v3336 = vld [vmem:[%s3311 + $0xc0] sm:$0xff]
      %v3337 = vld [vmem:[%s3311 + $0xc8] sm:$0xff]
      %v3338 = vld [vmem:[%s3311 + $0xd0] sm:$0xff]
      %v3339 = vld [vmem:[%s3311 + $0xd8] sm:$0xff]
      %v3340 = vld [vmem:[%s3311 + $0xe0] sm:$0xff]
      %v3341 = vld [vmem:[%s3311 + $0xe8] sm:$0xff]
      %v3342 = vld [vmem:[%s3311 + $0xf0] sm:$0xff]
      %v3343 = vld [vmem:[%s3311 + $0xf8] sm:$0xff]
      %v3376 = vunpack.c.l.b16 %v3312
      %v3377 = vunpack.c.h.b16 %v3312
      %v3378 = vunpack.c.l.b16 %v3313
      %v3379 = vunpack.c.h.b16 %v3313
      %v3380 = vunpack.c.l.b16 %v3314
      %v3381 = vunpack.c.h.b16 %v3314
      %v3382 = vunpack.c.l.b16 %v3315
      %v3383 = vunpack.c.h.b16 %v3315
      %v3384 = vunpack.c.l.b16 %v3316
      %v3385 = vunpack.c.h.b16 %v3316
      %v3386 = vunpack.c.l.b16 %v3317
      %v3387 = vunpack.c.h.b16 %v3317
      %v3388 = vunpack.c.l.b16 %v3318
      %v3389 = vunpack.c.h.b16 %v3318
      %v3390 = vunpack.c.l.b16 %v3319
      %v3391 = vunpack.c.h.b16 %v3319
      %v3392 = vunpack.c.l.b16 %v3320
      %v3393 = vunpack.c.h.b16 %v3320
      %v3394 = vunpack.c.l.b16 %v3321
      %v3395 = vunpack.c.h.b16 %v3321
      %v3396 = vunpack.c.l.b16 %v3322
      %v3397 = vunpack.c.h.b16 %v3322
      %v3398 = vunpack.c.l.b16 %v3323
      %v3399 = vunpack.c.h.b16 %v3323
      %v3400 = vunpack.c.l.b16 %v3324
      %v3401 = vunpack.c.h.b16 %v3324
      %v3402 = vunpack.c.l.b16 %v3325
      %v3403 = vunpack.c.h.b16 %v3325
      %v3404 = vunpack.c.l.b16 %v3326
      %v3405 = vunpack.c.h.b16 %v3326
      %v3406 = vunpack.c.l.b16 %v3327
      %v3407 = vunpack.c.h.b16 %v3327
      %v3408 = vunpack.c.l.b16 %v3328
      %v3409 = vunpack.c.h.b16 %v3328
      %v3410 = vunpack.c.l.b16 %v3329
      %v3411 = vunpack.c.h.b16 %v3329
      %v3412 = vunpack.c.l.b16 %v3330
      %v3413 = vunpack.c.h.b16 %v3330
      %v3414 = vunpack.c.l.b16 %v3331
      %v3415 = vunpack.c.h.b16 %v3331
      %v3416 = vunpack.c.l.b16 %v3332
      %v3417 = vunpack.c.h.b16 %v3332
      %v3418 = vunpack.c.l.b16 %v3333
      %v3419 = vunpack.c.h.b16 %v3333
      %v3420 = vunpack.c.l.b16 %v3334
      %v3421 = vunpack.c.h.b16 %v3334
      %v3422 = vunpack.c.l.b16 %v3335
      %v3423 = vunpack.c.h.b16 %v3335
      %v3424 = vunpack.c.l.b16 %v3336
      %v3425 = vunpack.c.h.b16 %v3336
      %v3426 = vunpack.c.l.b16 %v3337
      %v3427 = vunpack.c.h.b16 %v3337
      %v3428 = vunpack.c.l.b16 %v3338
      %v3429 = vunpack.c.h.b16 %v3338
      %v3430 = vunpack.c.l.b16 %v3339
      %v3431 = vunpack.c.h.b16 %v3339
      %v3432 = vunpack.c.l.b16 %v3340
      %v3433 = vunpack.c.h.b16 %v3340
      %v3434 = vunpack.c.l.b16 %v3341
      %v3435 = vunpack.c.h.b16 %v3341
      %v3436 = vunpack.c.l.b16 %v3342
      %v3437 = vunpack.c.h.b16 %v3342
      %v3438 = vunpack.c.l.b16 %v3343
      %v3439 = vunpack.c.h.b16 %v3343
      %v3440 = vpack.c.b16 %v3380, %v3376
      %v3441 = vpack.c.b16 %v3381, %v3377
      %v3442 = vpack.c.b16 %v3382, %v3378
      %v3443 = vpack.c.b16 %v3383, %v3379
      %v3444 = vpack.c.b16 %v3388, %v3384
      %v3445 = vpack.c.b16 %v3389, %v3385
      %v3446 = vpack.c.b16 %v3390, %v3386
      %v3447 = vpack.c.b16 %v3391, %v3387
      %v3448 = vpack.c.b16 %v3396, %v3392
      %v3449 = vpack.c.b16 %v3397, %v3393
      %v3450 = vpack.c.b16 %v3398, %v3394
      %v3451 = vpack.c.b16 %v3399, %v3395
      %v3452 = vpack.c.b16 %v3404, %v3400
      %v3453 = vpack.c.b16 %v3405, %v3401
      %v3454 = vpack.c.b16 %v3406, %v3402
      %v3455 = vpack.c.b16 %v3407, %v3403
      %v3456 = vpack.c.b16 %v3412, %v3408
      %v3457 = vpack.c.b16 %v3413, %v3409
      %v3458 = vpack.c.b16 %v3414, %v3410
      %v3459 = vpack.c.b16 %v3415, %v3411
      %v3460 = vpack.c.b16 %v3420, %v3416
      %v3461 = vpack.c.b16 %v3421, %v3417
      %v3462 = vpack.c.b16 %v3422, %v3418
      %v3463 = vpack.c.b16 %v3423, %v3419
      %v3464 = vpack.c.b16 %v3428, %v3424
      %v3465 = vpack.c.b16 %v3429, %v3425
      %v3466 = vpack.c.b16 %v3430, %v3426
      %v3467 = vpack.c.b16 %v3431, %v3427
      %v3468 = vpack.c.b16 %v3436, %v3432
      %v3469 = vpack.c.b16 %v3437, %v3433
      %v3470 = vpack.c.b16 %v3438, %v3434
      %v3471 = vpack.c.b16 %v3439, %v3435
      %3504 = vmatprep.subr.bf16.mxu0 %v3441
      %3505 = vmatpush1.bf16.msra.mxu0 %v3440
      %3506 = vmatprep.subr.bf16.mxu0 %v3445
      %3507 = vmatpush1.bf16.msra.mxu0 %v3444
      %3508 = vmatprep.subr.bf16.mxu0 %v3449
      %3509 = vmatpush1.bf16.msra.mxu0 %v3448
      %3510 = vmatprep.subr.bf16.mxu0 %v3453
      %3511 = vmatpush1.bf16.msra.mxu0 %v3452
      %3512 = vmatprep.subr.bf16.mxu0 %v3457
      %3513 = vmatpush1.bf16.msra.mxu0 %v3456
      %3514 = vmatprep.subr.bf16.mxu0 %v3461
      %3515 = vmatpush1.bf16.msra.mxu0 %v3460
      %3516 = vmatprep.subr.bf16.mxu0 %v3465
      %3517 = vmatpush1.bf16.msra.mxu0 %v3464
      %3518 = vmatprep.subr.bf16.mxu0 %v3469
      %3519 = vmatpush1.bf16.msra.mxu0 %v3468
      %3520 = vmatprep.subr.bf16.mxu0 0
      %3521 = vmatpush1.bf16.msra.mxu0 0
      %3522 = vmatprep.subr.bf16.mxu0 0
      %3523 = vmatpush1.bf16.msra.mxu0 0
      %3524 = vmatprep.subr.bf16.mxu0 0
      %3525 = vmatpush1.bf16.msra.mxu0 0
      %3526 = vmatprep.subr.bf16.mxu0 0
      %3527 = vmatpush1.bf16.msra.mxu0 0
      %3528 = vmatprep.subr.bf16.mxu0 0
      %3529 = vmatpush1.bf16.msra.mxu0 0
      %3530 = vmatprep.subr.bf16.mxu0 0
      %3531 = vmatpush1.bf16.msra.mxu0 0
      %3532 = vmatprep.subr.bf16.mxu0 0
      %3533 = vmatpush1.bf16.msra.mxu0 0
      %3534 = vmatprep.subr.bf16.mxu0 0
      %3535 = vmatpush1.bf16.msra.mxu0 0
      %3536 = vmatprep.mubr.bf16.mxu0 0
      %3537 = vmatmul.mubr.bf16.gmra.mrb[0].mxu0 %v3310
      %v3538 = vpop.f32.mrb[0].mxu0
      %v3539 = vadd.f32 0.0, %v3538
      %v3540 = vpop.f32.mrb[0].mxu0
      %v3541 = vadd.f32 0.0, %v3540
      %v3542 = vpop.f32.mrb[0].mxu0
      %v3543 = vpop.f32.mrb[0].mxu0
      %3544 = vdwg.mxu0
      %3545 = vmatprep.subr.bf16.mxu0 %v3443
      %3546 = vmatpush1.bf16.msra.mxu0 %v3442
      %3547 = vmatprep.subr.bf16.mxu0 %v3447
      %3548 = vmatpush1.bf16.msra.mxu0 %v3446
      %3549 = vmatprep.subr.bf16.mxu0 %v3451
      %3550 = vmatpush1.bf16.msra.mxu0 %v3450
      %3551 = vmatprep.subr.bf16.mxu0 %v3455
      %3552 = vmatpush1.bf16.msra.mxu0 %v3454
      %3553 = vmatprep.subr.bf16.mxu0 %v3459
      %3554 = vmatpush1.bf16.msra.mxu0 %v3458
      %3555 = vmatprep.subr.bf16.mxu0 %v3463
      %3556 = vmatpush1.bf16.msra.mxu0 %v3462
      %3557 = vmatprep.subr.bf16.mxu0 %v3467
      %3558 = vmatpush1.bf16.msra.mxu0 %v3466
      %3559 = vmatprep.subr.bf16.mxu0 %v3471
      %3560 = vmatpush1.bf16.msra.mxu0 %v3470
      %3561 = vmatprep.subr.bf16.mxu0 0
      %3562 = vmatpush1.bf16.msra.mxu0 0
      %3563 = vmatprep.subr.bf16.mxu0 0
      %3564 = vmatpush1.bf16.msra.mxu0 0
      %3565 = vmatprep.subr.bf16.mxu0 0
      %3566 = vmatpush1.bf16.msra.mxu0 0
      %3567 = vmatprep.subr.bf16.mxu0 0
      %3568 = vmatpush1.bf16.msra.mxu0 0
      %3569 = vmatprep.subr.bf16.mxu0 0
      %3570 = vmatpush1.bf16.msra.mxu0 0
      %3571 = vmatprep.subr.bf16.mxu0 0
      %3572 = vmatpush1.bf16.msra.mxu0 0
      %3573 = vmatprep.subr.bf16.mxu0 0
      %3574 = vmatpush1.bf16.msra.mxu0 0
      %3575 = vmatprep.subr.bf16.mxu0 0
      %3576 = vmatpush1.bf16.msra.mxu0 0
      %3577 = vmatprep.mubr.bf16.mxu0 0
      %3578 = vmatmul.mubr.bf16.gmra.mrb[0].mxu0 %v3310
      %v3579 = vpop.f32.mrb[0].mxu0
      %v3580 = vadd.f32 0.0, %v3579
      %v3581 = vpop.f32.mrb[0].mxu0
      %v3582 = vadd.f32 0.0, %v3581
      %v3583 = vpop.f32.mrb[0].mxu0
      %v3584 = vpop.f32.mrb[0].mxu0
      %3585 = vdwg.mxu0
      %v3586 = vsub.f32 0.0, %v3539
      %v3587 = vsub.f32 0.0, %v3541
      %v3588 = vmul.f32 %v3586, 1.442695
      %v3589 = vpow.pop %v3588
      %v3590 = vmul.f32 %v3587, 1.442695
      %v3591 = vpow.pop %v3590
      %v3592 = vadd.f32 %v3589, 1.0
      %v3593 = vadd.f32 %v3591, 1.0
      %v3594 = vrcp.pop %v3592
      %v3595 = vrcp.pop %v3593
      %v3596 = vmul.f32 %v3539, %v3594
      %v3597 = vmul.f32 %v3541, %v3595
      %v3598 = vmul.f32 %v3596, %v3580
      %v3599 = vmul.f32 %v3597, %v3582
      %v3600 = vpack.c.bf16 %v3598, %v3598
      %v3601 = vpack.c.bf16 %v3599, %v3599
      %s3602 = scalar_lea.vmem %s9, 256
      %v3603 = vld [vmem:[%s3602] sm:$0xf]
      %v3604 = vld [vmem:[%s3602 + $0x4] sm:$0xf]
      %v3605 = vld [vmem:[%s3602 + $0x8] sm:$0xf]
      %v3606 = vld [vmem:[%s3602 + $0xc] sm:$0xf]
      %v3607 = vld [vmem:[%s3602 + $0x10] sm:$0xf]
      %v3608 = vld [vmem:[%s3602 + $0x14] sm:$0xf]
      %v3609 = vld [vmem:[%s3602 + $0x18] sm:$0xf]
      %v3610 = vld [vmem:[%s3602 + $0x1c] sm:$0xf]
      %v3611 = vld [vmem:[%s3602 + $0x20] sm:$0xf]
      %v3612 = vld [vmem:[%s3602 + $0x24] sm:$0xf]
      %v3613 = vld [vmem:[%s3602 + $0x28] sm:$0xf]
      %v3614 = vld [vmem:[%s3602 + $0x2c] sm:$0xf]
      %v3615 = vld [vmem:[%s3602 + $0x30] sm:$0xf]
      %v3616 = vld [vmem:[%s3602 + $0x34] sm:$0xf]
      %v3617 = vld [vmem:[%s3602 + $0x38] sm:$0xf]
      %v3618 = vld [vmem:[%s3602 + $0x3c] sm:$0xf]
      %v3619 = vld [vmem:[%s3602 + $0x40] sm:$0xf]
      %v3620 = vld [vmem:[%s3602 + $0x44] sm:$0xf]
      %v3621 = vld [vmem:[%s3602 + $0x48] sm:$0xf]
      %v3622 = vld [vmem:[%s3602 + $0x4c] sm:$0xf]
      %v3623 = vld [vmem:[%s3602 + $0x50] sm:$0xf]
      %v3624 = vld [vmem:[%s3602 + $0x54] sm:$0xf]
      %v3625 = vld [vmem:[%s3602 + $0x58] sm:$0xf]
      %v3626 = vld [vmem:[%s3602 + $0x5c] sm:$0xf]
      %v3627 = vld [vmem:[%s3602 + $0x60] sm:$0xf]
      %v3628 = vld [vmem:[%s3602 + $0x64] sm:$0xf]
      %v3629 = vld [vmem:[%s3602 + $0x68] sm:$0xf]
      %v3630 = vld [vmem:[%s3602 + $0x6c] sm:$0xf]
      %v3631 = vld [vmem:[%s3602 + $0x70] sm:$0xf]
      %v3632 = vld [vmem:[%s3602 + $0x74] sm:$0xf]
      %v3633 = vld [vmem:[%s3602 + $0x78] sm:$0xf]
      %v3634 = vld [vmem:[%s3602 + $0x7c] sm:$0xf]
      %v3667 = vunpack.c.l.b16 %v3603
      %v3668 = vunpack.c.l.b16 %v3604
      %v3669 = vunpack.c.l.b16 %v3605
      %v3670 = vunpack.c.l.b16 %v3606
      %v3671 = vunpack.c.l.b16 %v3607
      %v3672 = vunpack.c.l.b16 %v3608
      %v3673 = vunpack.c.l.b16 %v3609
      %v3674 = vunpack.c.l.b16 %v3610
      %v3675 = vunpack.c.l.b16 %v3611
      %v3676 = vunpack.c.l.b16 %v3612
      %v3677 = vunpack.c.l.b16 %v3613
      %v3678 = vunpack.c.l.b16 %v3614
      %v3679 = vunpack.c.l.b16 %v3615
      %v3680 = vunpack.c.l.b16 %v3616
      %v3681 = vunpack.c.l.b16 %v3617
      %v3682 = vunpack.c.l.b16 %v3618
      %v3683 = vunpack.c.l.b16 %v3619
      %v3684 = vunpack.c.l.b16 %v3620
      %v3685 = vunpack.c.l.b16 %v3621
      %v3686 = vunpack.c.l.b16 %v3622
      %v3687 = vunpack.c.l.b16 %v3623
      %v3688 = vunpack.c.l.b16 %v3624
      %v3689 = vunpack.c.l.b16 %v3625
      %v3690 = vunpack.c.l.b16 %v3626
      %v3691 = vunpack.c.l.b16 %v3627
      %v3692 = vunpack.c.l.b16 %v3628
      %v3693 = vunpack.c.l.b16 %v3629
      %v3694 = vunpack.c.l.b16 %v3630
      %v3695 = vunpack.c.l.b16 %v3631
      %v3696 = vunpack.c.l.b16 %v3632
      %v3697 = vunpack.c.l.b16 %v3633
      %v3698 = vunpack.c.l.b16 %v3634
      %v3699 = vpack.c.b16 %v3668, %v3667
      %v3700 = vpack.c.b16 %v3670, %v3669
      %v3701 = vpack.c.b16 %v3672, %v3671
      %v3702 = vpack.c.b16 %v3674, %v3673
      %v3703 = vpack.c.b16 %v3676, %v3675
      %v3704 = vpack.c.b16 %v3678, %v3677
      %v3705 = vpack.c.b16 %v3680, %v3679
      %v3706 = vpack.c.b16 %v3682, %v3681
      %v3707 = vpack.c.b16 %v3684, %v3683
      %v3708 = vpack.c.b16 %v3686, %v3685
      %v3709 = vpack.c.b16 %v3688, %v3687
      %v3710 = vpack.c.b16 %v3690, %v3689
      %v3711 = vpack.c.b16 %v3692, %v3691
      %v3712 = vpack.c.b16 %v3694, %v3693
      %v3713 = vpack.c.b16 %v3696, %v3695
      %v3714 = vpack.c.b16 %v3698, %v3697
      %3731 = vmatprep.subr.bf16.mxu0 0
      %3732 = vmatpush1.bf16.msra.mxu0 %v3699
      %3733 = vmatprep.subr.bf16.mxu0 0
      %3734 = vmatpush1.bf16.msra.mxu0 %v3700
      %3735 = vmatprep.subr.bf16.mxu0 0
      %3736 = vmatpush1.bf16.msra.mxu0 %v3701
      %3737 = vmatprep.subr.bf16.mxu0 0
      %3738 = vmatpush1.bf16.msra.mxu0 %v3702
      %3739 = vmatprep.subr.bf16.mxu0 0
      %3740 = vmatpush1.bf16.msra.mxu0 %v3703
      %3741 = vmatprep.subr.bf16.mxu0 0
      %3742 = vmatpush1.bf16.msra.mxu0 %v3704
      %3743 = vmatprep.subr.bf16.mxu0 0
      %3744 = vmatpush1.bf16.msra.mxu0 %v3705
      %3745 = vmatprep.subr.bf16.mxu0 0
      %3746 = vmatpush1.bf16.msra.mxu0 %v3706
      %3747 = vmatprep.subr.bf16.mxu0 0
      %3748 = vmatpush1.bf16.msra.mxu0 %v3707
      %3749 = vmatprep.subr.bf16.mxu0 0
      %3750 = vmatpush1.bf16.msra.mxu0 %v3708
      %3751 = vmatprep.subr.bf16.mxu0 0
      %3752 = vmatpush1.bf16.msra.mxu0 %v3709
      %3753 = vmatprep.subr.bf16.mxu0 0
      %3754 = vmatpush1.bf16.msra.mxu0 %v3710
      %3755 = vmatprep.subr.bf16.mxu0 0
      %3756 = vmatpush1.bf16.msra.mxu0 %v3711
      %3757 = vmatprep.subr.bf16.mxu0 0
      %3758 = vmatpush1.bf16.msra.mxu0 %v3712
      %3759 = vmatprep.subr.bf16.mxu0 0
      %3760 = vmatpush1.bf16.msra.mxu0 %v3713
      %3761 = vmatprep.subr.bf16.mxu0 0
      %3762 = vmatpush1.bf16.msra.mxu0 %v3714
      %3763 = vmatprep.mubr.bf16.mxu0 %v3601
      %3764 = vmatmul.mubr.bf16.gmra.mrb[0].mxu0 %v3600
      %v3765 = vpop.f32.mrb[0].mxu0
      %v3766 = vadd.f32 0.0, %v3765
      %v3767 = vpop.f32.mrb[0].mxu0
      %v3768 = vpop.f32.mrb[0].mxu0
      %v3769 = vpop.f32.mrb[0].mxu0
      %3770 = vdwg.mxu0
      %v3771 = vadd.f32 %v3293, %v3766
      %v3772 = vld [vmem:[%s10] sm:$0x1]
      %v3773 = vmul.f32 %v3771, %v3771
      %3774 = vadd.xlane.f32.xlu0 %v3773
      %v3775 = vpop.xlane.xlu0 %3774
      %v3776 = vmul.f32 %v3775, %v463
      %v3777 = vadd.f32 %v3776, 1e-05
      %v3778 = vrsqrt.pop %v3777
      %v3779 = vmul.f32 %v3771, %v3778
      %v3781 = vlaneseq
      %v3782 = vshrl.u32 %v3781, 7
      %v3783 = vsub.s32 0, %v3782
      %v3784 = vrot.slane %v3772, %v3783
      %v3786 = vmul.f32 %v3779, %v3784
      %v3787 = vpack.c.bf16 %v3786, %v3786
      %v3788 = vld [vmem:[%s11] sm:$0xff]
      %v3789 = vld [vmem:[%s11 + $0x8] sm:$0xff]
      %v3790 = vld [vmem:[%s11 + $0x10] sm:$0xff]
      %v3791 = vld [vmem:[%s11 + $0x18] sm:$0xff]
      %v3792 = vld [vmem:[%s11 + $0x20] sm:$0xff]
      %v3793 = vld [vmem:[%s11 + $0x28] sm:$0xff]
      %v3794 = vld [vmem:[%s11 + $0x30] sm:$0xff]
      %v3795 = vld [vmem:[%s11 + $0x38] sm:$0xff]
      %v3796 = vld [vmem:[%s11 + $0x40] sm:$0xff]
      %v3797 = vld [vmem:[%s11 + $0x48] sm:$0xff]
      %v3798 = vld [vmem:[%s11 + $0x50] sm:$0xff]
      %v3799 = vld [vmem:[%s11 + $0x58] sm:$0xff]
      %v3800 = vld [vmem:[%s11 + $0x60] sm:$0xff]
      %v3801 = vld [vmem:[%s11 + $0x68] sm:$0xff]
      %v3802 = vld [vmem:[%s11 + $0x70] sm:$0xff]
      %v3803 = vld [vmem:[%s11 + $0x78] sm:$0xff]
      %v3804 = vld [vmem:[%s11 + $0x80] sm:$0xff]
      %v3805 = vld [vmem:[%s11 + $0x88] sm:$0xff]
      %v3806 = vld [vmem:[%s11 + $0x90] sm:$0xff]
      %v3807 = vld [vmem:[%s11 + $0x98] sm:$0xff]
      %v3808 = vld [vmem:[%s11 + $0xa0] sm:$0xff]
      %v3809 = vld [vmem:[%s11 + $0xa8] sm:$0xff]
      %v3810 = vld [vmem:[%s11 + $0xb0] sm:$0xff]
      %v3811 = vld [vmem:[%s11 + $0xb8] sm:$0xff]
      %v3812 = vld [vmem:[%s11 + $0xc0] sm:$0xff]
      %v3813 = vld [vmem:[%s11 + $0xc8] sm:$0xff]
      %v3814 = vld [vmem:[%s11 + $0xd0] sm:$0xff]
      %v3815 = vld [vmem:[%s11 + $0xd8] sm:$0xff]
      %v3816 = vld [vmem:[%s11 + $0xe0] sm:$0xff]
      %v3817 = vld [vmem:[%s11 + $0xe8] sm:$0xff]
      %v3818 = vld [vmem:[%s11 + $0xf0] sm:$0xff]
      %v3819 = vld [vmem:[%s11 + $0xf8] sm:$0xff]
      %v3820 = vld [vmem:[%s12] sm:$0xf]
      %v3822 = vlaneseq
      %v3823 = vshrl.u32 %v3822, 7
      %v3824 = vsub.s32 0, %v3823
      %v3825 = vrot.slane %v3820, %v3824
      %v3826 = vlaneseq
      %v3827 = vshrl.u32 %v3826, 7
      %v3828 = vsub.s32 1, %v3827
      %v3829 = vrot.slane %v3820, %v3828
      %v3830 = vlaneseq
      %v3831 = vshrl.u32 %v3830, 7
      %v3832 = vsub.s32 2, %v3831
      %v3833 = vrot.slane %v3820, %v3832
      %v3834 = vlaneseq
      %v3835 = vshrl.u32 %v3834, 7
      %v3836 = vsub.s32 3, %v3835
      %v3837 = vrot.slane %v3820, %v3836
      %v3874 = vunpack.c.l.b16 %v3788
      %v3875 = vunpack.c.h.b16 %v3788
      %v3876 = vunpack.c.l.b16 %v3789
      %v3877 = vunpack.c.h.b16 %v3789
      %v3878 = vunpack.c.l.b16 %v3790
      %v3879 = vunpack.c.h.b16 %v3790
      %v3880 = vunpack.c.l.b16 %v3791
      %v3881 = vunpack.c.h.b16 %v3791
      %v3882 = vunpack.c.l.b16 %v3792
      %v3883 = vunpack.c.h.b16 %v3792
      %v3884 = vunpack.c.l.b16 %v3793
      %v3885 = vunpack.c.h.b16 %v3793
      %v3886 = vunpack.c.l.b16 %v3794
      %v3887 = vunpack.c.h.b16 %v3794
      %v3888 = vunpack.c.l.b16 %v3795
      %v3889 = vunpack.c.h.b16 %v3795
      %v3890 = vunpack.c.l.b16 %v3796
      %v3891 = vunpack.c.h.b16 %v3796
      %v3892 = vunpack.c.l.b16 %v3797
      %v3893 = vunpack.c.h.b16 %v3797
      %v3894 = vunpack.c.l.b16 %v3798
      %v3895 = vunpack.c.h.b16 %v3798
      %v3896 = vunpack.c.l.b16 %v3799
      %v3897 = vunpack.c.h.b16 %v3799
      %v3898 = vunpack.c.l.b16 %v3800
      %v3899 = vunpack.c.h.b16 %v3800
      %v3900 = vunpack.c.l.b16 %v3801
      %v3901 = vunpack.c.h.b16 %v3801
      %v3902 = vunpack.c.l.b16 %v3802
      %v3903 = vunpack.c.h.b16 %v3802
      %v3904 = vunpack.c.l.b16 %v3803
      %v3905 = vunpack.c.h.b16 %v3803
      %v3906 = vunpack.c.l.b16 %v3804
      %v3907 = vunpack.c.h.b16 %v3804
      %v3908 = vunpack.c.l.b16 %v3805
      %v3909 = vunpack.c.h.b16 %v3805
      %v3910 = vunpack.c.l.b16 %v3806
      %v3911 = vunpack.c.h.b16 %v3806
      %v3912 = vunpack.c.l.b16 %v3807
      %v3913 = vunpack.c.h.b16 %v3807
      %v3914 = vunpack.c.l.b16 %v3808
      %v3915 = vunpack.c.h.b16 %v3808
      %v3916 = vunpack.c.l.b16 %v3809
      %v3917 = vunpack.c.h.b16 %v3809
      %v3918 = vunpack.c.l.b16 %v3810
      %v3919 = vunpack.c.h.b16 %v3810
      %v3920 = vunpack.c.l.b16 %v3811
      %v3921 = vunpack.c.h.b16 %v3811
      %v3922 = vunpack.c.l.b16 %v3812
      %v3923 = vunpack.c.h.b16 %v3812
      %v3924 = vunpack.c.l.b16 %v3813
      %v3925 = vunpack.c.h.b16 %v3813
      %v3926 = vunpack.c.l.b16 %v3814
      %v3927 = vunpack.c.h.b16 %v3814
      %v3928 = vunpack.c.l.b16 %v3815
      %v3929 = vunpack.c.h.b16 %v3815
      %v3930 = vunpack.c.l.b16 %v3816
      %v3931 = vunpack.c.h.b16 %v3816
      %v3932 = vunpack.c.l.b16 %v3817
      %v3933 = vunpack.c.h.b16 %v3817
      %v3934 = vunpack.c.l.b16 %v3818
      %v3935 = vunpack.c.h.b16 %v3818
      %v3936 = vunpack.c.l.b16 %v3819
      %v3937 = vunpack.c.h.b16 %v3819
      %v3938 = vpack.c.b16 %v3878, %v3874
      %v3939 = vpack.c.b16 %v3879, %v3875
      %v3940 = vpack.c.b16 %v3880, %v3876
      %v3941 = vpack.c.b16 %v3881, %v3877
      %v3942 = vpack.c.b16 %v3886, %v3882
      %v3943 = vpack.c.b16 %v3887, %v3883
      %v3944 = vpack.c.b16 %v3888, %v3884
      %v3945 = vpack.c.b16 %v3889, %v3885
      %v3946 = vpack.c.b16 %v3894, %v3890
      %v3947 = vpack.c.b16 %v3895, %v3891
      %v3948 = vpack.c.b16 %v3896, %v3892
      %v3949 = vpack.c.b16 %v3897, %v3893
      %v3950 = vpack.c.b16 %v3902, %v3898
      %v3951 = vpack.c.b16 %v3903, %v3899
      %v3952 = vpack.c.b16 %v3904, %v3900
      %v3953 = vpack.c.b16 %v3905, %v3901
      %v3954 = vpack.c.b16 %v3910, %v3906
      %v3955 = vpack.c.b16 %v3911, %v3907
      %v3956 = vpack.c.b16 %v3912, %v3908
      %v3957 = vpack.c.b16 %v3913, %v3909
      %v3958 = vpack.c.b16 %v3918, %v3914
      %v3959 = vpack.c.b16 %v3919, %v3915
      %v3960 = vpack.c.b16 %v3920, %v3916
      %v3961 = vpack.c.b16 %v3921, %v3917
      %v3962 = vpack.c.b16 %v3926, %v3922
      %v3963 = vpack.c.b16 %v3927, %v3923
      %v3964 = vpack.c.b16 %v3928, %v3924
      %v3965 = vpack.c.b16 %v3929, %v3925
      %v3966 = vpack.c.b16 %v3934, %v3930
      %v3967 = vpack.c.b16 %v3935, %v3931
      %v3968 = vpack.c.b16 %v3936, %v3932
      %v3969 = vpack.c.b16 %v3937, %v3933
      %4002 = vmatprep.subr.bf16.mxu0 %v3939
      %4003 = vmatpush1.bf16.msra.mxu0 %v3938
      %4004 = vmatprep.subr.bf16.mxu0 %v3943
      %4005 = vmatpush1.bf16.msra.mxu0 %v3942
      %4006 = vmatprep.subr.bf16.mxu0 %v3947
      %4007 = vmatpush1.bf16.msra.mxu0 %v3946
      %4008 = vmatprep.subr.bf16.mxu0 %v3951
      %4009 = vmatpush1.bf16.msra.mxu0 %v3950
      %4010 = vmatprep.subr.bf16.mxu0 %v3955
      %4011 = vmatpush1.bf16.msra.mxu0 %v3954
      %4012 = vmatprep.subr.bf16.mxu0 %v3959
      %4013 = vmatpush1.bf16.msra.mxu0 %v3958
      %4014 = vmatprep.subr.bf16.mxu0 %v3963
      %4015 = vmatpush1.bf16.msra.mxu0 %v3962
      %4016 = vmatprep.subr.bf16.mxu0 %v3967
      %4017 = vmatpush1.bf16.msra.mxu0 %v3966
      %4018 = vmatprep.subr.bf16.mxu0 0
      %4019 = vmatpush1.bf16.msra.mxu0 0
      %4020 = vmatprep.subr.bf16.mxu0 0
      %4021 = vmatpush1.bf16.msra.mxu0 0
      %4022 = vmatprep.subr.bf16.mxu0 0
      %4023 = vmatpush1.bf16.msra.mxu0 0
      %4024 = vmatprep.subr.bf16.mxu0 0
      %4025 = vmatpush1.bf16.msra.mxu0 0
      %4026 = vmatprep.subr.bf16.mxu0 0
      %4027 = vmatpush1.bf16.msra.mxu0 0
      %4028 = vmatprep.subr.bf16.mxu0 0
      %4029 = vmatpush1.bf16.msra.mxu0 0
      %4030 = vmatprep.subr.bf16.mxu0 0
      %4031 = vmatpush1.bf16.msra.mxu0 0
      %4032 = vmatprep.subr.bf16.mxu0 0
      %4033 = vmatpush1.bf16.msra.mxu0 0
      %4034 = vmatprep.mubr.bf16.mxu0 0
      %4035 = vmatmul.mubr.bf16.gmra.mrb[0].mxu0 %v3787
      %v4036 = vpop.f32.mrb[0].mxu0
      %v4037 = vadd.f32 %v3825, %v4036
      %v4038 = vpop.f32.mrb[0].mxu0
      %v4039 = vadd.f32 %v3829, %v4038
      %v4040 = vpop.f32.mrb[0].mxu0
      %v4041 = vpop.f32.mrb[0].mxu0
      %4042 = vdwg.mxu0
      %4043 = vmatprep.subr.bf16.mxu0 %v3941
      %4044 = vmatpush1.bf16.msra.mxu0 %v3940
      %4045 = vmatprep.subr.bf16.mxu0 %v3945
      %4046 = vmatpush1.bf16.msra.mxu0 %v3944
      %4047 = vmatprep.subr.bf16.mxu0 %v3949
      %4048 = vmatpush1.bf16.msra.mxu0 %v3948
      %4049 = vmatprep.subr.bf16.mxu0 %v3953
      %4050 = vmatpush1.bf16.msra.mxu0 %v3952
      %4051 = vmatprep.subr.bf16.mxu0 %v3957
      %4052 = vmatpush1.bf16.msra.mxu0 %v3956
      %4053 = vmatprep.subr.bf16.mxu0 %v3961
      %4054 = vmatpush1.bf16.msra.mxu0 %v3960
      %4055 = vmatprep.subr.bf16.mxu0 %v3965
      %4056 = vmatpush1.bf16.msra.mxu0 %v3964
      %4057 = vmatprep.subr.bf16.mxu0 %v3969
      %4058 = vmatpush1.bf16.msra.mxu0 %v3968
      %4059 = vmatprep.subr.bf16.mxu0 0
      %4060 = vmatpush1.bf16.msra.mxu0 0
      %4061 = vmatprep.subr.bf16.mxu0 0
      %4062 = vmatpush1.bf16.msra.mxu0 0
      %4063 = vmatprep.subr.bf16.mxu0 0
      %4064 = vmatpush1.bf16.msra.mxu0 0
      %4065 = vmatprep.subr.bf16.mxu0 0
      %4066 = vmatpush1.bf16.msra.mxu0 0
      %4067 = vmatprep.subr.bf16.mxu0 0
      %4068 = vmatpush1.bf16.msra.mxu0 0
      %4069 = vmatprep.subr.bf16.mxu0 0
      %4070 = vmatpush1.bf16.msra.mxu0 0
      %4071 = vmatprep.subr.bf16.mxu0 0
      %4072 = vmatpush1.bf16.msra.mxu0 0
      %4073 = vmatprep.subr.bf16.mxu0 0
      %4074 = vmatpush1.bf16.msra.mxu0 0
      %4075 = vmatprep.mubr.bf16.mxu0 0
      %4076 = vmatmul.mubr.bf16.gmra.mrb[0].mxu0 %v3787
      %v4077 = vpop.f32.mrb[0].mxu0
      %v4078 = vadd.f32 %v3833, %v4077
      %v4079 = vpop.f32.mrb[0].mxu0
      %v4080 = vadd.f32 %v3837, %v4079
      %v4081 = vpop.f32.mrb[0].mxu0
      %v4082 = vpop.f32.mrb[0].mxu0
      %4083 = vdwg.mxu0
      %4084 = vst [vmem:[%s451] sm:$0xff] %v4037
      %4085 = vst [vmem:[%s451 + $0x8] sm:$0xff] %v4039
      %4086 = vst [vmem:[%s451 + $0x10] sm:$0xff] %v4078
      %4087 = vst [vmem:[%s451 + $0x18] sm:$0xff] %v4080
      %p4088 = scmp.lt.s32.totalorder %s24, 1
      %s4089 = scalar_select %p4088, %s24, 1
      %s4090 = smul.addr %s4089, 4
      %s4091 = smul.addr %s4090, 8
      %s4092 = scalar_lea.vmem %s13, %s4091
      // Predicated region
      $region73: #{speech_unit_forward.1} parent=71 // pred_check
        %p4093 = pneg %p325
      $region74: #{speech_unit_forward.1} parent=71 // pred_check_branch
        %4095 = sbr.rel (%p4093) target = $region76
      $region75: #{speech_unit_forward.1} parent=71 // pred_region
        _
      $region76: #{speech_unit_forward.1} parent=71 // pred_fallthru
        _
    $region72: #{speech_unit_forward.1} parent=5 // pred_fallthru
      _
    %p4096 = scmp.le.s32.totalorder 2, %s19
    // Predicated region
    $region77: #{speech_unit_forward.1} parent=5 // pred_check
      %p4097 = pneg %p4096
    $region78: #{speech_unit_forward.1} parent=5 // pred_check_branch
      %4099 = sbr.rel (%p4097) target = $region80
    $region79: #{speech_unit_forward.1} parent=5 // pred_region
      %s4100 = ssub.s32 %s19, 2
      // Predicated region
      $region81: #{speech_unit_forward.1} parent=79 // pred_check
        %p4101 = pneg %p331
      $region82: #{speech_unit_forward.1} parent=79 // pred_check_branch
        %4103 = sbr.rel (%p4101) target = $region84
      $region83: #{speech_unit_forward.1} parent=79 // pred_region
        %p4104 = scmp.lt.s32.totalorder %s25, 1
        %s4105 = scalar_select %p4104, %s25, 1
        %s4106 = smul.addr %s4105, 4
        %s4107 = smul.addr %s4106, 8
        %s4108 = scalar_lea.vmem %s13, %s4107
      $region84: #{speech_unit_forward.1} parent=79 // pred_fallthru
        _
    $region80: #{speech_unit_forward.1} parent=5 // pred_fallthru
      _
  $region6: #{speech_unit_forward.1} parent=0 // loop_footer
    %s23 = sadd.s32 1, %s19
  $region7: #{speech_unit_forward.1} parent=0 // loop_footer_branch
    %18 = sbr.rel target = $region3
  $region8: #{speech_unit_forward.1} parent=0 // loop_exit
    _

</llo_original>
